<compile_context>
chip_gen: v7x
topology: tpu7x:2x2x1
jax: 0.10.0
libtpu: 0.0.40
codegen_flags: <defaults>
</compile_context>

<pallas_src>
import functools
import math

import jax
import jax.numpy as jnp
from jax import lax
from jax.experimental import pallas as pl
from jax.experimental.pallas import tpu as pltpu


# ----------------------------------------------------------------------------
# Fused 2-layer LSTM decoder kernel (single invocation per batch tile,
# in-kernel time loop). Gate columns of all weights/biases are pre-ordered
# [i | f | o | g] so each cell does one wide sigmoid + one tanh on the EUP.
# ----------------------------------------------------------------------------
def _fused_decoder_kernel(z_ref, wih1_ref, whh_ref, wih2_ref, b1_ref, b2_ref,
                          out_ref, hn_ref, cn_ref, pre1_ref):
    T, Bt, D = z_ref.shape
    H1 = wih1_ref.shape[1] // 4
    H2 = wih2_ref.shape[1] // 4

    # ---- resident operands: loaded once, live across the whole recurrence ----
    wih1 = wih1_ref[...]            # (D, 4*H1)              matmul dtype (bf16/f32)
    whh = whh_ref[...]              # (H1+H2, 4*(H1+H2))     block-diag recurrent weight
    wih2 = wih2_ref[...]            # (H1, 4*H2)
    b1 = b1_ref[...]                # (1, 4*H1) f32
    # Hoisted out of the time loop (broadcast_in_dim is not CSE'd by JAX).
    b2b = jnp.broadcast_to(b2_ref[...], (Bt, 4 * H2))
    w_dtype = whh.dtype

    # ---- layer-1 input projection for ALL T steps: one big MXU matmul --------
    # (T, Bt, D) -> (T*Bt, D) is a layout-free leading-dim collapse (Bt == 8).
    z2d = z_ref[...].reshape(T * Bt, D)
    pre1_ref[...] = jnp.dot(z2d, wih1, preferred_element_type=jnp.float32) + b1

    def lstm_cell(gates, c_prev, H):
        # gate columns = [i | f | o | g]: one wide sigmoid + one tanh (EUP ops).
        sig = jax.nn.sigmoid(gates[:, :3 * H])
        g = jnp.tanh(gates[:, 3 * H:])
        i = sig[:, 0 * H:1 * H]
        f = sig[:, 1 * H:2 * H]
        o = sig[:, 2 * H:3 * H]
        c_new = f * c_prev + i * g
        h_new = o * jnp.tanh(c_new)
        return h_new, c_new

    def step(t, carry):
        hcat, c1, c2 = carry                                   # hcat = [h1 | h2], f32
        # Both recurrent projections fused into ONE MXU round-trip per step.
        g_rec = jnp.dot(hcat.astype(w_dtype), whh,
                        preferred_element_type=jnp.float32)    # (Bt, 4H1+4H2)
        # Layer 1: precomputed input gates + recurrent gates.
        row = pl.multiple_of(t * Bt, Bt)
        g1 = pre1_ref[pl.ds(row, Bt), :] + g_rec[:, :4 * H1]
        h1, c1 = lstm_cell(g1, c1, H1)
        # Layer 2.
        g2 = g_rec[:, 4 * H1:] + b2b + jnp.dot(
            h1.astype(w_dtype), wih2, preferred_element_type=jnp.float32)
        h2, c2 = lstm_cell(g2, c2, H2)
        # Batch-major output: no post-kernel transpose needed.
        out_ref[:, pl.ds(t, 1), :] = h2[:, None, :].astype(out_ref.dtype)
        return jnp.concatenate([h1, h2], axis=1), c1, c2

    init = (jnp.zeros((Bt, H1 + H2), jnp.float32),
            jnp.zeros((Bt, H1), jnp.float32),
            jnp.zeros((Bt, H2), jnp.float32))
    unroll = max(1, math.gcd(T, 8))    # modest partial unroll; divides T exactly
    hcat, _, c2 = lax.fori_loop(0, T, step, init, unroll=unroll)

    hn_ref[...] = hcat[:, H1:].astype(hn_ref.dtype)
    cn_ref[...] = c2.astype(cn_ref.dtype)


# ----------------------------------------------------------------------------
# Wrapper: weight prep (gate reorder, transpose, bias fold, block-diag fuse),
# batch padding to a sublane multiple, one fused pallas_call with a parallel
# batch grid.
# ----------------------------------------------------------------------------
def _reorder_gates(w):
    """PyTorch LSTM gate order (i, f, g, o) -> (i, f, o, g) along axis 0."""
    H = w.shape[0] // 4
    return jnp.concatenate([w[:2 * H], w[3 * H:], w[2 * H:3 * H]], axis=0)


def decoder_forward(params, z, *, param_dtype=jnp.bfloat16, block_b=8):
    """z: (B, T, hidden_size_2), batch_first — same contract as Decoder.forward.

    Returns (out, (h_n, c_n)) of lstm_2, matching the PyTorch module.
    param_dtype: dtype of MXU operands (weights + staged z). bf16 is MXU-native on
    v6e/v7x; use jnp.float32 for bit-tight agreement with the f32 reference.
    Cell state, gate accumulation and all elementwise math are always f32.
    """
    z = jnp.asarray(z, jnp.float32)
    B, T, D = z.shape

    p1, p2 = params["lstm_1"], params["lstm_2"]
    H1 = p1["w_hh"].shape[1]
    H2 = p2["w_hh"].shape[1]          # == input_size

    # ---- layer-1 weights -----------------------------------------------------
    wih1 = _reorder_gates(jnp.asarray(p1["w_ih"], jnp.float32)).T            # (D, 4H1)
    whh1 = _reorder_gates(jnp.asarray(p1["w_hh"], jnp.float32)).T            # (H1, 4H1)
    b1 = (_reorder_gates(jnp.asarray(p1["b_ih"], jnp.float32)
                         + jnp.asarray(p1["b_hh"], jnp.float32))).reshape(1, 4 * H1)
    # ---- layer-2 weights -----------------------------------------------------
    wih2 = _reorder_gates(jnp.asarray(p2["w_ih"], jnp.float32)).T            # (H1, 4H2)
    whh2 = _reorder_gates(jnp.asarray(p2["w_hh"], jnp.float32)).T            # (H2, 4H2)
    b2 = (_reorder_gates(jnp.asarray(p2["b_ih"], jnp.float32)
                         + jnp.asarray(p2["b_hh"], jnp.float32))).reshape(1, 4 * H2)

    # Block-diagonal recurrent weight: [h1 | h2] @ whh_blk does both layers'
    # carry-only matmuls in one MXU op per step.
    whh_blk = jnp.zeros((H1 + H2, 4 * (H1 + H2)), jnp.float32)
    whh_blk = whh_blk.at[:H1, :4 * H1].set(whh1)
    whh_blk = whh_blk.at[H1:, 4 * H1:].set(whh2)

    wih1 = wih1.astype(param_dtype)
    wih2 = wih2.astype(param_dtype)
    whh_blk = whh_blk.astype(param_dtype)

    # ---- batch padding (sublane multiple) + time-major bf16 staging of z ------
    Bt = block_b
    B_pad = ((B + Bt - 1) // Bt) * Bt
    z_p = jnp.pad(z, ((0, B_pad - B), (0, 0), (0, 0)))
    z_t = jnp.transpose(z_p, (1, 0, 2)).astype(param_dtype)     # (T, B_pad, D)
    nb = B_pad // Bt

    out, hn, cn = pl.pallas_call(
        _fused_decoder_kernel,
        out_shape=(
            jax.ShapeDtypeStruct((B_pad, T, H2), jnp.float32),   # h2 over time (batch-major)
            jax.ShapeDtypeStruct((B_pad, H2), jnp.float32),      # h_n of lstm_2
            jax.ShapeDtypeStruct((B_pad, H2), jnp.float32),      # c_n of lstm_2
        ),
        grid_spec=pltpu.PrefetchScalarGridSpec(
            num_scalar_prefetch=0,
            grid=(nb,),
            in_specs=[
                pl.BlockSpec((T, Bt, D), lambda b: (0, b, 0)),               # z (time-major)
                pl.BlockSpec((D, 4 * H1), lambda b: (0, 0)),                 # wih1
                pl.BlockSpec((H1 + H2, 4 * (H1 + H2)), lambda b: (0, 0)),    # whh block-diag
                pl.BlockSpec((H1, 4 * H2), lambda b: (0, 0)),                # wih2
                pl.BlockSpec((1, 4 * H1), lambda b: (0, 0)),                 # b1
                pl.BlockSpec((1, 4 * H2), lambda b: (0, 0)),                 # b2
            ],
            out_specs=(
                pl.BlockSpec((Bt, T, H2), lambda b: (b, 0, 0)),
                pl.BlockSpec((Bt, H2), lambda b: (b, 0)),
                pl.BlockSpec((Bt, H2), lambda b: (b, 0)),
            ),
            # pre1 gate slab lives only in VMEM (never written to HBM).
            scratch_shapes=[pltpu.VMEM((T * Bt, 4 * H1), jnp.float32)],
        ),
        compiler_params=pltpu.CompilerParams(
            dimension_semantics=("parallel",)),   # batch tiles -> both TCs on v7x
    )(z_t, wih1, whh_blk, wih2, b1, b2)

    out = out[:B]                       # (B, T, input_size) — already batch-major
    h_n = hn[:B][None]                  # (1, B, input_size)
    c_n = cn[:B][None]
    return out, (h_n, c_n)


# ----------------------------------------------------------------------------
# Parameter init (PyTorch nn.LSTM layout / init range) and pure-JAX reference.
# ----------------------------------------------------------------------------
def init_decoder_params(key, input_size, hidden_size_1, hidden_size_2):
    def init_lstm(key, in_dim, hid):
        k = 1.0 / math.sqrt(hid)
        ks = jax.random.split(key, 4)
        return dict(
            w_ih=jax.random.uniform(ks[0], (4 * hid, in_dim), jnp.float32, -k, k),
            w_hh=jax.random.uniform(ks[1], (4 * hid, hid), jnp.float32, -k, k),
            b_ih=jax.random.uniform(ks[2], (4 * hid,), jnp.float32, -k, k),
            b_hh=jax.random.uniform(ks[3], (4 * hid,), jnp.float32, -k, k),
        )
    k1, k2 = jax.random.split(key)
    return dict(
        lstm_1=init_lstm(k1, hidden_size_2, hidden_size_1),
        lstm_2=init_lstm(k2, hidden_size_1, input_size),
    )


def _lstm_layer_ref(x_tbd, w_ih, w_hh, b_ih, b_hh):
    T, B, _ = x_tbd.shape
    H = w_hh.shape[1]
    h0 = jnp.zeros((B, H), jnp.float32)
    c0 = jnp.zeros((B, H), jnp.float32)

    def step(carry, x_t):
        h, c = carry
        gates = x_t @ w_ih.T + h @ w_hh.T + b_ih + b_hh
        i = jax.nn.sigmoid(gates[:, 0 * H:1 * H])
        f = jax.nn.sigmoid(gates[:, 1 * H:2 * H])
        g = jnp.tanh(gates[:, 2 * H:3 * H])
        o = jax.nn.sigmoid(gates[:, 3 * H:4 * H])
        c = f * c + i * g
        h = o * jnp.tanh(c)
        return (h, c), h

    (h_n, c_n), out = jax.lax.scan(step, (h0, c0), x_tbd)
    return out, h_n[None], c_n[None]


def decoder_forward_ref(params, z_btd):
    z_tbd = jnp.transpose(jnp.asarray(z_btd, jnp.float32), (1, 0, 2))
    p1 = params["lstm_1"]
    out1, _, _ = _lstm_layer_ref(z_tbd, p1["w_ih"], p1["w_hh"], p1["b_ih"], p1["b_hh"])
    p2 = params["lstm_2"]
    out2, h_n, c_n = _lstm_layer_ref(out1, p2["w_ih"], p2["w_hh"], p2["b_ih"], p2["b_hh"])
    return jnp.transpose(out2, (1, 0, 2)), (h_n, c_n)


if __name__ == "__main__":
    # Shapes consistent with the module's forward: z is (batch, seq, hidden_size_2).
    input_size, hidden_size_1, hidden_size_2 = 12, 32, 16
    batch, seq = 2, 8

    key = jax.random.PRNGKey(0)
    k_param, k_z = jax.random.split(key)
    params = init_decoder_params(k_param, input_size, hidden_size_1, hidden_size_2)
    z = jax.random.normal(k_z, (batch, seq, hidden_size_2), jnp.float32)

    out_ref_, (h_ref, c_ref) = decoder_forward_ref(params, z)

    # --- exact-math path (f32 MXU operands): tight check vs the scan reference ---
    fwd_f32 = jax.jit(functools.partial(decoder_forward, param_dtype=jnp.float32))
    out32, (h32, c32) = jax.block_until_ready(fwd_f32(params, z))
    assert out32.shape == (batch, seq, input_size)
    assert h32.shape == (1, batch, input_size)
    assert c32.shape == (1, batch, input_size)
    assert jnp.allclose(out32, out_ref_, atol=1e-4, rtol=1e-4)
    assert jnp.allclose(h32, h_ref, atol=1e-4, rtol=1e-4)
    assert jnp.allclose(c32, c_ref, atol=1e-4, rtol=1e-4)

    # --- default bf16-staged path (v6e/v7x fast path): loosened tolerance per review ---
    fwd_bf16 = jax.jit(functools.partial(decoder_forward, param_dtype=jnp.bfloat16))
    out16, (h16, c16) = jax.block_until_ready(fwd_bf16(params, z))
    assert out16.shape == (batch, seq, input_size)
    assert jnp.allclose(out16, out_ref_, atol=5e-2, rtol=5e-2)
    assert jnp.allclose(h16, h_ref, atol=5e-2, rtol=5e-2)
    assert jnp.allclose(c16, c_ref, atol=5e-2, rtol=5e-2)

    print("KERNEL_OK")
</pallas_src>

<mosaic_0001>
module attributes {stable_mosaic.version = 11 : i64} {
  func.func @_fused_decoder_kernel(%arg0: i32, %arg1: memref<8x8x16xf32, #tpu.memory_space<vmem>>, %arg2: memref<16x128xf32, #tpu.memory_space<vmem>>, %arg3: memref<44x176xf32, #tpu.memory_space<vmem>>, %arg4: memref<32x48xf32, #tpu.memory_space<vmem>>, %arg5: memref<1x128xf32, #tpu.memory_space<vmem>>, %arg6: memref<1x48xf32, #tpu.memory_space<vmem>>, %arg7: memref<8x8x12xf32, #tpu.memory_space<vmem>>, %arg8: memref<8x12xf32, #tpu.memory_space<vmem>>, %arg9: memref<8x12xf32, #tpu.memory_space<vmem>>, %arg10: memref<64x128xf32, #tpu.memory_space<vmem>>) attributes {dimension_semantics = [#tpu.dimension_semantics<parallel>], iteration_bounds = array<i64: 1>, scalar_prefetch = 0 : i64, scratch_operands = 1 : i64, tpu.core_type = #tpu.core_type<tc>, window_params = [{transform_indices = @transform_0, window_bounds = array<i64: 8, 8, 16>}, {pipeline_mode = #tpu.pipeline_mode<synchronous>, transform_indices = @transform_1, window_bounds = array<i64: 16, 128>}, {pipeline_mode = #tpu.pipeline_mode<synchronous>, transform_indices = @transform_2, window_bounds = array<i64: 44, 176>}, {pipeline_mode = #tpu.pipeline_mode<synchronous>, transform_indices = @transform_3, window_bounds = array<i64: 32, 48>}, {pipeline_mode = #tpu.pipeline_mode<synchronous>, transform_indices = @transform_4, window_bounds = array<i64: 1, 128>}, {pipeline_mode = #tpu.pipeline_mode<synchronous>, transform_indices = @transform_5, window_bounds = array<i64: 1, 48>}, {transform_indices = @transform_6, window_bounds = array<i64: 8, 8, 12>}, {transform_indices = @transform_7, window_bounds = array<i64: 8, 12>}, {transform_indices = @transform_8, window_bounds = array<i64: 8, 12>}]} {
    %c0 = arith.constant 0 : index
    %c0_0 = arith.constant 0 : index
    %0 = vector.load %arg2[%c0, %c0_0] : memref<16x128xf32, #tpu.memory_space<vmem>>, vector<16x128xf32>
    %c0_1 = arith.constant 0 : index
    %c0_2 = arith.constant 0 : index
    %1 = vector.load %arg3[%c0_1, %c0_2] : memref<44x176xf32, #tpu.memory_space<vmem>>, vector<44x176xf32>
    %c0_3 = arith.constant 0 : index
    %c0_4 = arith.constant 0 : index
    %2 = vector.load %arg4[%c0_3, %c0_4] : memref<32x48xf32, #tpu.memory_space<vmem>>, vector<32x48xf32>
    %c0_5 = arith.constant 0 : index
    %c0_6 = arith.constant 0 : index
    %3 = vector.load %arg5[%c0_5, %c0_6] : memref<1x128xf32, #tpu.memory_space<vmem>>, vector<1x128xf32>
    %c0_7 = arith.constant 0 : index
    %c0_8 = arith.constant 0 : index
    %4 = vector.load %arg6[%c0_7, %c0_8] : memref<1x48xf32, #tpu.memory_space<vmem>>, vector<1x48xf32>
    %5 = vector.shape_cast %4 : vector<1x48xf32> to vector<1x48xf32>
    %6 = vector.broadcast %5 : vector<1x48xf32> to vector<8x48xf32>
    %c0_9 = arith.constant 0 : index
    %c0_10 = arith.constant 0 : index
    %c0_11 = arith.constant 0 : index
    %7 = vector.load %arg1[%c0_9, %c0_10, %c0_11] : memref<8x8x16xf32, #tpu.memory_space<vmem>>, vector<8x8x16xf32>
    %8 = vector.shape_cast %7 : vector<8x8x16xf32> to vector<64x16xf32>
    %cst = arith.constant dense<0.000000e+00> : vector<64x128xf32>
    %9 = tpu.matmul %8, %0, %cst {dimension_numbers = #tpu.dot_dimension_numbers<[1], [0], [0], [1], [0, 0, 1, 1], [], []>} : vector<64x16xf32>, vector<16x128xf32>, vector<64x128xf32> -> vector<64x128xf32>
    %10 = vector.broadcast %3 : vector<1x128xf32> to vector<64x128xf32>
    %11 = arith.addf %9, %10 : vector<64x128xf32>
    %c0_12 = arith.constant 0 : index
    %c0_13 = arith.constant 0 : index
    %12 = vector.load %arg10[%c0_12, %c0_13] : memref<64x128xf32, #tpu.memory_space<vmem>>, vector<64x128xf32>
    tpu.vector_store %arg10[%c0_12, %c0_13], %11 {strides = array<i32>} : memref<64x128xf32, #tpu.memory_space<vmem>>, vector<64x128xf32>,
    %cst_14 = arith.constant 0.000000e+00 : f32
    %13 = vector.broadcast %cst_14 : f32 to vector<8x44xf32>
    %cst_15 = arith.constant 0.000000e+00 : f32
    %14 = vector.broadcast %cst_15 : f32 to vector<8x32xf32>
    %cst_16 = arith.constant 0.000000e+00 : f32
    %15 = vector.broadcast %cst_16 : f32 to vector<8x12xf32>
    %c0_i32 = arith.constant 0 : i32
    %cst_17 = arith.constant dense<0.000000e+00> : vector<8x176xf32>
    %16 = tpu.matmul %13, %1, %cst_17 {dimension_numbers = #tpu.dot_dimension_numbers<[1], [0], [0], [1], [0, 0, 1, 1], [], []>} : vector<8x44xf32>, vector<44x176xf32>, vector<8x176xf32> -> vector<8x176xf32>
    %c8_i32 = arith.constant 8 : i32
    %17 = arith.muli %c0_i32, %c8_i32 : i32
    %18 = tpu.assume_multiple %17, 8 : i32
    %19 = arith.index_cast %18 : i32 to index
    %c0_18 = arith.constant 0 : index
    %20 = vector.load %arg10[%19, %c0_18] : memref<64x128xf32, #tpu.memory_space<vmem>>, vector<8x128xf32>
    %21 = vector.extract_strided_slice %16 {offsets = [0, 0], sizes = [8, 128], strides = [1, 1]} : vector<8x176xf32> to vector<8x128xf32>
    %22 = arith.addf %20, %21 : vector<8x128xf32>
    %23 = vector.extract_strided_slice %22 {offsets = [0, 0], sizes = [8, 96], strides = [1, 1]} : vector<8x128xf32> to vector<8x96xf32>
    %24 = arith.negf %23 : vector<8x96xf32>
    %25 = math.exp %24 : vector<8x96xf32>
    %cst_19 = arith.constant 1.000000e+00 : f32
    %26 = vector.broadcast %cst_19 : f32 to vector<8x96xf32>
    %27 = arith.addf %26, %25 : vector<8x96xf32>
    %28 = arith.divf %26, %27 : vector<8x96xf32>
    %29 = vector.extract_strided_slice %22 {offsets = [0, 96], sizes = [8, 32], strides = [1, 1]} : vector<8x128xf32> to vector<8x32xf32>
    %30 = math.tanh %29 : vector<8x32xf32>
    %31 = vector.extract_strided_slice %28 {offsets = [0, 0], sizes = [8, 32], strides = [1, 1]} : vector<8x96xf32> to vector<8x32xf32>
    %32 = vector.extract_strided_slice %28 {offsets = [0, 32], sizes = [8, 32], strides = [1, 1]} : vector<8x96xf32> to vector<8x32xf32>
    %33 = vector.extract_strided_slice %28 {offsets = [0, 64], sizes = [8, 32], strides = [1, 1]} : vector<8x96xf32> to vector<8x32xf32>
    %34 = arith.mulf %32, %14 : vector<8x32xf32>
    %35 = arith.mulf %31, %30 : vector<8x32xf32>
    %36 = arith.addf %34, %35 : vector<8x32xf32>
    %37 = math.tanh %36 : vector<8x32xf32>
    %38 = arith.mulf %33, %37 : vector<8x32xf32>
    %39 = vector.extract_strided_slice %16 {offsets = [0, 128], sizes = [8, 48], strides = [1, 1]} : vector<8x176xf32> to vector<8x48xf32>
    %40 = arith.addf %39, %6 : vector<8x48xf32>
    %cst_20 = arith.constant dense<0.000000e+00> : vector<8x48xf32>
    %41 = tpu.matmul %38, %2, %cst_20 {dimension_numbers = #tpu.dot_dimension_numbers<[1], [0], [0], [1], [0, 0, 1, 1], [], []>} : vector<8x32xf32>, vector<32x48xf32>, vector<8x48xf32> -> vector<8x48xf32>
    %42 = arith.addf %40, %41 : vector<8x48xf32>
    %43 = vector.extract_strided_slice %42 {offsets = [0, 0], sizes = [8, 36], strides = [1, 1]} : vector<8x48xf32> to vector<8x36xf32>
    %44 = arith.negf %43 : vector<8x36xf32>
    %45 = math.exp %44 : vector<8x36xf32>
    %cst_21 = arith.constant 1.000000e+00 : f32
    %46 = vector.broadcast %cst_21 : f32 to vector<8x36xf32>
    %47 = arith.addf %46, %45 : vector<8x36xf32>
    %48 = arith.divf %46, %47 : vector<8x36xf32>
    %49 = vector.extract_strided_slice %42 {offsets = [0, 36], sizes = [8, 12], strides = [1, 1]} : vector<8x48xf32> to vector<8x12xf32>
    %50 = math.tanh %49 : vector<8x12xf32>
    %51 = vector.extract_strided_slice %48 {offsets = [0, 0], sizes = [8, 12], strides = [1, 1]} : vector<8x36xf32> to vector<8x12xf32>
    %52 = vector.extract_strided_slice %48 {offsets = [0, 12], sizes = [8, 12], strides = [1, 1]} : vector<8x36xf32> to vector<8x12xf32>
    %53 = vector.extract_strided_slice %48 {offsets = [0, 24], sizes = [8, 12], strides = [1, 1]} : vector<8x36xf32> to vector<8x12xf32>
    %54 = arith.mulf %52, %15 : vector<8x12xf32>
    %55 = arith.mulf %51, %50 : vector<8x12xf32>
    %56 = arith.addf %54, %55 : vector<8x12xf32>
    %57 = math.tanh %56 : vector<8x12xf32>
    %58 = arith.mulf %53, %57 : vector<8x12xf32>
    %59 = vector.shape_cast %58 : vector<8x12xf32> to vector<8x1x12xf32>
    %c0_22 = arith.constant 0 : index
    %60 = arith.index_cast %c0_i32 : i32 to index
    %c0_23 = arith.constant 0 : index
    %61 = vector.load %arg7[%c0_22, %60, %c0_23] : memref<8x8x12xf32, #tpu.memory_space<vmem>>, vector<8x1x12xf32>
    tpu.vector_store %arg7[%c0_22, %60, %c0_23], %59 {strides = array<i32>} : memref<8x8x12xf32, #tpu.memory_space<vmem>>, vector<8x1x12xf32>,
    %62 = tpu.concatenate %38, %58 in 1 : vector<8x32xf32>, vector<8x12xf32> -> vector<8x44xf32>
    %c1_i32 = arith.constant 1 : i32
    %cst_24 = arith.constant dense<0.000000e+00> : vector<8x176xf32>
    %63 = tpu.matmul %62, %1, %cst_24 {dimension_numbers = #tpu.dot_dimension_numbers<[1], [0], [0], [1], [0, 0, 1, 1], [], []>} : vector<8x44xf32>, vector<44x176xf32>, vector<8x176xf32> -> vector<8x176xf32>
    %c8_i32_25 = arith.constant 8 : i32
    %64 = arith.muli %c1_i32, %c8_i32_25 : i32
    %65 = tpu.assume_multiple %64, 8 : i32
    %66 = arith.index_cast %65 : i32 to index
    %c0_26 = arith.constant 0 : index
    %67 = vector.load %arg10[%66, %c0_26] : memref<64x128xf32, #tpu.memory_space<vmem>>, vector<8x128xf32>
    %68 = vector.extract_strided_slice %63 {offsets = [0, 0], sizes = [8, 128], strides = [1, 1]} : vector<8x176xf32> to vector<8x128xf32>
    %69 = arith.addf %67, %68 : vector<8x128xf32>
    %70 = vector.extract_strided_slice %69 {offsets = [0, 0], sizes = [8, 96], strides = [1, 1]} : vector<8x128xf32> to vector<8x96xf32>
    %71 = arith.negf %70 : vector<8x96xf32>
    %72 = math.exp %71 : vector<8x96xf32>
    %cst_27 = arith.constant 1.000000e+00 : f32
    %73 = vector.broadcast %cst_27 : f32 to vector<8x96xf32>
    %74 = arith.addf %73, %72 : vector<8x96xf32>
    %75 = arith.divf %73, %74 : vector<8x96xf32>
    %76 = vector.extract_strided_slice %69 {offsets = [0, 96], sizes = [8, 32], strides = [1, 1]} : vector<8x128xf32> to vector<8x32xf32>
    %77 = math.tanh %76 : vector<8x32xf32>
    %78 = vector.extract_strided_slice %75 {offsets = [0, 0], sizes = [8, 32], strides = [1, 1]} : vector<8x96xf32> to vector<8x32xf32>
    %79 = vector.extract_strided_slice %75 {offsets = [0, 32], sizes = [8, 32], strides = [1, 1]} : vector<8x96xf32> to vector<8x32xf32>
    %80 = vector.extract_strided_slice %75 {offsets = [0, 64], sizes = [8, 32], strides = [1, 1]} : vector<8x96xf32> to vector<8x32xf32>
    %81 = arith.mulf %79, %36 : vector<8x32xf32>
    %82 = arith.mulf %78, %77 : vector<8x32xf32>
    %83 = arith.addf %81, %82 : vector<8x32xf32>
    %84 = math.tanh %83 : vector<8x32xf32>
    %85 = arith.mulf %80, %84 : vector<8x32xf32>
    %86 = vector.extract_strided_slice %63 {offsets = [0, 128], sizes = [8, 48], strides = [1, 1]} : vector<8x176xf32> to vector<8x48xf32>
    %87 = arith.addf %86, %6 : vector<8x48xf32>
    %cst_28 = arith.constant dense<0.000000e+00> : vector<8x48xf32>
    %88 = tpu.matmul %85, %2, %cst_28 {dimension_numbers = #tpu.dot_dimension_numbers<[1], [0], [0], [1], [0, 0, 1, 1], [], []>} : vector<8x32xf32>, vector<32x48xf32>, vector<8x48xf32> -> vector<8x48xf32>
    %89 = arith.addf %87, %88 : vector<8x48xf32>
    %90 = vector.extract_strided_slice %89 {offsets = [0, 0], sizes = [8, 36], strides = [1, 1]} : vector<8x48xf32> to vector<8x36xf32>
    %91 = arith.negf %90 : vector<8x36xf32>
    %92 = math.exp %91 : vector<8x36xf32>
    %cst_29 = arith.constant 1.000000e+00 : f32
    %93 = vector.broadcast %cst_29 : f32 to vector<8x36xf32>
    %94 = arith.addf %93, %92 : vector<8x36xf32>
    %95 = arith.divf %93, %94 : vector<8x36xf32>
    %96 = vector.extract_strided_slice %89 {offsets = [0, 36], sizes = [8, 12], strides = [1, 1]} : vector<8x48xf32> to vector<8x12xf32>
    %97 = math.tanh %96 : vector<8x12xf32>
    %98 = vector.extract_strided_slice %95 {offsets = [0, 0], sizes = [8, 12], strides = [1, 1]} : vector<8x36xf32> to vector<8x12xf32>
    %99 = vector.extract_strided_slice %95 {offsets = [0, 12], sizes = [8, 12], strides = [1, 1]} : vector<8x36xf32> to vector<8x12xf32>
    %100 = vector.extract_strided_slice %95 {offsets = [0, 24], sizes = [8, 12], strides = [1, 1]} : vector<8x36xf32> to vector<8x12xf32>
    %101 = arith.mulf %99, %56 : vector<8x12xf32>
    %102 = arith.mulf %98, %97 : vector<8x12xf32>
    %103 = arith.addf %101, %102 : vector<8x12xf32>
    %104 = math.tanh %103 : vector<8x12xf32>
    %105 = arith.mulf %100, %104 : vector<8x12xf32>
    %106 = vector.shape_cast %105 : vector<8x12xf32> to vector<8x1x12xf32>
    %c0_30 = arith.constant 0 : index
    %107 = arith.index_cast %c1_i32 : i32 to index
    %c0_31 = arith.constant 0 : index
    %108 = vector.load %arg7[%c0_30, %107, %c0_31] : memref<8x8x12xf32, #tpu.memory_space<vmem>>, vector<8x1x12xf32>
    tpu.vector_store %arg7[%c0_30, %107, %c0_31], %106 {strides = array<i32>} : memref<8x8x12xf32, #tpu.memory_space<vmem>>, vector<8x1x12xf32>,
    %109 = tpu.concatenate %85, %105 in 1 : vector<8x32xf32>, vector<8x12xf32> -> vector<8x44xf32>
    %c2_i32 = arith.constant 2 : i32
    %cst_32 = arith.constant dense<0.000000e+00> : vector<8x176xf32>
    %110 = tpu.matmul %109, %1, %cst_32 {dimension_numbers = #tpu.dot_dimension_numbers<[1], [0], [0], [1], [0, 0, 1, 1], [], []>} : vector<8x44xf32>, vector<44x176xf32>, vector<8x176xf32> -> vector<8x176xf32>
    %c8_i32_33 = arith.constant 8 : i32
    %111 = arith.muli %c2_i32, %c8_i32_33 : i32
    %112 = tpu.assume_multiple %111, 8 : i32
    %113 = arith.index_cast %112 : i32 to index
    %c0_34 = arith.constant 0 : index
    %114 = vector.load %arg10[%113, %c0_34] : memref<64x128xf32, #tpu.memory_space<vmem>>, vector<8x128xf32>
    %115 = vector.extract_strided_slice %110 {offsets = [0, 0], sizes = [8, 128], strides = [1, 1]} : vector<8x176xf32> to vector<8x128xf32>
    %116 = arith.addf %114, %115 : vector<8x128xf32>
    %117 = vector.extract_strided_slice %116 {offsets = [0, 0], sizes = [8, 96], strides = [1, 1]} : vector<8x128xf32> to vector<8x96xf32>
    %118 = arith.negf %117 : vector<8x96xf32>
    %119 = math.exp %118 : vector<8x96xf32>
    %cst_35 = arith.constant 1.000000e+00 : f32
    %120 = vector.broadcast %cst_35 : f32 to vector<8x96xf32>
    %121 = arith.addf %120, %119 : vector<8x96xf32>
    %122 = arith.divf %120, %121 : vector<8x96xf32>
    %123 = vector.extract_strided_slice %116 {offsets = [0, 96], sizes = [8, 32], strides = [1, 1]} : vector<8x128xf32> to vector<8x32xf32>
    %124 = math.tanh %123 : vector<8x32xf32>
    %125 = vector.extract_strided_slice %122 {offsets = [0, 0], sizes = [8, 32], strides = [1, 1]} : vector<8x96xf32> to vector<8x32xf32>
    %126 = vector.extract_strided_slice %122 {offsets = [0, 32], sizes = [8, 32], strides = [1, 1]} : vector<8x96xf32> to vector<8x32xf32>
    %127 = vector.extract_strided_slice %122 {offsets = [0, 64], sizes = [8, 32], strides = [1, 1]} : vector<8x96xf32> to vector<8x32xf32>
    %128 = arith.mulf %126, %83 : vector<8x32xf32>
    %129 = arith.mulf %125, %124 : vector<8x32xf32>
    %130 = arith.addf %128, %129 : vector<8x32xf32>
    %131 = math.tanh %130 : vector<8x32xf32>
    %132 = arith.mulf %127, %131 : vector<8x32xf32>
    %133 = vector.extract_strided_slice %110 {offsets = [0, 128], sizes = [8, 48], strides = [1, 1]} : vector<8x176xf32> to vector<8x48xf32>
    %134 = arith.addf %133, %6 : vector<8x48xf32>
    %cst_36 = arith.constant dense<0.000000e+00> : vector<8x48xf32>
    %135 = tpu.matmul %132, %2, %cst_36 {dimension_numbers = #tpu.dot_dimension_numbers<[1], [0], [0], [1], [0, 0, 1, 1], [], []>} : vector<8x32xf32>, vector<32x48xf32>, vector<8x48xf32> -> vector<8x48xf32>
    %136 = arith.addf %134, %135 : vector<8x48xf32>
    %137 = vector.extract_strided_slice %136 {offsets = [0, 0], sizes = [8, 36], strides = [1, 1]} : vector<8x48xf32> to vector<8x36xf32>
    %138 = arith.negf %137 : vector<8x36xf32>
    %139 = math.exp %138 : vector<8x36xf32>
    %cst_37 = arith.constant 1.000000e+00 : f32
    %140 = vector.broadcast %cst_37 : f32 to vector<8x36xf32>
    %141 = arith.addf %140, %139 : vector<8x36xf32>
    %142 = arith.divf %140, %141 : vector<8x36xf32>
    %143 = vector.extract_strided_slice %136 {offsets = [0, 36], sizes = [8, 12], strides = [1, 1]} : vector<8x48xf32> to vector<8x12xf32>
    %144 = math.tanh %143 : vector<8x12xf32>
    %145 = vector.extract_strided_slice %142 {offsets = [0, 0], sizes = [8, 12], strides = [1, 1]} : vector<8x36xf32> to vector<8x12xf32>
    %146 = vector.extract_strided_slice %142 {offsets = [0, 12], sizes = [8, 12], strides = [1, 1]} : vector<8x36xf32> to vector<8x12xf32>
    %147 = vector.extract_strided_slice %142 {offsets = [0, 24], sizes = [8, 12], strides = [1, 1]} : vector<8x36xf32> to vector<8x12xf32>
    %148 = arith.mulf %146, %103 : vector<8x12xf32>
    %149 = arith.mulf %145, %144 : vector<8x12xf32>
    %150 = arith.addf %148, %149 : vector<8x12xf32>
    %151 = math.tanh %150 : vector<8x12xf32>
    %152 = arith.mulf %147, %151 : vector<8x12xf32>
    %153 = vector.shape_cast %152 : vector<8x12xf32> to vector<8x1x12xf32>
    %c0_38 = arith.constant 0 : index
    %154 = arith.index_cast %c2_i32 : i32 to index
    %c0_39 = arith.constant 0 : index
    %155 = vector.load %arg7[%c0_38, %154, %c0_39] : memref<8x8x12xf32, #tpu.memory_space<vmem>>, vector<8x1x12xf32>
    tpu.vector_store %arg7[%c0_38, %154, %c0_39], %153 {strides = array<i32>} : memref<8x8x12xf32, #tpu.memory_space<vmem>>, vector<8x1x12xf32>,
    %156 = tpu.concatenate %132, %152 in 1 : vector<8x32xf32>, vector<8x12xf32> -> vector<8x44xf32>
    %c3_i32 = arith.constant 3 : i32
    %cst_40 = arith.constant dense<0.000000e+00> : vector<8x176xf32>
    %157 = tpu.matmul %156, %1, %cst_40 {dimension_numbers = #tpu.dot_dimension_numbers<[1], [0], [0], [1], [0, 0, 1, 1], [], []>} : vector<8x44xf32>, vector<44x176xf32>, vector<8x176xf32> -> vector<8x176xf32>
    %c8_i32_41 = arith.constant 8 : i32
    %158 = arith.muli %c3_i32, %c8_i32_41 : i32
    %159 = tpu.assume_multiple %158, 8 : i32
    %160 = arith.index_cast %159 : i32 to index
    %c0_42 = arith.constant 0 : index
    %161 = vector.load %arg10[%160, %c0_42] : memref<64x128xf32, #tpu.memory_space<vmem>>, vector<8x128xf32>
    %162 = vector.extract_strided_slice %157 {offsets = [0, 0], sizes = [8, 128], strides = [1, 1]} : vector<8x176xf32> to vector<8x128xf32>
    %163 = arith.addf %161, %162 : vector<8x128xf32>
    %164 = vector.extract_strided_slice %163 {offsets = [0, 0], sizes = [8, 96], strides = [1, 1]} : vector<8x128xf32> to vector<8x96xf32>
    %165 = arith.negf %164 : vector<8x96xf32>
    %166 = math.exp %165 : vector<8x96xf32>
    %cst_43 = arith.constant 1.000000e+00 : f32
    %167 = vector.broadcast %cst_43 : f32 to vector<8x96xf32>
    %168 = arith.addf %167, %166 : vector<8x96xf32>
    %169 = arith.divf %167, %168 : vector<8x96xf32>
    %170 = vector.extract_strided_slice %163 {offsets = [0, 96], sizes = [8, 32], strides = [1, 1]} : vector<8x128xf32> to vector<8x32xf32>
    %171 = math.tanh %170 : vector<8x32xf32>
    %172 = vector.extract_strided_slice %169 {offsets = [0, 0], sizes = [8, 32], strides = [1, 1]} : vector<8x96xf32> to vector<8x32xf32>
    %173 = vector.extract_strided_slice %169 {offsets = [0, 32], sizes = [8, 32], strides = [1, 1]} : vector<8x96xf32> to vector<8x32xf32>
    %174 = vector.extract_strided_slice %169 {offsets = [0, 64], sizes = [8, 32], strides = [1, 1]} : vector<8x96xf32> to vector<8x32xf32>
    %175 = arith.mulf %173, %130 : vector<8x32xf32>
    %176 = arith.mulf %172, %171 : vector<8x32xf32>
    %177 = arith.addf %175, %176 : vector<8x32xf32>
    %178 = math.tanh %177 : vector<8x32xf32>
    %179 = arith.mulf %174, %178 : vector<8x32xf32>
    %180 = vector.extract_strided_slice %157 {offsets = [0, 128], sizes = [8, 48], strides = [1, 1]} : vector<8x176xf32> to vector<8x48xf32>
    %181 = arith.addf %180, %6 : vector<8x48xf32>
    %cst_44 = arith.constant dense<0.000000e+00> : vector<8x48xf32>
    %182 = tpu.matmul %179, %2, %cst_44 {dimension_numbers = #tpu.dot_dimension_numbers<[1], [0], [0], [1], [0, 0, 1, 1], [], []>} : vector<8x32xf32>, vector<32x48xf32>, vector<8x48xf32> -> vector<8x48xf32>
    %183 = arith.addf %181, %182 : vector<8x48xf32>
    %184 = vector.extract_strided_slice %183 {offsets = [0, 0], sizes = [8, 36], strides = [1, 1]} : vector<8x48xf32> to vector<8x36xf32>
    %185 = arith.negf %184 : vector<8x36xf32>
    %186 = math.exp %185 : vector<8x36xf32>
    %cst_45 = arith.constant 1.000000e+00 : f32
    %187 = vector.broadcast %cst_45 : f32 to vector<8x36xf32>
    %188 = arith.addf %187, %186 : vector<8x36xf32>
    %189 = arith.divf %187, %188 : vector<8x36xf32>
    %190 = vector.extract_strided_slice %183 {offsets = [0, 36], sizes = [8, 12], strides = [1, 1]} : vector<8x48xf32> to vector<8x12xf32>
    %191 = math.tanh %190 : vector<8x12xf32>
    %192 = vector.extract_strided_slice %189 {offsets = [0, 0], sizes = [8, 12], strides = [1, 1]} : vector<8x36xf32> to vector<8x12xf32>
    %193 = vector.extract_strided_slice %189 {offsets = [0, 12], sizes = [8, 12], strides = [1, 1]} : vector<8x36xf32> to vector<8x12xf32>
    %194 = vector.extract_strided_slice %189 {offsets = [0, 24], sizes = [8, 12], strides = [1, 1]} : vector<8x36xf32> to vector<8x12xf32>
    %195 = arith.mulf %193, %150 : vector<8x12xf32>
    %196 = arith.mulf %192, %191 : vector<8x12xf32>
    %197 = arith.addf %195, %196 : vector<8x12xf32>
    %198 = math.tanh %197 : vector<8x12xf32>
    %199 = arith.mulf %194, %198 : vector<8x12xf32>
    %200 = vector.shape_cast %199 : vector<8x12xf32> to vector<8x1x12xf32>
    %c0_46 = arith.constant 0 : index
    %201 = arith.index_cast %c3_i32 : i32 to index
    %c0_47 = arith.constant 0 : index
    %202 = vector.load %arg7[%c0_46, %201, %c0_47] : memref<8x8x12xf32, #tpu.memory_space<vmem>>, vector<8x1x12xf32>
    tpu.vector_store %arg7[%c0_46, %201, %c0_47], %200 {strides = array<i32>} : memref<8x8x12xf32, #tpu.memory_space<vmem>>, vector<8x1x12xf32>,
    %203 = tpu.concatenate %179, %199 in 1 : vector<8x32xf32>, vector<8x12xf32> -> vector<8x44xf32>
    %c4_i32 = arith.constant 4 : i32
    %cst_48 = arith.constant dense<0.000000e+00> : vector<8x176xf32>
    %204 = tpu.matmul %203, %1, %cst_48 {dimension_numbers = #tpu.dot_dimension_numbers<[1], [0], [0], [1], [0, 0, 1, 1], [], []>} : vector<8x44xf32>, vector<44x176xf32>, vector<8x176xf32> -> vector<8x176xf32>
    %c8_i32_49 = arith.constant 8 : i32
    %205 = arith.muli %c4_i32, %c8_i32_49 : i32
    %206 = tpu.assume_multiple %205, 8 : i32
    %207 = arith.index_cast %206 : i32 to index
    %c0_50 = arith.constant 0 : index
    %208 = vector.load %arg10[%207, %c0_50] : memref<64x128xf32, #tpu.memory_space<vmem>>, vector<8x128xf32>
    %209 = vector.extract_strided_slice %204 {offsets = [0, 0], sizes = [8, 128], strides = [1, 1]} : vector<8x176xf32> to vector<8x128xf32>
    %210 = arith.addf %208, %209 : vector<8x128xf32>
    %211 = vector.extract_strided_slice %210 {offsets = [0, 0], sizes = [8, 96], strides = [1, 1]} : vector<8x128xf32> to vector<8x96xf32>
    %212 = arith.negf %211 : vector<8x96xf32>
    %213 = math.exp %212 : vector<8x96xf32>
    %cst_51 = arith.constant 1.000000e+00 : f32
    %214 = vector.broadcast %cst_51 : f32 to vector<8x96xf32>
    %215 = arith.addf %214, %213 : vector<8x96xf32>
    %216 = arith.divf %214, %215 : vector<8x96xf32>
    %217 = vector.extract_strided_slice %210 {offsets = [0, 96], sizes = [8, 32], strides = [1, 1]} : vector<8x128xf32> to vector<8x32xf32>
    %218 = math.tanh %217 : vector<8x32xf32>
    %219 = vector.extract_strided_slice %216 {offsets = [0, 0], sizes = [8, 32], strides = [1, 1]} : vector<8x96xf32> to vector<8x32xf32>
    %220 = vector.extract_strided_slice %216 {offsets = [0, 32], sizes = [8, 32], strides = [1, 1]} : vector<8x96xf32> to vector<8x32xf32>
    %221 = vector.extract_strided_slice %216 {offsets = [0, 64], sizes = [8, 32], strides = [1, 1]} : vector<8x96xf32> to vector<8x32xf32>
    %222 = arith.mulf %220, %177 : vector<8x32xf32>
    %223 = arith.mulf %219, %218 : vector<8x32xf32>
    %224 = arith.addf %222, %223 : vector<8x32xf32>
    %225 = math.tanh %224 : vector<8x32xf32>
    %226 = arith.mulf %221, %225 : vector<8x32xf32>
    %227 = vector.extract_strided_slice %204 {offsets = [0, 128], sizes = [8, 48], strides = [1, 1]} : vector<8x176xf32> to vector<8x48xf32>
    %228 = arith.addf %227, %6 : vector<8x48xf32>
    %cst_52 = arith.constant dense<0.000000e+00> : vector<8x48xf32>
    %229 = tpu.matmul %226, %2, %cst_52 {dimension_numbers = #tpu.dot_dimension_numbers<[1], [0], [0], [1], [0, 0, 1, 1], [], []>} : vector<8x32xf32>, vector<32x48xf32>, vector<8x48xf32> -> vector<8x48xf32>
    %230 = arith.addf %228, %229 : vector<8x48xf32>
    %231 = vector.extract_strided_slice %230 {offsets = [0, 0], sizes = [8, 36], strides = [1, 1]} : vector<8x48xf32> to vector<8x36xf32>
    %232 = arith.negf %231 : vector<8x36xf32>
    %233 = math.exp %232 : vector<8x36xf32>
    %cst_53 = arith.constant 1.000000e+00 : f32
    %234 = vector.broadcast %cst_53 : f32 to vector<8x36xf32>
    %235 = arith.addf %234, %233 : vector<8x36xf32>
    %236 = arith.divf %234, %235 : vector<8x36xf32>
    %237 = vector.extract_strided_slice %230 {offsets = [0, 36], sizes = [8, 12], strides = [1, 1]} : vector<8x48xf32> to vector<8x12xf32>
    %238 = math.tanh %237 : vector<8x12xf32>
    %239 = vector.extract_strided_slice %236 {offsets = [0, 0], sizes = [8, 12], strides = [1, 1]} : vector<8x36xf32> to vector<8x12xf32>
    %240 = vector.extract_strided_slice %236 {offsets = [0, 12], sizes = [8, 12], strides = [1, 1]} : vector<8x36xf32> to vector<8x12xf32>
    %241 = vector.extract_strided_slice %236 {offsets = [0, 24], sizes = [8, 12], strides = [1, 1]} : vector<8x36xf32> to vector<8x12xf32>
    %242 = arith.mulf %240, %197 : vector<8x12xf32>
    %243 = arith.mulf %239, %238 : vector<8x12xf32>
    %244 = arith.addf %242, %243 : vector<8x12xf32>
    %245 = math.tanh %244 : vector<8x12xf32>
    %246 = arith.mulf %241, %245 : vector<8x12xf32>
    %247 = vector.shape_cast %246 : vector<8x12xf32> to vector<8x1x12xf32>
    %c0_54 = arith.constant 0 : index
    %248 = arith.index_cast %c4_i32 : i32 to index
    %c0_55 = arith.constant 0 : index
    %249 = vector.load %arg7[%c0_54, %248, %c0_55] : memref<8x8x12xf32, #tpu.memory_space<vmem>>, vector<8x1x12xf32>
    tpu.vector_store %arg7[%c0_54, %248, %c0_55], %247 {strides = array<i32>} : memref<8x8x12xf32, #tpu.memory_space<vmem>>, vector<8x1x12xf32>,
    %250 = tpu.concatenate %226, %246 in 1 : vector<8x32xf32>, vector<8x12xf32> -> vector<8x44xf32>
    %c5_i32 = arith.constant 5 : i32
    %cst_56 = arith.constant dense<0.000000e+00> : vector<8x176xf32>
    %251 = tpu.matmul %250, %1, %cst_56 {dimension_numbers = #tpu.dot_dimension_numbers<[1], [0], [0], [1], [0, 0, 1, 1], [], []>} : vector<8x44xf32>, vector<44x176xf32>, vector<8x176xf32> -> vector<8x176xf32>
    %c8_i32_57 = arith.constant 8 : i32
    %252 = arith.muli %c5_i32, %c8_i32_57 : i32
    %253 = tpu.assume_multiple %252, 8 : i32
    %254 = arith.index_cast %253 : i32 to index
    %c0_58 = arith.constant 0 : index
    %255 = vector.load %arg10[%254, %c0_58] : memref<64x128xf32, #tpu.memory_space<vmem>>, vector<8x128xf32>
    %256 = vector.extract_strided_slice %251 {offsets = [0, 0], sizes = [8, 128], strides = [1, 1]} : vector<8x176xf32> to vector<8x128xf32>
    %257 = arith.addf %255, %256 : vector<8x128xf32>
    %258 = vector.extract_strided_slice %257 {offsets = [0, 0], sizes = [8, 96], strides = [1, 1]} : vector<8x128xf32> to vector<8x96xf32>
    %259 = arith.negf %258 : vector<8x96xf32>
    %260 = math.exp %259 : vector<8x96xf32>
    %cst_59 = arith.constant 1.000000e+00 : f32
    %261 = vector.broadcast %cst_59 : f32 to vector<8x96xf32>
    %262 = arith.addf %261, %260 : vector<8x96xf32>
    %263 = arith.divf %261, %262 : vector<8x96xf32>
    %264 = vector.extract_strided_slice %257 {offsets = [0, 96], sizes = [8, 32], strides = [1, 1]} : vector<8x128xf32> to vector<8x32xf32>
    %265 = math.tanh %264 : vector<8x32xf32>
    %266 = vector.extract_strided_slice %263 {offsets = [0, 0], sizes = [8, 32], strides = [1, 1]} : vector<8x96xf32> to vector<8x32xf32>
    %267 = vector.extract_strided_slice %263 {offsets = [0, 32], sizes = [8, 32], strides = [1, 1]} : vector<8x96xf32> to vector<8x32xf32>
    %268 = vector.extract_strided_slice %263 {offsets = [0, 64], sizes = [8, 32], strides = [1, 1]} : vector<8x96xf32> to vector<8x32xf32>
    %269 = arith.mulf %267, %224 : vector<8x32xf32>
    %270 = arith.mulf %266, %265 : vector<8x32xf32>
    %271 = arith.addf %269, %270 : vector<8x32xf32>
    %272 = math.tanh %271 : vector<8x32xf32>
    %273 = arith.mulf %268, %272 : vector<8x32xf32>
    %274 = vector.extract_strided_slice %251 {offsets = [0, 128], sizes = [8, 48], strides = [1, 1]} : vector<8x176xf32> to vector<8x48xf32>
    %275 = arith.addf %274, %6 : vector<8x48xf32>
    %cst_60 = arith.constant dense<0.000000e+00> : vector<8x48xf32>
    %276 = tpu.matmul %273, %2, %cst_60 {dimension_numbers = #tpu.dot_dimension_numbers<[1], [0], [0], [1], [0, 0, 1, 1], [], []>} : vector<8x32xf32>, vector<32x48xf32>, vector<8x48xf32> -> vector<8x48xf32>
    %277 = arith.addf %275, %276 : vector<8x48xf32>
    %278 = vector.extract_strided_slice %277 {offsets = [0, 0], sizes = [8, 36], strides = [1, 1]} : vector<8x48xf32> to vector<8x36xf32>
    %279 = arith.negf %278 : vector<8x36xf32>
    %280 = math.exp %279 : vector<8x36xf32>
    %cst_61 = arith.constant 1.000000e+00 : f32
    %281 = vector.broadcast %cst_61 : f32 to vector<8x36xf32>
    %282 = arith.addf %281, %280 : vector<8x36xf32>
    %283 = arith.divf %281, %282 : vector<8x36xf32>
    %284 = vector.extract_strided_slice %277 {offsets = [0, 36], sizes = [8, 12], strides = [1, 1]} : vector<8x48xf32> to vector<8x12xf32>
    %285 = math.tanh %284 : vector<8x12xf32>
    %286 = vector.extract_strided_slice %283 {offsets = [0, 0], sizes = [8, 12], strides = [1, 1]} : vector<8x36xf32> to vector<8x12xf32>
    %287 = vector.extract_strided_slice %283 {offsets = [0, 12], sizes = [8, 12], strides = [1, 1]} : vector<8x36xf32> to vector<8x12xf32>
    %288 = vector.extract_strided_slice %283 {offsets = [0, 24], sizes = [8, 12], strides = [1, 1]} : vector<8x36xf32> to vector<8x12xf32>
    %289 = arith.mulf %287, %244 : vector<8x12xf32>
    %290 = arith.mulf %286, %285 : vector<8x12xf32>
    %291 = arith.addf %289, %290 : vector<8x12xf32>
    %292 = math.tanh %291 : vector<8x12xf32>
    %293 = arith.mulf %288, %292 : vector<8x12xf32>
    %294 = vector.shape_cast %293 : vector<8x12xf32> to vector<8x1x12xf32>
    %c0_62 = arith.constant 0 : index
    %295 = arith.index_cast %c5_i32 : i32 to index
    %c0_63 = arith.constant 0 : index
    %296 = vector.load %arg7[%c0_62, %295, %c0_63] : memref<8x8x12xf32, #tpu.memory_space<vmem>>, vector<8x1x12xf32>
    tpu.vector_store %arg7[%c0_62, %295, %c0_63], %294 {strides = array<i32>} : memref<8x8x12xf32, #tpu.memory_space<vmem>>, vector<8x1x12xf32>,
    %297 = tpu.concatenate %273, %293 in 1 : vector<8x32xf32>, vector<8x12xf32> -> vector<8x44xf32>
    %c6_i32 = arith.constant 6 : i32
    %cst_64 = arith.constant dense<0.000000e+00> : vector<8x176xf32>
    %298 = tpu.matmul %297, %1, %cst_64 {dimension_numbers = #tpu.dot_dimension_numbers<[1], [0], [0], [1], [0, 0, 1, 1], [], []>} : vector<8x44xf32>, vector<44x176xf32>, vector<8x176xf32> -> vector<8x176xf32>
    %c8_i32_65 = arith.constant 8 : i32
    %299 = arith.muli %c6_i32, %c8_i32_65 : i32
    %300 = tpu.assume_multiple %299, 8 : i32
    %301 = arith.index_cast %300 : i32 to index
    %c0_66 = arith.constant 0 : index
    %302 = vector.load %arg10[%301, %c0_66] : memref<64x128xf32, #tpu.memory_space<vmem>>, vector<8x128xf32>
    %303 = vector.extract_strided_slice %298 {offsets = [0, 0], sizes = [8, 128], strides = [1, 1]} : vector<8x176xf32> to vector<8x128xf32>
    %304 = arith.addf %302, %303 : vector<8x128xf32>
    %305 = vector.extract_strided_slice %304 {offsets = [0, 0], sizes = [8, 96], strides = [1, 1]} : vector<8x128xf32> to vector<8x96xf32>
    %306 = arith.negf %305 : vector<8x96xf32>
    %307 = math.exp %306 : vector<8x96xf32>
    %cst_67 = arith.constant 1.000000e+00 : f32
    %308 = vector.broadcast %cst_67 : f32 to vector<8x96xf32>
    %309 = arith.addf %308, %307 : vector<8x96xf32>
    %310 = arith.divf %308, %309 : vector<8x96xf32>
    %311 = vector.extract_strided_slice %304 {offsets = [0, 96], sizes = [8, 32], strides = [1, 1]} : vector<8x128xf32> to vector<8x32xf32>
    %312 = math.tanh %311 : vector<8x32xf32>
    %313 = vector.extract_strided_slice %310 {offsets = [0, 0], sizes = [8, 32], strides = [1, 1]} : vector<8x96xf32> to vector<8x32xf32>
    %314 = vector.extract_strided_slice %310 {offsets = [0, 32], sizes = [8, 32], strides = [1, 1]} : vector<8x96xf32> to vector<8x32xf32>
    %315 = vector.extract_strided_slice %310 {offsets = [0, 64], sizes = [8, 32], strides = [1, 1]} : vector<8x96xf32> to vector<8x32xf32>
    %316 = arith.mulf %314, %271 : vector<8x32xf32>
    %317 = arith.mulf %313, %312 : vector<8x32xf32>
    %318 = arith.addf %316, %317 : vector<8x32xf32>
    %319 = math.tanh %318 : vector<8x32xf32>
    %320 = arith.mulf %315, %319 : vector<8x32xf32>
    %321 = vector.extract_strided_slice %298 {offsets = [0, 128], sizes = [8, 48], strides = [1, 1]} : vector<8x176xf32> to vector<8x48xf32>
    %322 = arith.addf %321, %6 : vector<8x48xf32>
    %cst_68 = arith.constant dense<0.000000e+00> : vector<8x48xf32>
    %323 = tpu.matmul %320, %2, %cst_68 {dimension_numbers = #tpu.dot_dimension_numbers<[1], [0], [0], [1], [0, 0, 1, 1], [], []>} : vector<8x32xf32>, vector<32x48xf32>, vector<8x48xf32> -> vector<8x48xf32>
    %324 = arith.addf %322, %323 : vector<8x48xf32>
    %325 = vector.extract_strided_slice %324 {offsets = [0, 0], sizes = [8, 36], strides = [1, 1]} : vector<8x48xf32> to vector<8x36xf32>
    %326 = arith.negf %325 : vector<8x36xf32>
    %327 = math.exp %326 : vector<8x36xf32>
    %cst_69 = arith.constant 1.000000e+00 : f32
    %328 = vector.broadcast %cst_69 : f32 to vector<8x36xf32>
    %329 = arith.addf %328, %327 : vector<8x36xf32>
    %330 = arith.divf %328, %329 : vector<8x36xf32>
    %331 = vector.extract_strided_slice %324 {offsets = [0, 36], sizes = [8, 12], strides = [1, 1]} : vector<8x48xf32> to vector<8x12xf32>
    %332 = math.tanh %331 : vector<8x12xf32>
    %333 = vector.extract_strided_slice %330 {offsets = [0, 0], sizes = [8, 12], strides = [1, 1]} : vector<8x36xf32> to vector<8x12xf32>
    %334 = vector.extract_strided_slice %330 {offsets = [0, 12], sizes = [8, 12], strides = [1, 1]} : vector<8x36xf32> to vector<8x12xf32>
    %335 = vector.extract_strided_slice %330 {offsets = [0, 24], sizes = [8, 12], strides = [1, 1]} : vector<8x36xf32> to vector<8x12xf32>
    %336 = arith.mulf %334, %291 : vector<8x12xf32>
    %337 = arith.mulf %333, %332 : vector<8x12xf32>
    %338 = arith.addf %336, %337 : vector<8x12xf32>
    %339 = math.tanh %338 : vector<8x12xf32>
    %340 = arith.mulf %335, %339 : vector<8x12xf32>
    %341 = vector.shape_cast %340 : vector<8x12xf32> to vector<8x1x12xf32>
    %c0_70 = arith.constant 0 : index
    %342 = arith.index_cast %c6_i32 : i32 to index
    %c0_71 = arith.constant 0 : index
    %343 = vector.load %arg7[%c0_70, %342, %c0_71] : memref<8x8x12xf32, #tpu.memory_space<vmem>>, vector<8x1x12xf32>
    tpu.vector_store %arg7[%c0_70, %342, %c0_71], %341 {strides = array<i32>} : memref<8x8x12xf32, #tpu.memory_space<vmem>>, vector<8x1x12xf32>,
    %344 = tpu.concatenate %320, %340 in 1 : vector<8x32xf32>, vector<8x12xf32> -> vector<8x44xf32>
    %c7_i32 = arith.constant 7 : i32
    %cst_72 = arith.constant dense<0.000000e+00> : vector<8x176xf32>
    %345 = tpu.matmul %344, %1, %cst_72 {dimension_numbers = #tpu.dot_dimension_numbers<[1], [0], [0], [1], [0, 0, 1, 1], [], []>} : vector<8x44xf32>, vector<44x176xf32>, vector<8x176xf32> -> vector<8x176xf32>
    %c8_i32_73 = arith.constant 8 : i32
    %346 = arith.muli %c7_i32, %c8_i32_73 : i32
    %347 = tpu.assume_multiple %346, 8 : i32
    %348 = arith.index_cast %347 : i32 to index
    %c0_74 = arith.constant 0 : index
    %349 = vector.load %arg10[%348, %c0_74] : memref<64x128xf32, #tpu.memory_space<vmem>>, vector<8x128xf32>
    %350 = vector.extract_strided_slice %345 {offsets = [0, 0], sizes = [8, 128], strides = [1, 1]} : vector<8x176xf32> to vector<8x128xf32>
    %351 = arith.addf %349, %350 : vector<8x128xf32>
    %352 = vector.extract_strided_slice %351 {offsets = [0, 0], sizes = [8, 96], strides = [1, 1]} : vector<8x128xf32> to vector<8x96xf32>
    %353 = arith.negf %352 : vector<8x96xf32>
    %354 = math.exp %353 : vector<8x96xf32>
    %cst_75 = arith.constant 1.000000e+00 : f32
    %355 = vector.broadcast %cst_75 : f32 to vector<8x96xf32>
    %356 = arith.addf %355, %354 : vector<8x96xf32>
    %357 = arith.divf %355, %356 : vector<8x96xf32>
    %358 = vector.extract_strided_slice %351 {offsets = [0, 96], sizes = [8, 32], strides = [1, 1]} : vector<8x128xf32> to vector<8x32xf32>
    %359 = math.tanh %358 : vector<8x32xf32>
    %360 = vector.extract_strided_slice %357 {offsets = [0, 0], sizes = [8, 32], strides = [1, 1]} : vector<8x96xf32> to vector<8x32xf32>
    %361 = vector.extract_strided_slice %357 {offsets = [0, 32], sizes = [8, 32], strides = [1, 1]} : vector<8x96xf32> to vector<8x32xf32>
    %362 = vector.extract_strided_slice %357 {offsets = [0, 64], sizes = [8, 32], strides = [1, 1]} : vector<8x96xf32> to vector<8x32xf32>
    %363 = arith.mulf %361, %318 : vector<8x32xf32>
    %364 = arith.mulf %360, %359 : vector<8x32xf32>
    %365 = arith.addf %363, %364 : vector<8x32xf32>
    %366 = math.tanh %365 : vector<8x32xf32>
    %367 = arith.mulf %362, %366 : vector<8x32xf32>
    %368 = vector.extract_strided_slice %345 {offsets = [0, 128], sizes = [8, 48], strides = [1, 1]} : vector<8x176xf32> to vector<8x48xf32>
    %369 = arith.addf %368, %6 : vector<8x48xf32>
    %cst_76 = arith.constant dense<0.000000e+00> : vector<8x48xf32>
    %370 = tpu.matmul %367, %2, %cst_76 {dimension_numbers = #tpu.dot_dimension_numbers<[1], [0], [0], [1], [0, 0, 1, 1], [], []>} : vector<8x32xf32>, vector<32x48xf32>, vector<8x48xf32> -> vector<8x48xf32>
    %371 = arith.addf %369, %370 : vector<8x48xf32>
    %372 = vector.extract_strided_slice %371 {offsets = [0, 0], sizes = [8, 36], strides = [1, 1]} : vector<8x48xf32> to vector<8x36xf32>
    %373 = arith.negf %372 : vector<8x36xf32>
    %374 = math.exp %373 : vector<8x36xf32>
    %cst_77 = arith.constant 1.000000e+00 : f32
    %375 = vector.broadcast %cst_77 : f32 to vector<8x36xf32>
    %376 = arith.addf %375, %374 : vector<8x36xf32>
    %377 = arith.divf %375, %376 : vector<8x36xf32>
    %378 = vector.extract_strided_slice %371 {offsets = [0, 36], sizes = [8, 12], strides = [1, 1]} : vector<8x48xf32> to vector<8x12xf32>
    %379 = math.tanh %378 : vector<8x12xf32>
    %380 = vector.extract_strided_slice %377 {offsets = [0, 0], sizes = [8, 12], strides = [1, 1]} : vector<8x36xf32> to vector<8x12xf32>
    %381 = vector.extract_strided_slice %377 {offsets = [0, 12], sizes = [8, 12], strides = [1, 1]} : vector<8x36xf32> to vector<8x12xf32>
    %382 = vector.extract_strided_slice %377 {offsets = [0, 24], sizes = [8, 12], strides = [1, 1]} : vector<8x36xf32> to vector<8x12xf32>
    %383 = arith.mulf %381, %338 : vector<8x12xf32>
    %384 = arith.mulf %380, %379 : vector<8x12xf32>
    %385 = arith.addf %383, %384 : vector<8x12xf32>
    %386 = math.tanh %385 : vector<8x12xf32>
    %387 = arith.mulf %382, %386 : vector<8x12xf32>
    %388 = vector.shape_cast %387 : vector<8x12xf32> to vector<8x1x12xf32>
    %c0_78 = arith.constant 0 : index
    %389 = arith.index_cast %c7_i32 : i32 to index
    %c0_79 = arith.constant 0 : index
    %390 = vector.load %arg7[%c0_78, %389, %c0_79] : memref<8x8x12xf32, #tpu.memory_space<vmem>>, vector<8x1x12xf32>
    tpu.vector_store %arg7[%c0_78, %389, %c0_79], %388 {strides = array<i32>} : memref<8x8x12xf32, #tpu.memory_space<vmem>>, vector<8x1x12xf32>,
    %391 = tpu.concatenate %367, %387 in 1 : vector<8x32xf32>, vector<8x12xf32> -> vector<8x44xf32>
    %c8_i32_80 = arith.constant 8 : i32
    %392 = vector.extract_strided_slice %391 {offsets = [0, 32], sizes = [8, 12], strides = [1, 1]} : vector<8x44xf32> to vector<8x12xf32>
    %c0_81 = arith.constant 0 : index
    %c0_82 = arith.constant 0 : index
    %393 = vector.load %arg8[%c0_81, %c0_82] : memref<8x12xf32, #tpu.memory_space<vmem>>, vector<8x12xf32>
    tpu.vector_store %arg8[%c0_81, %c0_82], %392 {strides = array<i32>} : memref<8x12xf32, #tpu.memory_space<vmem>>, vector<8x12xf32>,
    %c0_83 = arith.constant 0 : index
    %c0_84 = arith.constant 0 : index
    %394 = vector.load %arg9[%c0_83, %c0_84] : memref<8x12xf32, #tpu.memory_space<vmem>>, vector<8x12xf32>
    tpu.vector_store %arg9[%c0_83, %c0_84], %385 {strides = array<i32>} : memref<8x12xf32, #tpu.memory_space<vmem>>, vector<8x12xf32>,
    return
  }
  func.func @transform_0(%arg0: i32) -> (i32, i32, i32) {
    %c0_i32 = arith.constant 0 : i32
    %c0_i32_0 = arith.constant 0 : i32
    %c0_i32_1 = arith.constant 0 : i32
    return %c0_i32, %arg0, %c0_i32_0 : i32, i32, i32
  }
  func.func @transform_1(%arg0: i32) -> (i32, i32) {
    %c0_i32 = arith.constant 0 : i32
    %c0_i32_0 = arith.constant 0 : i32
    %c0_i32_1 = arith.constant 0 : i32
    return %c0_i32, %c0_i32_0 : i32, i32
  }
  func.func @transform_2(%arg0: i32) -> (i32, i32) {
    %c0_i32 = arith.constant 0 : i32
    %c0_i32_0 = arith.constant 0 : i32
    %c0_i32_1 = arith.constant 0 : i32
    return %c0_i32, %c0_i32_0 : i32, i32
  }
  func.func @transform_3(%arg0: i32) -> (i32, i32) {
    %c0_i32 = arith.constant 0 : i32
    %c0_i32_0 = arith.constant 0 : i32
    %c0_i32_1 = arith.constant 0 : i32
    return %c0_i32, %c0_i32_0 : i32, i32
  }
  func.func @transform_4(%arg0: i32) -> (i32, i32) {
    %c0_i32 = arith.constant 0 : i32
    %c0_i32_0 = arith.constant 0 : i32
    %c0_i32_1 = arith.constant 0 : i32
    return %c0_i32, %c0_i32_0 : i32, i32
  }
  func.func @transform_5(%arg0: i32) -> (i32, i32) {
    %c0_i32 = arith.constant 0 : i32
    %c0_i32_0 = arith.constant 0 : i32
    %c0_i32_1 = arith.constant 0 : i32
    return %c0_i32, %c0_i32_0 : i32, i32
  }
  func.func @transform_6(%arg0: i32) -> (i32, i32, i32) {
    %c0_i32 = arith.constant 0 : i32
    %c0_i32_0 = arith.constant 0 : i32
    %c0_i32_1 = arith.constant 0 : i32
    return %arg0, %c0_i32, %c0_i32_0 : i32, i32, i32
  }
  func.func @transform_7(%arg0: i32) -> (i32, i32) {
    %c0_i32 = arith.constant 0 : i32
    %c0_i32_0 = arith.constant 0 : i32
    return %arg0, %c0_i32 : i32, i32
  }
  func.func @transform_8(%arg0: i32) -> (i32, i32) {
    %c0_i32 = arith.constant 0 : i32
    %c0_i32_0 = arith.constant 0 : i32
    return %arg0, %c0_i32 : i32, i32
  }
}

</mosaic_0001>

<llo_original>
// kernel: decoder_forward.1
$region0: #{decoder_forward.1}
  #allocation0 [shape = 'u32[]', space=smem, size = 0x4, offset = 0x4, fixed_abs, tag = 'smem constant byte address 0x4 - core index']
  #allocation1 [shape = 'u32[144,128]{1,0:T(1,128)}', space=vmem, size = 0x12000, scoped, tag = 'internal scratch']
  #allocation2 [shape = 'f32[64,128]{1,0:T(8,128)}', space=vmem, size = 0x8000, scoped, tag = 'scratch operand']
  %s0 = inlined_call_operand.vmem [shape: f32[8,8,16], index: 0, kind: input, shape index: {}]
  %s1 = inlined_call_operand.vmem [shape: f32[16,128], index: 1, kind: input, shape index: {}]
  %s2 = inlined_call_operand.vmem [shape: f32[44,176], index: 2, kind: input, shape index: {}]
  %s3 = inlined_call_operand.vmem [shape: f32[32,48], index: 3, kind: input, shape index: {}]
  %s4 = inlined_call_operand.vmem [shape: f32[1,128], index: 4, kind: input, shape index: {}]
  %s5 = inlined_call_operand.vmem [shape: f32[1,48], index: 5, kind: input, shape index: {}]
  %s6 = inlined_call_operand.vmem [shape: f32[8,8,12], index: 6, kind: output, shape index: {0}]
  %s7 = inlined_call_operand.vmem [shape: f32[8,12], index: 7, kind: output, shape index: {1}]
  %s8 = inlined_call_operand.vmem [shape: f32[8,12], index: 8, kind: output, shape index: {2}]
  %9 = xla_tuple %s6, %s7, %s8
  %s10 = sld [smem:[#allocation0]]
  $region50: #{decoder_forward.1} parent=0
    _
  %s12 = ssub.s32 1, %s10
  %s13 = scalar_select 0, %s12, %s10
  // Predicated region
  $region2: #{decoder_forward.1} parent=0 // pred_check
    _
  $region3: #{decoder_forward.1} parent=0 // pred_check_branch
    %15 = sbr.rel (0) target = $region5
  $region4: #{decoder_forward.1} parent=0 // pred_region
    _
  $region5: #{decoder_forward.1} parent=0 // pred_fallthru
    _
  // Predicated region
  $region6: #{decoder_forward.1} parent=0 // pred_check
    _
  $region7: #{decoder_forward.1} parent=0 // pred_check_branch
    %17 = sbr.rel (0) target = $region9
  $region8: #{decoder_forward.1} parent=0 // pred_region
    _
  $region9: #{decoder_forward.1} parent=0 // pred_fallthru
    _
  // Predicated region
  $region10: #{decoder_forward.1} parent=0 // pred_check
    _
  $region11: #{decoder_forward.1} parent=0 // pred_check_branch
    %19 = sbr.rel (0) target = $region13
  $region12: #{decoder_forward.1} parent=0 // pred_region
    _
  $region13: #{decoder_forward.1} parent=0 // pred_fallthru
    _
  // Predicated region
  $region14: #{decoder_forward.1} parent=0 // pred_check
    _
  $region15: #{decoder_forward.1} parent=0 // pred_check_branch
    %21 = sbr.rel (0) target = $region17
  $region16: #{decoder_forward.1} parent=0 // pred_region
    _
  $region17: #{decoder_forward.1} parent=0 // pred_fallthru
    _
  // Predicated region
  $region18: #{decoder_forward.1} parent=0 // pred_check
    _
  $region19: #{decoder_forward.1} parent=0 // pred_check_branch
    %23 = sbr.rel (0) target = $region21
  $region20: #{decoder_forward.1} parent=0 // pred_region
    _
  $region21: #{decoder_forward.1} parent=0 // pred_fallthru
    _
  // Predicated region
  $region22: #{decoder_forward.1} parent=0 // pred_check
    _
  $region23: #{decoder_forward.1} parent=0 // pred_check_branch
    %25 = sbr.rel (0) target = $region25
  $region24: #{decoder_forward.1} parent=0 // pred_region
    _
  $region25: #{decoder_forward.1} parent=0 // pred_fallthru
    _
  %v26 = vld [vmem:[%s1] sm:$0xff]
  %v27 = vld [vmem:[%s1 + $0x8] sm:$0xff]
  %v28 = vld [vmem:[%s2] sm:$0xff]
  %v29 = vld [vmem:[%s2 + $0x8] sm:$0xff]
  %v30 = vld [vmem:[%s2 + $0x10] sm:$0xff]
  %v31 = vld [vmem:[%s2 + $0x18] sm:$0xff]
  %v32 = vld [vmem:[%s2 + $0x20] sm:$0xff]
  %v33 = vld [vmem:[%s2 + $0x28] sm:$0xff]
  %v34 = vld [vmem:[%s2 + $0x30] sm:$0xff]
  %v35 = vld [vmem:[%s2 + $0x38] sm:$0xff]
  %v36 = vld [vmem:[%s2 + $0x40] sm:$0xff]
  %v37 = vld [vmem:[%s2 + $0x48] sm:$0xff]
  %v38 = vld [vmem:[%s2 + $0x50] sm:$0xf]
  %v39 = vld [vmem:[%s2 + $0x58] sm:$0xf]
  %v40 = vld [vmem:[%s3] sm:$0xff]
  %v41 = vld [vmem:[%s3 + $0x8] sm:$0xff]
  %v42 = vld [vmem:[%s3 + $0x10] sm:$0xff]
  %v43 = vld [vmem:[%s3 + $0x18] sm:$0xff]
  %v44 = vld [vmem:[%s4] sm:$0x1]
  %v45 = vld [vmem:[%s5] sm:$0x1]
  %v47 = vlaneseq
  %v48 = vshrl.u32 %v47, 7
  %v49 = vsub.s32 0, %v48
  %v50 = vrot.slane %v45, %v49
  %v52 = vld [vmem:[%s0] sm:$0xff]
  %v53 = vld [vmem:[%s0 + $0x8] sm:$0xff]
  %v54 = vld [vmem:[%s0 + $0x10] sm:$0xff]
  %v55 = vld [vmem:[%s0 + $0x18] sm:$0xff]
  %v56 = vld [vmem:[%s0 + $0x20] sm:$0xff]
  %v57 = vld [vmem:[%s0 + $0x28] sm:$0xff]
  %v58 = vld [vmem:[%s0 + $0x30] sm:$0xff]
  %v59 = vld [vmem:[%s0 + $0x38] sm:$0xff]
  %v61 = vlaneseq
  %v62 = vshrl.u32 %v61, 7
  %v63 = vsub.s32 0, %v62
  %v64 = vrot.slane %v44, %v63
  %vm66 = vcmask 130048
  %v68 = vsel %vm66, %v52, 0
  %v71 = vsel %vm66, %v53, 0
  %v74 = vsel %vm66, %v54, 0
  %v77 = vsel %vm66, %v55, 0
  %v80 = vsel %vm66, %v56, 0
  %v83 = vsel %vm66, %v57, 0
  %v86 = vsel %vm66, %v58, 0
  %v89 = vsel %vm66, %v59, 0
  %91 = vmatprep.subr.mxu0 0.0
  %92 = vmatpush1.msra.mxu0 %v26
  %93 = vmatprep.subr.mxu0 0.0
  %94 = vmatpush1.msra.mxu0 %v27
  %95 = vmatprep.subr.mxu0 0.0
  %96 = vmatpush1.msra.mxu0 0.0
  %97 = vmatprep.subr.mxu0 0.0
  %98 = vmatpush1.msra.mxu0 0.0
  %99 = vmatprep.subr.mxu0 0.0
  %100 = vmatpush1.msra.mxu0 0.0
  %101 = vmatprep.subr.mxu0 0.0
  %102 = vmatpush1.msra.mxu0 0.0
  %103 = vmatprep.subr.mxu0 0.0
  %104 = vmatpush1.msra.mxu0 0.0
  %105 = vmatprep.subr.mxu0 0.0
  %106 = vmatpush1.msra.mxu0 0.0
  %107 = vmatprep.subr.mxu0 0.0
  %108 = vmatpush1.msra.mxu0 0.0
  %109 = vmatprep.subr.mxu0 0.0
  %110 = vmatpush1.msra.mxu0 0.0
  %111 = vmatprep.subr.mxu0 0.0
  %112 = vmatpush1.msra.mxu0 0.0
  %113 = vmatprep.subr.mxu0 0.0
  %114 = vmatpush1.msra.mxu0 0.0
  %115 = vmatprep.subr.mxu0 0.0
  %116 = vmatpush1.msra.mxu0 0.0
  %117 = vmatprep.subr.mxu0 0.0
  %118 = vmatpush1.msra.mxu0 0.0
  %119 = vmatprep.subr.mxu0 0.0
  %120 = vmatpush1.msra.mxu0 0.0
  %121 = vmatprep.subr.mxu0 0.0
  %122 = vmatpush1.msra.mxu0 0.0
  %123 = vmatprep.subr.mxu0 0.0
  %124 = vmatpush1.msra.mxu0 0.0
  %125 = vmatprep.subr.mxu0 0.0
  %126 = vmatpush1.msra.mxu0 0.0
  %127 = vmatprep.subr.mxu0 0.0
  %128 = vmatpush1.msra.mxu0 0.0
  %129 = vmatprep.subr.mxu0 0.0
  %130 = vmatpush1.msra.mxu0 0.0
  %131 = vmatprep.subr.mxu0 0.0
  %132 = vmatpush1.msra.mxu0 0.0
  %133 = vmatprep.subr.mxu0 0.0
  %134 = vmatpush1.msra.mxu0 0.0
  %135 = vmatprep.subr.mxu0 0.0
  %136 = vmatpush1.msra.mxu0 0.0
  %137 = vmatprep.subr.mxu0 0.0
  %138 = vmatpush1.msra.mxu0 0.0
  %139 = vmatprep.subr.mxu0 0.0
  %140 = vmatpush1.msra.mxu0 0.0
  %141 = vmatprep.subr.mxu0 0.0
  %142 = vmatpush1.msra.mxu0 0.0
  %143 = vmatprep.subr.mxu0 0.0
  %144 = vmatpush1.msra.mxu0 0.0
  %145 = vmatprep.subr.mxu0 0.0
  %146 = vmatpush1.msra.mxu0 0.0
  %147 = vmatprep.subr.mxu0 0.0
  %148 = vmatpush1.msra.mxu0 0.0
  %149 = vmatprep.subr.mxu0 0.0
  %150 = vmatpush1.msra.mxu0 0.0
  %151 = vmatprep.subr.mxu0 0.0
  %152 = vmatpush1.msra.mxu0 0.0
  %153 = vmatprep.subr.mxu0 0.0
  %154 = vmatpush1.msra.mxu0 0.0
  %155 = vmatprep.mubr.f32.mxu0 0.0
  %156 = vmatmul.mubr.f32.gmra.mrb[0].mxu0 %v68
  %v157 = vpop.f32.mrb[0].mxu0
  %v158 = vadd.f32 %v64, %v157
  %v159 = vpop.f32.mrb[0].mxu0
  %160 = vmatprep.mubr.f32.mxu0 0.0
  %161 = vmatmul.mubr.f32.gmra.mrb[0].mxu0 %v71
  %v162 = vpop.f32.mrb[0].mxu0
  %v163 = vadd.f32 %v64, %v162
  %v164 = vpop.f32.mrb[0].mxu0
  %165 = vmatprep.mubr.f32.mxu0 0.0
  %166 = vmatmul.mubr.f32.gmra.mrb[0].mxu0 %v74
  %v167 = vpop.f32.mrb[0].mxu0
  %v168 = vadd.f32 %v64, %v167
  %v169 = vpop.f32.mrb[0].mxu0
  %170 = vmatprep.mubr.f32.mxu0 0.0
  %171 = vmatmul.mubr.f32.gmra.mrb[0].mxu0 %v77
  %v172 = vpop.f32.mrb[0].mxu0
  %v173 = vadd.f32 %v64, %v172
  %v174 = vpop.f32.mrb[0].mxu0
  %175 = vmatprep.mubr.f32.mxu0 0.0
  %176 = vmatmul.mubr.f32.gmra.mrb[0].mxu0 %v80
  %v177 = vpop.f32.mrb[0].mxu0
  %v178 = vadd.f32 %v64, %v177
  %v179 = vpop.f32.mrb[0].mxu0
  %180 = vmatprep.mubr.f32.mxu0 0.0
  %181 = vmatmul.mubr.f32.gmra.mrb[0].mxu0 %v83
  %v182 = vpop.f32.mrb[0].mxu0
  %v183 = vadd.f32 %v64, %v182
  %v184 = vpop.f32.mrb[0].mxu0
  %185 = vmatprep.mubr.f32.mxu0 0.0
  %186 = vmatmul.mubr.f32.gmra.mrb[0].mxu0 %v86
  %v187 = vpop.f32.mrb[0].mxu0
  %v188 = vadd.f32 %v64, %v187
  %v189 = vpop.f32.mrb[0].mxu0
  %190 = vmatprep.mubr.f32.mxu0 0.0
  %191 = vmatmul.mubr.f32.gmra.mrb[0].mxu0 %v89
  %v192 = vpop.f32.mrb[0].mxu0
  %v193 = vadd.f32 %v64, %v192
  %v194 = vpop.f32.mrb[0].mxu0
  %195 = vdwg.mxu0
  %196 = vst [vmem:[#allocation2] sm:$0xff] %v158
  %197 = vst [vmem:[#allocation2 + $0x8] sm:$0xff] %v163
  %198 = vst [vmem:[#allocation2 + $0x10] sm:$0xff] %v168
  %199 = vst [vmem:[#allocation2 + $0x18] sm:$0xff] %v173
  %200 = vst [vmem:[#allocation2 + $0x20] sm:$0xff] %v178
  %201 = vst [vmem:[#allocation2 + $0x28] sm:$0xff] %v183
  %202 = vst [vmem:[#allocation2 + $0x30] sm:$0xff] %v188
  %203 = vst [vmem:[#allocation2 + $0x38] sm:$0xff] %v193
  %vm204 = vcmask 359424
  %v206 = vsel %vm204, 0.0, 0
  %vm208 = vcmask 1043456
  %v210 = vsel %vm208, %v38, 0
  %v213 = vsel %vm208, %v39, 0
  %215 = vmatprep.subr.mxu0 %v29
  %216 = vmatpush1.msra.mxu0 %v28
  %217 = vmatprep.subr.mxu0 %v31
  %218 = vmatpush1.msra.mxu0 %v30
  %219 = vmatprep.subr.mxu0 %v33
  %220 = vmatpush1.msra.mxu0 %v32
  %221 = vmatprep.subr.mxu0 %v35
  %222 = vmatpush1.msra.mxu0 %v34
  %223 = vmatprep.subr.mxu0 %v37
  %224 = vmatpush1.msra.mxu0 %v36
  %225 = vmatprep.subr.mxu0 %v213
  %226 = vmatpush1.msra.mxu0 %v210
  %227 = vmatprep.subr.mxu0 0.0
  %228 = vmatpush1.msra.mxu0 0.0
  %229 = vmatprep.subr.mxu0 0.0
  %230 = vmatpush1.msra.mxu0 0.0
  %231 = vmatprep.subr.mxu0 0.0
  %232 = vmatpush1.msra.mxu0 0.0
  %233 = vmatprep.subr.mxu0 0.0
  %234 = vmatpush1.msra.mxu0 0.0
  %235 = vmatprep.subr.mxu0 0.0
  %236 = vmatpush1.msra.mxu0 0.0
  %237 = vmatprep.subr.mxu0 0.0
  %238 = vmatpush1.msra.mxu0 0.0
  %239 = vmatprep.subr.mxu0 0.0
  %240 = vmatpush1.msra.mxu0 0.0
  %241 = vmatprep.subr.mxu0 0.0
  %242 = vmatpush1.msra.mxu0 0.0
  %243 = vmatprep.subr.mxu0 0.0
  %244 = vmatpush1.msra.mxu0 0.0
  %245 = vmatprep.subr.mxu0 0.0
  %246 = vmatpush1.msra.mxu0 0.0
  %247 = vmatprep.subr.mxu0 0.0
  %248 = vmatpush1.msra.mxu0 0.0
  %249 = vmatprep.subr.mxu0 0.0
  %250 = vmatpush1.msra.mxu0 0.0
  %251 = vmatprep.subr.mxu0 0.0
  %252 = vmatpush1.msra.mxu0 0.0
  %253 = vmatprep.subr.mxu0 0.0
  %254 = vmatpush1.msra.mxu0 0.0
  %255 = vmatprep.subr.mxu0 0.0
  %256 = vmatpush1.msra.mxu0 0.0
  %257 = vmatprep.subr.mxu0 0.0
  %258 = vmatpush1.msra.mxu0 0.0
  %259 = vmatprep.subr.mxu0 0.0
  %260 = vmatpush1.msra.mxu0 0.0
  %261 = vmatprep.subr.mxu0 0.0
  %262 = vmatpush1.msra.mxu0 0.0
  %263 = vmatprep.subr.mxu0 0.0
  %264 = vmatpush1.msra.mxu0 0.0
  %265 = vmatprep.subr.mxu0 0.0
  %266 = vmatpush1.msra.mxu0 0.0
  %267 = vmatprep.subr.mxu0 0.0
  %268 = vmatpush1.msra.mxu0 0.0
  %269 = vmatprep.subr.mxu0 0.0
  %270 = vmatpush1.msra.mxu0 0.0
  %271 = vmatprep.subr.mxu0 0.0
  %272 = vmatpush1.msra.mxu0 0.0
  %273 = vmatprep.subr.mxu0 0.0
  %274 = vmatpush1.msra.mxu0 0.0
  %275 = vmatprep.subr.mxu0 0.0
  %276 = vmatpush1.msra.mxu0 0.0
  %277 = vmatprep.subr.mxu0 0.0
  %278 = vmatpush1.msra.mxu0 0.0
  %279 = vmatprep.mubr.f32.mxu0 0.0
  %280 = vmatmul.mubr.f32.gmra.mrb[0].mxu0 %v206
  %v281 = vpop.f32.mrb[0].mxu0
  %v282 = vadd.f32 0.0, %v281
  %v283 = vpop.f32.mrb[0].mxu0
  %v284 = vadd.f32 0.0, %v283
  %285 = vdwg.mxu0
  %v286 = vld [vmem:[#allocation2] sm:$0xff]
  %v287 = vadd.f32 %v286, %v282
  %v288 = vxor.u32 %v287, 2147483648
  %v289 = vmul.f32 %v288, 1.442695
  %v290 = vpow.pop %v289
  %v291 = vadd.f32 %v290, 1.0
  %v292 = vrcp.pop %v291
  %v293 = vmul.f32 1.0, %v292
  %v294 = vtanh.pop %v287
  %v295 = vmul.f32 %v293, 0.0
  %297 = vrot.lane.b32.xlu0 %v294, 32
  %v298 = vpop.permute.xlu0 %297
  %v300 = vmul.f32 %v293, %v298
  %302 = vrot.lane.b32.xlu0 %v300, 32
  %v303 = vpop.permute.xlu0 %302
  %v305 = vadd.f32 %v295, %v303
  %v306 = vtanh.pop %v305
  %308 = vrot.lane.b32.xlu0 %v306, 32
  %v309 = vpop.permute.xlu0 %308
  %v311 = vmul.f32 %v293, %v309
  %v312 = vadd.f32 %v284, %v50
  %314 = vrot.lane.b32.xlu0 %v311, 64
  %v315 = vpop.permute.xlu0 %314
  %vm316 = vcmask 261120
  %v317 = vsel %vm316, %v315, 0
  %319 = vmatprep.subr.mxu0 0.0
  %320 = vmatpush1.msra.mxu0 %v40
  %321 = vmatprep.subr.mxu0 0.0
  %322 = vmatpush1.msra.mxu0 %v41
  %323 = vmatprep.subr.mxu0 0.0
  %324 = vmatpush1.msra.mxu0 %v42
  %325 = vmatprep.subr.mxu0 0.0
  %326 = vmatpush1.msra.mxu0 %v43
  %327 = vmatprep.subr.mxu0 0.0
  %328 = vmatpush1.msra.mxu0 0.0
  %329 = vmatprep.subr.mxu0 0.0
  %330 = vmatpush1.msra.mxu0 0.0
  %331 = vmatprep.subr.mxu0 0.0
  %332 = vmatpush1.msra.mxu0 0.0
  %333 = vmatprep.subr.mxu0 0.0
  %334 = vmatpush1.msra.mxu0 0.0
  %335 = vmatprep.subr.mxu0 0.0
  %336 = vmatpush1.msra.mxu0 0.0
  %337 = vmatprep.subr.mxu0 0.0
  %338 = vmatpush1.msra.mxu0 0.0
  %339 = vmatprep.subr.mxu0 0.0
  %340 = vmatpush1.msra.mxu0 0.0
  %341 = vmatprep.subr.mxu0 0.0
  %342 = vmatpush1.msra.mxu0 0.0
  %343 = vmatprep.subr.mxu0 0.0
  %344 = vmatpush1.msra.mxu0 0.0
  %345 = vmatprep.subr.mxu0 0.0
  %346 = vmatpush1.msra.mxu0 0.0
  %347 = vmatprep.subr.mxu0 0.0
  %348 = vmatpush1.msra.mxu0 0.0
  %349 = vmatprep.subr.mxu0 0.0
  %350 = vmatpush1.msra.mxu0 0.0
  %351 = vmatprep.subr.mxu0 0.0
  %352 = vmatpush1.msra.mxu0 0.0
  %353 = vmatprep.subr.mxu0 0.0
  %354 = vmatpush1.msra.mxu0 0.0
  %355 = vmatprep.subr.mxu0 0.0
  %356 = vmatpush1.msra.mxu0 0.0
  %357 = vmatprep.subr.mxu0 0.0
  %358 = vmatpush1.msra.mxu0 0.0
  %359 = vmatprep.subr.mxu0 0.0
  %360 = vmatpush1.msra.mxu0 0.0
  %361 = vmatprep.subr.mxu0 0.0
  %362 = vmatpush1.msra.mxu0 0.0
  %363 = vmatprep.subr.mxu0 0.0
  %364 = vmatpush1.msra.mxu0 0.0
  %365 = vmatprep.subr.mxu0 0.0
  %366 = vmatpush1.msra.mxu0 0.0
  %367 = vmatprep.subr.mxu0 0.0
  %368 = vmatpush1.msra.mxu0 0.0
  %369 = vmatprep.subr.mxu0 0.0
  %370 = vmatpush1.msra.mxu0 0.0
  %371 = vmatprep.subr.mxu0 0.0
  %372 = vmatpush1.msra.mxu0 0.0
  %373 = vmatprep.subr.mxu0 0.0
  %374 = vmatpush1.msra.mxu0 0.0
  %375 = vmatprep.subr.mxu0 0.0
  %376 = vmatpush1.msra.mxu0 0.0
  %377 = vmatprep.subr.mxu0 0.0
  %378 = vmatpush1.msra.mxu0 0.0
  %379 = vmatprep.subr.mxu0 0.0
  %380 = vmatpush1.msra.mxu0 0.0
  %381 = vmatprep.subr.mxu0 0.0
  %382 = vmatpush1.msra.mxu0 0.0
  %383 = vmatprep.mubr.f32.mxu0 0.0
  %384 = vmatmul.mubr.f32.gmra.mrb[0].mxu0 %v317
  %v385 = vpop.f32.mrb[0].mxu0
  %v386 = vadd.f32 0.0, %v385
  %v387 = vpop.f32.mrb[0].mxu0
  %388 = vdwg.mxu0
  %v389 = vadd.f32 %v312, %v386
  %v390 = vxor.u32 %v389, 2147483648
  %v391 = vmul.f32 %v390, 1.442695
  %v392 = vpow.pop %v391
  %v393 = vadd.f32 %v392, 1.0
  %v394 = vrcp.pop %v393
  %v395 = vmul.f32 1.0, %v394
  %v396 = vtanh.pop %v389
  %v397 = vmul.f32 %v395, 0.0
  %399 = vrot.lane.b32.xlu0 %v396, 92
  %v400 = vpop.permute.xlu0 %399
  %v402 = vmul.f32 %v395, %v400
  %404 = vrot.lane.b32.xlu0 %v402, 12
  %v405 = vpop.permute.xlu0 %404
  %v407 = vadd.f32 %v397, %v405
  %v408 = vtanh.pop %v407
  %410 = vrot.lane.b32.xlu0 %v408, 12
  %v411 = vpop.permute.xlu0 %410
  %v413 = vmul.f32 %v395, %v411
  %v415 = vcombine.high %v413, %v413
  %v417 = vunpack.c.l.s4 1966171168
  %v418 = vunpack.c.0.s8 %v417
  %v419 = vlaneseq
  %v420 = vshrl.u32 %v419, 7
  %v421 = vsub.s32 %v418, %v420
  %v422 = vrot.slane %v413, %v421
  %v424 = vunpack.c.l.s4 1966171168
  %v425 = vunpack.c.0.s8 %v424
  %v426 = vlaneseq
  %v427 = vshrl.u32 %v426, 7
  %v428 = vsub.s32 %v425, %v427
  %v429 = vrot.slane %v415, %v428
  %v430 = vcombine.high %v422, %v422
  %v431 = vcombine.high %v429, %v429
  %v433 = vunpack.c.l.s4 1966171168
  %v434 = vunpack.c.0.s8 %v433
  %v435 = vlaneseq
  %v436 = vshrl.u32 %v435, 7
  %v437 = vsub.s32 %v434, %v436
  %v438 = vrot.slane %v422, %v437
  %v440 = vunpack.c.l.s4 1966171168
  %v441 = vunpack.c.0.s8 %v440
  %v442 = vlaneseq
  %v443 = vshrl.u32 %v442, 7
  %v444 = vsub.s32 %v441, %v443
  %v445 = vrot.slane %v429, %v444
  %v447 = vunpack.c.l.s4 1966171168
  %v448 = vunpack.c.0.s8 %v447
  %v449 = vlaneseq
  %v450 = vshrl.u32 %v449, 7
  %v451 = vsub.s32 %v448, %v450
  %v452 = vrot.slane %v430, %v451
  %v454 = vunpack.c.l.s4 1966171168
  %v455 = vunpack.c.0.s8 %v454
  %v456 = vlaneseq
  %v457 = vshrl.u32 %v456, 7
  %v458 = vsub.s32 %v455, %v457
  %v459 = vrot.slane %v431, %v458
  %v460 = vcombine.high %v438, %v438
  %v461 = vcombine.high %v445, %v445
  %v462 = vcombine.high %v452, %v452
  %v463 = vcombine.high %v459, %v459
  %v464 = vlaneseq
  %v465 = vshrl.u32 %v464, 7
  %v466 = vsub.s32 0, %v465
  %v467 = vrot.slane %v438, %v466
  %v468 = vlaneseq
  %v469 = vshrl.u32 %v468, 7
  %v470 = vsub.s32 0, %v469
  %v471 = vrot.slane %v452, %v470
  %v472 = vlaneseq
  %v473 = vshrl.u32 %v472, 7
  %v474 = vsub.s32 0, %v473
  %v475 = vrot.slane %v460, %v474
  %v476 = vlaneseq
  %v477 = vshrl.u32 %v476, 7
  %v478 = vsub.s32 0, %v477
  %v479 = vrot.slane %v462, %v478
  %v480 = vlaneseq
  %v481 = vshrl.u32 %v480, 7
  %v482 = vsub.s32 0, %v481
  %v483 = vrot.slane %v445, %v482
  %v484 = vlaneseq
  %v485 = vshrl.u32 %v484, 7
  %v486 = vsub.s32 0, %v485
  %v487 = vrot.slane %v459, %v486
  %v488 = vlaneseq
  %v489 = vshrl.u32 %v488, 7
  %v490 = vsub.s32 0, %v489
  %v491 = vrot.slane %v461, %v490
  %v492 = vlaneseq
  %v493 = vshrl.u32 %v492, 7
  %v494 = vsub.s32 0, %v493
  %v495 = vrot.slane %v463, %v494
  %496 = vrot.lane.b32.xlu0 %v467, 104
  %v497 = vpop.permute.xlu0 %496
  %498 = vrot.lane.b32.xlu0 %v471, 104
  %v499 = vpop.permute.xlu0 %498
  %500 = vrot.lane.b32.xlu0 %v475, 104
  %v501 = vpop.permute.xlu0 %500
  %502 = vrot.lane.b32.xlu0 %v479, 104
  %v503 = vpop.permute.xlu0 %502
  %504 = vrot.lane.b32.xlu0 %v483, 104
  %v505 = vpop.permute.xlu0 %504
  %506 = vrot.lane.b32.xlu0 %v487, 104
  %v507 = vpop.permute.xlu0 %506
  %508 = vrot.lane.b32.xlu0 %v491, 104
  %v509 = vpop.permute.xlu0 %508
  %510 = vrot.lane.b32.xlu0 %v495, 104
  %v511 = vpop.permute.xlu0 %510
  %vm520 = vcmask 90112
  %521 = vst.msk [vmem:[%s6] sm:$0x1] %vm520, %v497
  %522 = vst.msk [vmem:[%s6 + $0x8] sm:$0x1] %vm520, %v499
  %523 = vst.msk [vmem:[%s6 + $0x10] sm:$0x1] %vm520, %v501
  %524 = vst.msk [vmem:[%s6 + $0x18] sm:$0x1] %vm520, %v503
  %525 = vst.msk [vmem:[%s6 + $0x20] sm:$0x1] %vm520, %v505
  %526 = vst.msk [vmem:[%s6 + $0x28] sm:$0x1] %vm520, %v507
  %527 = vst.msk [vmem:[%s6 + $0x30] sm:$0x1] %vm520, %v509
  %528 = vst.msk [vmem:[%s6 + $0x38] sm:$0x1] %vm520, %v511
  %530 = vrot.lane.b32.xlu0 %v413, 8
  %v531 = vpop.permute.xlu0 %530
  %v533 = vsel %vm316, %v315, %v531
  %v535 = vsel %vm204, %v533, 0
  %537 = vmatprep.subr.mxu0 %v29
  %538 = vmatpush1.msra.mxu0 %v28
  %539 = vmatprep.subr.mxu0 %v31
  %540 = vmatpush1.msra.mxu0 %v30
  %541 = vmatprep.subr.mxu0 %v33
  %542 = vmatpush1.msra.mxu0 %v32
  %543 = vmatprep.subr.mxu0 %v35
  %544 = vmatpush1.msra.mxu0 %v34
  %545 = vmatprep.subr.mxu0 %v37
  %546 = vmatpush1.msra.mxu0 %v36
  %547 = vmatprep.subr.mxu0 %v213
  %548 = vmatpush1.msra.mxu0 %v210
  %549 = vmatprep.subr.mxu0 0.0
  %550 = vmatpush1.msra.mxu0 0.0
  %551 = vmatprep.subr.mxu0 0.0
  %552 = vmatpush1.msra.mxu0 0.0
  %553 = vmatprep.subr.mxu0 0.0
  %554 = vmatpush1.msra.mxu0 0.0
  %555 = vmatprep.subr.mxu0 0.0
  %556 = vmatpush1.msra.mxu0 0.0
  %557 = vmatprep.subr.mxu0 0.0
  %558 = vmatpush1.msra.mxu0 0.0
  %559 = vmatprep.subr.mxu0 0.0
  %560 = vmatpush1.msra.mxu0 0.0
  %561 = vmatprep.subr.mxu0 0.0
  %562 = vmatpush1.msra.mxu0 0.0
  %563 = vmatprep.subr.mxu0 0.0
  %564 = vmatpush1.msra.mxu0 0.0
  %565 = vmatprep.subr.mxu0 0.0
  %566 = vmatpush1.msra.mxu0 0.0
  %567 = vmatprep.subr.mxu0 0.0
  %568 = vmatpush1.msra.mxu0 0.0
  %569 = vmatprep.subr.mxu0 0.0
  %570 = vmatpush1.msra.mxu0 0.0
  %571 = vmatprep.subr.mxu0 0.0
  %572 = vmatpush1.msra.mxu0 0.0
  %573 = vmatprep.subr.mxu0 0.0
  %574 = vmatpush1.msra.mxu0 0.0
  %575 = vmatprep.subr.mxu0 0.0
  %576 = vmatpush1.msra.mxu0 0.0
  %577 = vmatprep.subr.mxu0 0.0
  %578 = vmatpush1.msra.mxu0 0.0
  %579 = vmatprep.subr.mxu0 0.0
  %580 = vmatpush1.msra.mxu0 0.0
  %581 = vmatprep.subr.mxu0 0.0
  %582 = vmatpush1.msra.mxu0 0.0
  %583 = vmatprep.subr.mxu0 0.0
  %584 = vmatpush1.msra.mxu0 0.0
  %585 = vmatprep.subr.mxu0 0.0
  %586 = vmatpush1.msra.mxu0 0.0
  %587 = vmatprep.subr.mxu0 0.0
  %588 = vmatpush1.msra.mxu0 0.0
  %589 = vmatprep.subr.mxu0 0.0
  %590 = vmatpush1.msra.mxu0 0.0
  %591 = vmatprep.subr.mxu0 0.0
  %592 = vmatpush1.msra.mxu0 0.0
  %593 = vmatprep.subr.mxu0 0.0
  %594 = vmatpush1.msra.mxu0 0.0
  %595 = vmatprep.subr.mxu0 0.0
  %596 = vmatpush1.msra.mxu0 0.0
  %597 = vmatprep.subr.mxu0 0.0
  %598 = vmatpush1.msra.mxu0 0.0
  %599 = vmatprep.subr.mxu0 0.0
  %600 = vmatpush1.msra.mxu0 0.0
  %601 = vmatprep.mubr.f32.mxu0 0.0
  %602 = vmatmul.mubr.f32.gmra.mrb[0].mxu0 %v535
  %v603 = vpop.f32.mrb[0].mxu0
  %v604 = vadd.f32 0.0, %v603
  %v605 = vpop.f32.mrb[0].mxu0
  %v606 = vadd.f32 0.0, %v605
  %607 = vdwg.mxu0
  %s608 = scalar_lea.vmem [#allocation2], 8
  %v609 = vld [vmem:[%s608] sm:$0xff]
  %v610 = vadd.f32 %v609, %v604
  %v611 = vxor.u32 %v610, 2147483648
  %v612 = vmul.f32 %v611, 1.442695
  %v613 = vpow.pop %v612
  %v614 = vadd.f32 %v613, 1.0
  %v615 = vrcp.pop %v614
  %v616 = vmul.f32 1.0, %v615
  %v617 = vtanh.pop %v610
  %v618 = vmul.f32 %v616, %v305
  %620 = vrot.lane.b32.xlu0 %v617, 32
  %v621 = vpop.permute.xlu0 %620
  %v623 = vmul.f32 %v616, %v621
  %625 = vrot.lane.b32.xlu0 %v623, 32
  %v626 = vpop.permute.xlu0 %625
  %v628 = vadd.f32 %v618, %v626
  %v629 = vtanh.pop %v628
  %631 = vrot.lane.b32.xlu0 %v629, 32
  %v632 = vpop.permute.xlu0 %631
  %v634 = vmul.f32 %v616, %v632
  %v635 = vadd.f32 %v606, %v50
  %637 = vrot.lane.b32.xlu0 %v634, 64
  %v638 = vpop.permute.xlu0 %637
  %v639 = vsel %vm316, %v638, 0
  %641 = vmatprep.subr.mxu0 0.0
  %642 = vmatpush1.msra.mxu0 %v40
  %643 = vmatprep.subr.mxu0 0.0
  %644 = vmatpush1.msra.mxu0 %v41
  %645 = vmatprep.subr.mxu0 0.0
  %646 = vmatpush1.msra.mxu0 %v42
  %647 = vmatprep.subr.mxu0 0.0
  %648 = vmatpush1.msra.mxu0 %v43
  %649 = vmatprep.subr.mxu0 0.0
  %650 = vmatpush1.msra.mxu0 0.0
  %651 = vmatprep.subr.mxu0 0.0
  %652 = vmatpush1.msra.mxu0 0.0
  %653 = vmatprep.subr.mxu0 0.0
  %654 = vmatpush1.msra.mxu0 0.0
  %655 = vmatprep.subr.mxu0 0.0
  %656 = vmatpush1.msra.mxu0 0.0
  %657 = vmatprep.subr.mxu0 0.0
  %658 = vmatpush1.msra.mxu0 0.0
  %659 = vmatprep.subr.mxu0 0.0
  %660 = vmatpush1.msra.mxu0 0.0
  %661 = vmatprep.subr.mxu0 0.0
  %662 = vmatpush1.msra.mxu0 0.0
  %663 = vmatprep.subr.mxu0 0.0
  %664 = vmatpush1.msra.mxu0 0.0
  %665 = vmatprep.subr.mxu0 0.0
  %666 = vmatpush1.msra.mxu0 0.0
  %667 = vmatprep.subr.mxu0 0.0
  %668 = vmatpush1.msra.mxu0 0.0
  %669 = vmatprep.subr.mxu0 0.0
  %670 = vmatpush1.msra.mxu0 0.0
  %671 = vmatprep.subr.mxu0 0.0
  %672 = vmatpush1.msra.mxu0 0.0
  %673 = vmatprep.subr.mxu0 0.0
  %674 = vmatpush1.msra.mxu0 0.0
  %675 = vmatprep.subr.mxu0 0.0
  %676 = vmatpush1.msra.mxu0 0.0
  %677 = vmatprep.subr.mxu0 0.0
  %678 = vmatpush1.msra.mxu0 0.0
  %679 = vmatprep.subr.mxu0 0.0
  %680 = vmatpush1.msra.mxu0 0.0
  %681 = vmatprep.subr.mxu0 0.0
  %682 = vmatpush1.msra.mxu0 0.0
  %683 = vmatprep.subr.mxu0 0.0
  %684 = vmatpush1.msra.mxu0 0.0
  %685 = vmatprep.subr.mxu0 0.0
  %686 = vmatpush1.msra.mxu0 0.0
  %687 = vmatprep.subr.mxu0 0.0
  %688 = vmatpush1.msra.mxu0 0.0
  %689 = vmatprep.subr.mxu0 0.0
  %690 = vmatpush1.msra.mxu0 0.0
  %691 = vmatprep.subr.mxu0 0.0
  %692 = vmatpush1.msra.mxu0 0.0
  %693 = vmatprep.subr.mxu0 0.0
  %694 = vmatpush1.msra.mxu0 0.0
  %695 = vmatprep.subr.mxu0 0.0
  %696 = vmatpush1.msra.mxu0 0.0
  %697 = vmatprep.subr.mxu0 0.0
  %698 = vmatpush1.msra.mxu0 0.0
  %699 = vmatprep.subr.mxu0 0.0
  %700 = vmatpush1.msra.mxu0 0.0
  %701 = vmatprep.subr.mxu0 0.0
  %702 = vmatpush1.msra.mxu0 0.0
  %703 = vmatprep.subr.mxu0 0.0
  %704 = vmatpush1.msra.mxu0 0.0
  %705 = vmatprep.mubr.f32.mxu0 0.0
  %706 = vmatmul.mubr.f32.gmra.mrb[0].mxu0 %v639
  %v707 = vpop.f32.mrb[0].mxu0
  %v708 = vadd.f32 0.0, %v707
  %v709 = vpop.f32.mrb[0].mxu0
  %710 = vdwg.mxu0
  %v711 = vadd.f32 %v635, %v708
  %v712 = vxor.u32 %v711, 2147483648
  %v713 = vmul.f32 %v712, 1.442695
  %v714 = vpow.pop %v713
  %v715 = vadd.f32 %v714, 1.0
  %v716 = vrcp.pop %v715
  %v717 = vmul.f32 1.0, %v716
  %v718 = vtanh.pop %v711
  %v719 = vmul.f32 %v717, %v407
  %721 = vrot.lane.b32.xlu0 %v718, 92
  %v722 = vpop.permute.xlu0 %721
  %v724 = vmul.f32 %v717, %v722
  %726 = vrot.lane.b32.xlu0 %v724, 12
  %v727 = vpop.permute.xlu0 %726
  %v729 = vadd.f32 %v719, %v727
  %v730 = vtanh.pop %v729
  %732 = vrot.lane.b32.xlu0 %v730, 12
  %v733 = vpop.permute.xlu0 %732
  %v735 = vmul.f32 %v717, %v733
  %v737 = vcombine.high %v735, %v735
  %v739 = vunpack.c.l.s4 1966171168
  %v740 = vunpack.c.0.s8 %v739
  %v741 = vlaneseq
  %v742 = vshrl.u32 %v741, 7
  %v743 = vsub.s32 %v740, %v742
  %v744 = vrot.slane %v735, %v743
  %v746 = vunpack.c.l.s4 1966171168
  %v747 = vunpack.c.0.s8 %v746
  %v748 = vlaneseq
  %v749 = vshrl.u32 %v748, 7
  %v750 = vsub.s32 %v747, %v749
  %v751 = vrot.slane %v737, %v750
  %v752 = vcombine.high %v744, %v744
  %v753 = vcombine.high %v751, %v751
  %v755 = vunpack.c.l.s4 1966171168
  %v756 = vunpack.c.0.s8 %v755
  %v757 = vlaneseq
  %v758 = vshrl.u32 %v757, 7
  %v759 = vsub.s32 %v756, %v758
  %v760 = vrot.slane %v744, %v759
  %v762 = vunpack.c.l.s4 1966171168
  %v763 = vunpack.c.0.s8 %v762
  %v764 = vlaneseq
  %v765 = vshrl.u32 %v764, 7
  %v766 = vsub.s32 %v763, %v765
  %v767 = vrot.slane %v751, %v766
  %v769 = vunpack.c.l.s4 1966171168
  %v770 = vunpack.c.0.s8 %v769
  %v771 = vlaneseq
  %v772 = vshrl.u32 %v771, 7
  %v773 = vsub.s32 %v770, %v772
  %v774 = vrot.slane %v752, %v773
  %v776 = vunpack.c.l.s4 1966171168
  %v777 = vunpack.c.0.s8 %v776
  %v778 = vlaneseq
  %v779 = vshrl.u32 %v778, 7
  %v780 = vsub.s32 %v777, %v779
  %v781 = vrot.slane %v753, %v780
  %v782 = vcombine.high %v760, %v760
  %v783 = vcombine.high %v767, %v767
  %v784 = vcombine.high %v774, %v774
  %v785 = vcombine.high %v781, %v781
  %v786 = vlaneseq
  %v787 = vshrl.u32 %v786, 7
  %v788 = vsub.s32 0, %v787
  %v789 = vrot.slane %v760, %v788
  %v790 = vlaneseq
  %v791 = vshrl.u32 %v790, 7
  %v792 = vsub.s32 0, %v791
  %v793 = vrot.slane %v774, %v792
  %v794 = vlaneseq
  %v795 = vshrl.u32 %v794, 7
  %v796 = vsub.s32 0, %v795
  %v797 = vrot.slane %v782, %v796
  %v798 = vlaneseq
  %v799 = vshrl.u32 %v798, 7
  %v800 = vsub.s32 0, %v799
  %v801 = vrot.slane %v784, %v800
  %v802 = vlaneseq
  %v803 = vshrl.u32 %v802, 7
  %v804 = vsub.s32 0, %v803
  %v805 = vrot.slane %v767, %v804
  %v806 = vlaneseq
  %v807 = vshrl.u32 %v806, 7
  %v808 = vsub.s32 0, %v807
  %v809 = vrot.slane %v781, %v808
  %v810 = vlaneseq
  %v811 = vshrl.u32 %v810, 7
  %v812 = vsub.s32 0, %v811
  %v813 = vrot.slane %v783, %v812
  %v814 = vlaneseq
  %v815 = vshrl.u32 %v814, 7
  %v816 = vsub.s32 0, %v815
  %v817 = vrot.slane %v785, %v816
  %818 = vrot.lane.b32.xlu0 %v789, 104
  %v819 = vpop.permute.xlu0 %818
  %820 = vrot.lane.b32.xlu0 %v793, 104
  %v821 = vpop.permute.xlu0 %820
  %822 = vrot.lane.b32.xlu0 %v797, 104
  %v823 = vpop.permute.xlu0 %822
  %824 = vrot.lane.b32.xlu0 %v801, 104
  %v825 = vpop.permute.xlu0 %824
  %826 = vrot.lane.b32.xlu0 %v805, 104
  %v827 = vpop.permute.xlu0 %826
  %828 = vrot.lane.b32.xlu0 %v809, 104
  %v829 = vpop.permute.xlu0 %828
  %830 = vrot.lane.b32.xlu0 %v813, 104
  %v831 = vpop.permute.xlu0 %830
  %832 = vrot.lane.b32.xlu0 %v817, 104
  %v833 = vpop.permute.xlu0 %832
  %842 = vst.msk [vmem:[%s6 + $0x1] sm:$0x1] %vm520, %v819
  %843 = vst.msk [vmem:[%s6 + $0x9] sm:$0x1] %vm520, %v821
  %844 = vst.msk [vmem:[%s6 + $0x11] sm:$0x1] %vm520, %v823
  %845 = vst.msk [vmem:[%s6 + $0x19] sm:$0x1] %vm520, %v825
  %846 = vst.msk [vmem:[%s6 + $0x21] sm:$0x1] %vm520, %v827
  %847 = vst.msk [vmem:[%s6 + $0x29] sm:$0x1] %vm520, %v829
  %848 = vst.msk [vmem:[%s6 + $0x31] sm:$0x1] %vm520, %v831
  %849 = vst.msk [vmem:[%s6 + $0x39] sm:$0x1] %vm520, %v833
  %851 = vrot.lane.b32.xlu0 %v735, 8
  %v852 = vpop.permute.xlu0 %851
  %v854 = vsel %vm316, %v638, %v852
  %v856 = vsel %vm204, %v854, 0
  %858 = vmatprep.subr.mxu0 %v29
  %859 = vmatpush1.msra.mxu0 %v28
  %860 = vmatprep.subr.mxu0 %v31
  %861 = vmatpush1.msra.mxu0 %v30
  %862 = vmatprep.subr.mxu0 %v33
  %863 = vmatpush1.msra.mxu0 %v32
  %864 = vmatprep.subr.mxu0 %v35
  %865 = vmatpush1.msra.mxu0 %v34
  %866 = vmatprep.subr.mxu0 %v37
  %867 = vmatpush1.msra.mxu0 %v36
  %868 = vmatprep.subr.mxu0 %v213
  %869 = vmatpush1.msra.mxu0 %v210
  %870 = vmatprep.subr.mxu0 0.0
  %871 = vmatpush1.msra.mxu0 0.0
  %872 = vmatprep.subr.mxu0 0.0
  %873 = vmatpush1.msra.mxu0 0.0
  %874 = vmatprep.subr.mxu0 0.0
  %875 = vmatpush1.msra.mxu0 0.0
  %876 = vmatprep.subr.mxu0 0.0
  %877 = vmatpush1.msra.mxu0 0.0
  %878 = vmatprep.subr.mxu0 0.0
  %879 = vmatpush1.msra.mxu0 0.0
  %880 = vmatprep.subr.mxu0 0.0
  %881 = vmatpush1.msra.mxu0 0.0
  %882 = vmatprep.subr.mxu0 0.0
  %883 = vmatpush1.msra.mxu0 0.0
  %884 = vmatprep.subr.mxu0 0.0
  %885 = vmatpush1.msra.mxu0 0.0
  %886 = vmatprep.subr.mxu0 0.0
  %887 = vmatpush1.msra.mxu0 0.0
  %888 = vmatprep.subr.mxu0 0.0
  %889 = vmatpush1.msra.mxu0 0.0
  %890 = vmatprep.subr.mxu0 0.0
  %891 = vmatpush1.msra.mxu0 0.0
  %892 = vmatprep.subr.mxu0 0.0
  %893 = vmatpush1.msra.mxu0 0.0
  %894 = vmatprep.subr.mxu0 0.0
  %895 = vmatpush1.msra.mxu0 0.0
  %896 = vmatprep.subr.mxu0 0.0
  %897 = vmatpush1.msra.mxu0 0.0
  %898 = vmatprep.subr.mxu0 0.0
  %899 = vmatpush1.msra.mxu0 0.0
  %900 = vmatprep.subr.mxu0 0.0
  %901 = vmatpush1.msra.mxu0 0.0
  %902 = vmatprep.subr.mxu0 0.0
  %903 = vmatpush1.msra.mxu0 0.0
  %904 = vmatprep.subr.mxu0 0.0
  %905 = vmatpush1.msra.mxu0 0.0
  %906 = vmatprep.subr.mxu0 0.0
  %907 = vmatpush1.msra.mxu0 0.0
  %908 = vmatprep.subr.mxu0 0.0
  %909 = vmatpush1.msra.mxu0 0.0
  %910 = vmatprep.subr.mxu0 0.0
  %911 = vmatpush1.msra.mxu0 0.0
  %912 = vmatprep.subr.mxu0 0.0
  %913 = vmatpush1.msra.mxu0 0.0
  %914 = vmatprep.subr.mxu0 0.0
  %915 = vmatpush1.msra.mxu0 0.0
  %916 = vmatprep.subr.mxu0 0.0
  %917 = vmatpush1.msra.mxu0 0.0
  %918 = vmatprep.subr.mxu0 0.0
  %919 = vmatpush1.msra.mxu0 0.0
  %920 = vmatprep.subr.mxu0 0.0
  %921 = vmatpush1.msra.mxu0 0.0
  %922 = vmatprep.mubr.f32.mxu0 0.0
  %923 = vmatmul.mubr.f32.gmra.mrb[0].mxu0 %v856
  %v924 = vpop.f32.mrb[0].mxu0
  %v925 = vadd.f32 0.0, %v924
  %v926 = vpop.f32.mrb[0].mxu0
  %v927 = vadd.f32 0.0, %v926
  %928 = vdwg.mxu0
  %s929 = scalar_lea.vmem [#allocation2], 16
  %v930 = vld [vmem:[%s929] sm:$0xff]
  %v931 = vadd.f32 %v930, %v925
  %v932 = vxor.u32 %v931, 2147483648
  %v933 = vmul.f32 %v932, 1.442695
  %v934 = vpow.pop %v933
  %v935 = vadd.f32 %v934, 1.0
  %v936 = vrcp.pop %v935
  %v937 = vmul.f32 1.0, %v936
  %v938 = vtanh.pop %v931
  %v939 = vmul.f32 %v937, %v628
  %941 = vrot.lane.b32.xlu0 %v938, 32
  %v942 = vpop.permute.xlu0 %941
  %v944 = vmul.f32 %v937, %v942
  %946 = vrot.lane.b32.xlu0 %v944, 32
  %v947 = vpop.permute.xlu0 %946
  %v949 = vadd.f32 %v939, %v947
  %v950 = vtanh.pop %v949
  %952 = vrot.lane.b32.xlu0 %v950, 32
  %v953 = vpop.permute.xlu0 %952
  %v955 = vmul.f32 %v937, %v953
  %v956 = vadd.f32 %v927, %v50
  %958 = vrot.lane.b32.xlu0 %v955, 64
  %v959 = vpop.permute.xlu0 %958
  %v960 = vsel %vm316, %v959, 0
  %962 = vmatprep.subr.mxu0 0.0
  %963 = vmatpush1.msra.mxu0 %v40
  %964 = vmatprep.subr.mxu0 0.0
  %965 = vmatpush1.msra.mxu0 %v41
  %966 = vmatprep.subr.mxu0 0.0
  %967 = vmatpush1.msra.mxu0 %v42
  %968 = vmatprep.subr.mxu0 0.0
  %969 = vmatpush1.msra.mxu0 %v43
  %970 = vmatprep.subr.mxu0 0.0
  %971 = vmatpush1.msra.mxu0 0.0
  %972 = vmatprep.subr.mxu0 0.0
  %973 = vmatpush1.msra.mxu0 0.0
  %974 = vmatprep.subr.mxu0 0.0
  %975 = vmatpush1.msra.mxu0 0.0
  %976 = vmatprep.subr.mxu0 0.0
  %977 = vmatpush1.msra.mxu0 0.0
  %978 = vmatprep.subr.mxu0 0.0
  %979 = vmatpush1.msra.mxu0 0.0
  %980 = vmatprep.subr.mxu0 0.0
  %981 = vmatpush1.msra.mxu0 0.0
  %982 = vmatprep.subr.mxu0 0.0
  %983 = vmatpush1.msra.mxu0 0.0
  %984 = vmatprep.subr.mxu0 0.0
  %985 = vmatpush1.msra.mxu0 0.0
  %986 = vmatprep.subr.mxu0 0.0
  %987 = vmatpush1.msra.mxu0 0.0
  %988 = vmatprep.subr.mxu0 0.0
  %989 = vmatpush1.msra.mxu0 0.0
  %990 = vmatprep.subr.mxu0 0.0
  %991 = vmatpush1.msra.mxu0 0.0
  %992 = vmatprep.subr.mxu0 0.0
  %993 = vmatpush1.msra.mxu0 0.0
  %994 = vmatprep.subr.mxu0 0.0
  %995 = vmatpush1.msra.mxu0 0.0
  %996 = vmatprep.subr.mxu0 0.0
  %997 = vmatpush1.msra.mxu0 0.0
  %998 = vmatprep.subr.mxu0 0.0
  %999 = vmatpush1.msra.mxu0 0.0
  %1000 = vmatprep.subr.mxu0 0.0
  %1001 = vmatpush1.msra.mxu0 0.0
  %1002 = vmatprep.subr.mxu0 0.0
  %1003 = vmatpush1.msra.mxu0 0.0
  %1004 = vmatprep.subr.mxu0 0.0
  %1005 = vmatpush1.msra.mxu0 0.0
  %1006 = vmatprep.subr.mxu0 0.0
  %1007 = vmatpush1.msra.mxu0 0.0
  %1008 = vmatprep.subr.mxu0 0.0
  %1009 = vmatpush1.msra.mxu0 0.0
  %1010 = vmatprep.subr.mxu0 0.0
  %1011 = vmatpush1.msra.mxu0 0.0
  %1012 = vmatprep.subr.mxu0 0.0
  %1013 = vmatpush1.msra.mxu0 0.0
  %1014 = vmatprep.subr.mxu0 0.0
  %1015 = vmatpush1.msra.mxu0 0.0
  %1016 = vmatprep.subr.mxu0 0.0
  %1017 = vmatpush1.msra.mxu0 0.0
  %1018 = vmatprep.subr.mxu0 0.0
  %1019 = vmatpush1.msra.mxu0 0.0
  %1020 = vmatprep.subr.mxu0 0.0
  %1021 = vmatpush1.msra.mxu0 0.0
  %1022 = vmatprep.subr.mxu0 0.0
  %1023 = vmatpush1.msra.mxu0 0.0
  %1024 = vmatprep.subr.mxu0 0.0
  %1025 = vmatpush1.msra.mxu0 0.0
  %1026 = vmatprep.mubr.f32.mxu0 0.0
  %1027 = vmatmul.mubr.f32.gmra.mrb[0].mxu0 %v960
  %v1028 = vpop.f32.mrb[0].mxu0
  %v1029 = vadd.f32 0.0, %v1028
  %v1030 = vpop.f32.mrb[0].mxu0
  %1031 = vdwg.mxu0
  %v1032 = vadd.f32 %v956, %v1029
  %v1033 = vxor.u32 %v1032, 2147483648
  %v1034 = vmul.f32 %v1033, 1.442695
  %v1035 = vpow.pop %v1034
  %v1036 = vadd.f32 %v1035, 1.0
  %v1037 = vrcp.pop %v1036
  %v1038 = vmul.f32 1.0, %v1037
  %v1039 = vtanh.pop %v1032
  %v1040 = vmul.f32 %v1038, %v729
  %1042 = vrot.lane.b32.xlu0 %v1039, 92
  %v1043 = vpop.permute.xlu0 %1042
  %v1045 = vmul.f32 %v1038, %v1043
  %1047 = vrot.lane.b32.xlu0 %v1045, 12
  %v1048 = vpop.permute.xlu0 %1047
  %v1050 = vadd.f32 %v1040, %v1048
  %v1051 = vtanh.pop %v1050
  %1053 = vrot.lane.b32.xlu0 %v1051, 12
  %v1054 = vpop.permute.xlu0 %1053
  %v1056 = vmul.f32 %v1038, %v1054
  %v1058 = vcombine.high %v1056, %v1056
  %v1060 = vunpack.c.l.s4 1966171168
  %v1061 = vunpack.c.0.s8 %v1060
  %v1062 = vlaneseq
  %v1063 = vshrl.u32 %v1062, 7
  %v1064 = vsub.s32 %v1061, %v1063
  %v1065 = vrot.slane %v1056, %v1064
  %v1067 = vunpack.c.l.s4 1966171168
  %v1068 = vunpack.c.0.s8 %v1067
  %v1069 = vlaneseq
  %v1070 = vshrl.u32 %v1069, 7
  %v1071 = vsub.s32 %v1068, %v1070
  %v1072 = vrot.slane %v1058, %v1071
  %v1073 = vcombine.high %v1065, %v1065
  %v1074 = vcombine.high %v1072, %v1072
  %v1076 = vunpack.c.l.s4 1966171168
  %v1077 = vunpack.c.0.s8 %v1076
  %v1078 = vlaneseq
  %v1079 = vshrl.u32 %v1078, 7
  %v1080 = vsub.s32 %v1077, %v1079
  %v1081 = vrot.slane %v1065, %v1080
  %v1083 = vunpack.c.l.s4 1966171168
  %v1084 = vunpack.c.0.s8 %v1083
  %v1085 = vlaneseq
  %v1086 = vshrl.u32 %v1085, 7
  %v1087 = vsub.s32 %v1084, %v1086
  %v1088 = vrot.slane %v1072, %v1087
  %v1090 = vunpack.c.l.s4 1966171168
  %v1091 = vunpack.c.0.s8 %v1090
  %v1092 = vlaneseq
  %v1093 = vshrl.u32 %v1092, 7
  %v1094 = vsub.s32 %v1091, %v1093
  %v1095 = vrot.slane %v1073, %v1094
  %v1097 = vunpack.c.l.s4 1966171168
  %v1098 = vunpack.c.0.s8 %v1097
  %v1099 = vlaneseq
  %v1100 = vshrl.u32 %v1099, 7
  %v1101 = vsub.s32 %v1098, %v1100
  %v1102 = vrot.slane %v1074, %v1101
  %v1103 = vcombine.high %v1081, %v1081
  %v1104 = vcombine.high %v1088, %v1088
  %v1105 = vcombine.high %v1095, %v1095
  %v1106 = vcombine.high %v1102, %v1102
  %v1107 = vlaneseq
  %v1108 = vshrl.u32 %v1107, 7
  %v1109 = vsub.s32 0, %v1108
  %v1110 = vrot.slane %v1081, %v1109
  %v1111 = vlaneseq
  %v1112 = vshrl.u32 %v1111, 7
  %v1113 = vsub.s32 0, %v1112
  %v1114 = vrot.slane %v1095, %v1113
  %v1115 = vlaneseq
  %v1116 = vshrl.u32 %v1115, 7
  %v1117 = vsub.s32 0, %v1116
  %v1118 = vrot.slane %v1103, %v1117
  %v1119 = vlaneseq
  %v1120 = vshrl.u32 %v1119, 7
  %v1121 = vsub.s32 0, %v1120
  %v1122 = vrot.slane %v1105, %v1121
  %v1123 = vlaneseq
  %v1124 = vshrl.u32 %v1123, 7
  %v1125 = vsub.s32 0, %v1124
  %v1126 = vrot.slane %v1088, %v1125
  %v1127 = vlaneseq
  %v1128 = vshrl.u32 %v1127, 7
  %v1129 = vsub.s32 0, %v1128
  %v1130 = vrot.slane %v1102, %v1129
  %v1131 = vlaneseq
  %v1132 = vshrl.u32 %v1131, 7
  %v1133 = vsub.s32 0, %v1132
  %v1134 = vrot.slane %v1104, %v1133
  %v1135 = vlaneseq
  %v1136 = vshrl.u32 %v1135, 7
  %v1137 = vsub.s32 0, %v1136
  %v1138 = vrot.slane %v1106, %v1137
  %1139 = vrot.lane.b32.xlu0 %v1110, 104
  %v1140 = vpop.permute.xlu0 %1139
  %1141 = vrot.lane.b32.xlu0 %v1114, 104
  %v1142 = vpop.permute.xlu0 %1141
  %1143 = vrot.lane.b32.xlu0 %v1118, 104
  %v1144 = vpop.permute.xlu0 %1143
  %1145 = vrot.lane.b32.xlu0 %v1122, 104
  %v1146 = vpop.permute.xlu0 %1145
  %1147 = vrot.lane.b32.xlu0 %v1126, 104
  %v1148 = vpop.permute.xlu0 %1147
  %1149 = vrot.lane.b32.xlu0 %v1130, 104
  %v1150 = vpop.permute.xlu0 %1149
  %1151 = vrot.lane.b32.xlu0 %v1134, 104
  %v1152 = vpop.permute.xlu0 %1151
  %1153 = vrot.lane.b32.xlu0 %v1138, 104
  %v1154 = vpop.permute.xlu0 %1153
  %1163 = vst.msk [vmem:[%s6 + $0x2] sm:$0x1] %vm520, %v1140
  %1164 = vst.msk [vmem:[%s6 + $0xa] sm:$0x1] %vm520, %v1142
  %1165 = vst.msk [vmem:[%s6 + $0x12] sm:$0x1] %vm520, %v1144
  %1166 = vst.msk [vmem:[%s6 + $0x1a] sm:$0x1] %vm520, %v1146
  %1167 = vst.msk [vmem:[%s6 + $0x22] sm:$0x1] %vm520, %v1148
  %1168 = vst.msk [vmem:[%s6 + $0x2a] sm:$0x1] %vm520, %v1150
  %1169 = vst.msk [vmem:[%s6 + $0x32] sm:$0x1] %vm520, %v1152
  %1170 = vst.msk [vmem:[%s6 + $0x3a] sm:$0x1] %vm520, %v1154
  %1172 = vrot.lane.b32.xlu0 %v1056, 8
  %v1173 = vpop.permute.xlu0 %1172
  %v1175 = vsel %vm316, %v959, %v1173
  %v1177 = vsel %vm204, %v1175, 0
  %1179 = vmatprep.subr.mxu0 %v29
  %1180 = vmatpush1.msra.mxu0 %v28
  %1181 = vmatprep.subr.mxu0 %v31
  %1182 = vmatpush1.msra.mxu0 %v30
  %1183 = vmatprep.subr.mxu0 %v33
  %1184 = vmatpush1.msra.mxu0 %v32
  %1185 = vmatprep.subr.mxu0 %v35
  %1186 = vmatpush1.msra.mxu0 %v34
  %1187 = vmatprep.subr.mxu0 %v37
  %1188 = vmatpush1.msra.mxu0 %v36
  %1189 = vmatprep.subr.mxu0 %v213
  %1190 = vmatpush1.msra.mxu0 %v210
  %1191 = vmatprep.subr.mxu0 0.0
  %1192 = vmatpush1.msra.mxu0 0.0
  %1193 = vmatprep.subr.mxu0 0.0
  %1194 = vmatpush1.msra.mxu0 0.0
  %1195 = vmatprep.subr.mxu0 0.0
  %1196 = vmatpush1.msra.mxu0 0.0
  %1197 = vmatprep.subr.mxu0 0.0
  %1198 = vmatpush1.msra.mxu0 0.0
  %1199 = vmatprep.subr.mxu0 0.0
  %1200 = vmatpush1.msra.mxu0 0.0
  %1201 = vmatprep.subr.mxu0 0.0
  %1202 = vmatpush1.msra.mxu0 0.0
  %1203 = vmatprep.subr.mxu0 0.0
  %1204 = vmatpush1.msra.mxu0 0.0
  %1205 = vmatprep.subr.mxu0 0.0
  %1206 = vmatpush1.msra.mxu0 0.0
  %1207 = vmatprep.subr.mxu0 0.0
  %1208 = vmatpush1.msra.mxu0 0.0
  %1209 = vmatprep.subr.mxu0 0.0
  %1210 = vmatpush1.msra.mxu0 0.0
  %1211 = vmatprep.subr.mxu0 0.0
  %1212 = vmatpush1.msra.mxu0 0.0
  %1213 = vmatprep.subr.mxu0 0.0
  %1214 = vmatpush1.msra.mxu0 0.0
  %1215 = vmatprep.subr.mxu0 0.0
  %1216 = vmatpush1.msra.mxu0 0.0
  %1217 = vmatprep.subr.mxu0 0.0
  %1218 = vmatpush1.msra.mxu0 0.0
  %1219 = vmatprep.subr.mxu0 0.0
  %1220 = vmatpush1.msra.mxu0 0.0
  %1221 = vmatprep.subr.mxu0 0.0
  %1222 = vmatpush1.msra.mxu0 0.0
  %1223 = vmatprep.subr.mxu0 0.0
  %1224 = vmatpush1.msra.mxu0 0.0
  %1225 = vmatprep.subr.mxu0 0.0
  %1226 = vmatpush1.msra.mxu0 0.0
  %1227 = vmatprep.subr.mxu0 0.0
  %1228 = vmatpush1.msra.mxu0 0.0
  %1229 = vmatprep.subr.mxu0 0.0
  %1230 = vmatpush1.msra.mxu0 0.0
  %1231 = vmatprep.subr.mxu0 0.0
  %1232 = vmatpush1.msra.mxu0 0.0
  %1233 = vmatprep.subr.mxu0 0.0
  %1234 = vmatpush1.msra.mxu0 0.0
  %1235 = vmatprep.subr.mxu0 0.0
  %1236 = vmatpush1.msra.mxu0 0.0
  %1237 = vmatprep.subr.mxu0 0.0
  %1238 = vmatpush1.msra.mxu0 0.0
  %1239 = vmatprep.subr.mxu0 0.0
  %1240 = vmatpush1.msra.mxu0 0.0
  %1241 = vmatprep.subr.mxu0 0.0
  %1242 = vmatpush1.msra.mxu0 0.0
  %1243 = vmatprep.mubr.f32.mxu0 0.0
  %1244 = vmatmul.mubr.f32.gmra.mrb[0].mxu0 %v1177
  %v1245 = vpop.f32.mrb[0].mxu0
  %v1246 = vadd.f32 0.0, %v1245
  %v1247 = vpop.f32.mrb[0].mxu0
  %v1248 = vadd.f32 0.0, %v1247
  %1249 = vdwg.mxu0
  %s1250 = scalar_lea.vmem [#allocation2], 24
  %v1251 = vld [vmem:[%s1250] sm:$0xff]
  %v1252 = vadd.f32 %v1251, %v1246
  %v1253 = vxor.u32 %v1252, 2147483648
  %v1254 = vmul.f32 %v1253, 1.442695
  %v1255 = vpow.pop %v1254
  %v1256 = vadd.f32 %v1255, 1.0
  %v1257 = vrcp.pop %v1256
  %v1258 = vmul.f32 1.0, %v1257
  %v1259 = vtanh.pop %v1252
  %v1260 = vmul.f32 %v1258, %v949
  %1262 = vrot.lane.b32.xlu0 %v1259, 32
  %v1263 = vpop.permute.xlu0 %1262
  %v1265 = vmul.f32 %v1258, %v1263
  %1267 = vrot.lane.b32.xlu0 %v1265, 32
  %v1268 = vpop.permute.xlu0 %1267
  %v1270 = vadd.f32 %v1260, %v1268
  %v1271 = vtanh.pop %v1270
  %1273 = vrot.lane.b32.xlu0 %v1271, 32
  %v1274 = vpop.permute.xlu0 %1273
  %v1276 = vmul.f32 %v1258, %v1274
  %v1277 = vadd.f32 %v1248, %v50
  %1279 = vrot.lane.b32.xlu0 %v1276, 64
  %v1280 = vpop.permute.xlu0 %1279
  %v1281 = vsel %vm316, %v1280, 0
  %1283 = vmatprep.subr.mxu0 0.0
  %1284 = vmatpush1.msra.mxu0 %v40
  %1285 = vmatprep.subr.mxu0 0.0
  %1286 = vmatpush1.msra.mxu0 %v41
  %1287 = vmatprep.subr.mxu0 0.0
  %1288 = vmatpush1.msra.mxu0 %v42
  %1289 = vmatprep.subr.mxu0 0.0
  %1290 = vmatpush1.msra.mxu0 %v43
  %1291 = vmatprep.subr.mxu0 0.0
  %1292 = vmatpush1.msra.mxu0 0.0
  %1293 = vmatprep.subr.mxu0 0.0
  %1294 = vmatpush1.msra.mxu0 0.0
  %1295 = vmatprep.subr.mxu0 0.0
  %1296 = vmatpush1.msra.mxu0 0.0
  %1297 = vmatprep.subr.mxu0 0.0
  %1298 = vmatpush1.msra.mxu0 0.0
  %1299 = vmatprep.subr.mxu0 0.0
  %1300 = vmatpush1.msra.mxu0 0.0
  %1301 = vmatprep.subr.mxu0 0.0
  %1302 = vmatpush1.msra.mxu0 0.0
  %1303 = vmatprep.subr.mxu0 0.0
  %1304 = vmatpush1.msra.mxu0 0.0
  %1305 = vmatprep.subr.mxu0 0.0
  %1306 = vmatpush1.msra.mxu0 0.0
  %1307 = vmatprep.subr.mxu0 0.0
  %1308 = vmatpush1.msra.mxu0 0.0
  %1309 = vmatprep.subr.mxu0 0.0
  %1310 = vmatpush1.msra.mxu0 0.0
  %1311 = vmatprep.subr.mxu0 0.0
  %1312 = vmatpush1.msra.mxu0 0.0
  %1313 = vmatprep.subr.mxu0 0.0
  %1314 = vmatpush1.msra.mxu0 0.0
  %1315 = vmatprep.subr.mxu0 0.0
  %1316 = vmatpush1.msra.mxu0 0.0
  %1317 = vmatprep.subr.mxu0 0.0
  %1318 = vmatpush1.msra.mxu0 0.0
  %1319 = vmatprep.subr.mxu0 0.0
  %1320 = vmatpush1.msra.mxu0 0.0
  %1321 = vmatprep.subr.mxu0 0.0
  %1322 = vmatpush1.msra.mxu0 0.0
  %1323 = vmatprep.subr.mxu0 0.0
  %1324 = vmatpush1.msra.mxu0 0.0
  %1325 = vmatprep.subr.mxu0 0.0
  %1326 = vmatpush1.msra.mxu0 0.0
  %1327 = vmatprep.subr.mxu0 0.0
  %1328 = vmatpush1.msra.mxu0 0.0
  %1329 = vmatprep.subr.mxu0 0.0
  %1330 = vmatpush1.msra.mxu0 0.0
  %1331 = vmatprep.subr.mxu0 0.0
  %1332 = vmatpush1.msra.mxu0 0.0
  %1333 = vmatprep.subr.mxu0 0.0
  %1334 = vmatpush1.msra.mxu0 0.0
  %1335 = vmatprep.subr.mxu0 0.0
  %1336 = vmatpush1.msra.mxu0 0.0
  %1337 = vmatprep.subr.mxu0 0.0
  %1338 = vmatpush1.msra.mxu0 0.0
  %1339 = vmatprep.subr.mxu0 0.0
  %1340 = vmatpush1.msra.mxu0 0.0
  %1341 = vmatprep.subr.mxu0 0.0
  %1342 = vmatpush1.msra.mxu0 0.0
  %1343 = vmatprep.subr.mxu0 0.0
  %1344 = vmatpush1.msra.mxu0 0.0
  %1345 = vmatprep.subr.mxu0 0.0
  %1346 = vmatpush1.msra.mxu0 0.0
  %1347 = vmatprep.mubr.f32.mxu0 0.0
  %1348 = vmatmul.mubr.f32.gmra.mrb[0].mxu0 %v1281
  %v1349 = vpop.f32.mrb[0].mxu0
  %v1350 = vadd.f32 0.0, %v1349
  %v1351 = vpop.f32.mrb[0].mxu0
  %1352 = vdwg.mxu0
  %v1353 = vadd.f32 %v1277, %v1350
  %v1354 = vxor.u32 %v1353, 2147483648
  %v1355 = vmul.f32 %v1354, 1.442695
  %v1356 = vpow.pop %v1355
  %v1357 = vadd.f32 %v1356, 1.0
  %v1358 = vrcp.pop %v1357
  %v1359 = vmul.f32 1.0, %v1358
  %v1360 = vtanh.pop %v1353
  %v1361 = vmul.f32 %v1359, %v1050
  %1363 = vrot.lane.b32.xlu0 %v1360, 92
  %v1364 = vpop.permute.xlu0 %1363
  %v1366 = vmul.f32 %v1359, %v1364
  %1368 = vrot.lane.b32.xlu0 %v1366, 12
  %v1369 = vpop.permute.xlu0 %1368
  %v1371 = vadd.f32 %v1361, %v1369
  %v1372 = vtanh.pop %v1371
  %1374 = vrot.lane.b32.xlu0 %v1372, 12
  %v1375 = vpop.permute.xlu0 %1374
  %v1377 = vmul.f32 %v1359, %v1375
  %v1379 = vcombine.high %v1377, %v1377
  %v1381 = vunpack.c.l.s4 1966171168
  %v1382 = vunpack.c.0.s8 %v1381
  %v1383 = vlaneseq
  %v1384 = vshrl.u32 %v1383, 7
  %v1385 = vsub.s32 %v1382, %v1384
  %v1386 = vrot.slane %v1377, %v1385
  %v1388 = vunpack.c.l.s4 1966171168
  %v1389 = vunpack.c.0.s8 %v1388
  %v1390 = vlaneseq
  %v1391 = vshrl.u32 %v1390, 7
  %v1392 = vsub.s32 %v1389, %v1391
  %v1393 = vrot.slane %v1379, %v1392
  %v1394 = vcombine.high %v1386, %v1386
  %v1395 = vcombine.high %v1393, %v1393
  %v1397 = vunpack.c.l.s4 1966171168
  %v1398 = vunpack.c.0.s8 %v1397
  %v1399 = vlaneseq
  %v1400 = vshrl.u32 %v1399, 7
  %v1401 = vsub.s32 %v1398, %v1400
  %v1402 = vrot.slane %v1386, %v1401
  %v1404 = vunpack.c.l.s4 1966171168
  %v1405 = vunpack.c.0.s8 %v1404
  %v1406 = vlaneseq
  %v1407 = vshrl.u32 %v1406, 7
  %v1408 = vsub.s32 %v1405, %v1407
  %v1409 = vrot.slane %v1393, %v1408
  %v1411 = vunpack.c.l.s4 1966171168
  %v1412 = vunpack.c.0.s8 %v1411
  %v1413 = vlaneseq
  %v1414 = vshrl.u32 %v1413, 7
  %v1415 = vsub.s32 %v1412, %v1414
  %v1416 = vrot.slane %v1394, %v1415
  %v1418 = vunpack.c.l.s4 1966171168
  %v1419 = vunpack.c.0.s8 %v1418
  %v1420 = vlaneseq
  %v1421 = vshrl.u32 %v1420, 7
  %v1422 = vsub.s32 %v1419, %v1421
  %v1423 = vrot.slane %v1395, %v1422
  %v1424 = vcombine.high %v1402, %v1402
  %v1425 = vcombine.high %v1409, %v1409
  %v1426 = vcombine.high %v1416, %v1416
  %v1427 = vcombine.high %v1423, %v1423
  %v1428 = vlaneseq
  %v1429 = vshrl.u32 %v1428, 7
  %v1430 = vsub.s32 0, %v1429
  %v1431 = vrot.slane %v1402, %v1430
  %v1432 = vlaneseq
  %v1433 = vshrl.u32 %v1432, 7
  %v1434 = vsub.s32 0, %v1433
  %v1435 = vrot.slane %v1416, %v1434
  %v1436 = vlaneseq
  %v1437 = vshrl.u32 %v1436, 7
  %v1438 = vsub.s32 0, %v1437
  %v1439 = vrot.slane %v1424, %v1438
  %v1440 = vlaneseq
  %v1441 = vshrl.u32 %v1440, 7
  %v1442 = vsub.s32 0, %v1441
  %v1443 = vrot.slane %v1426, %v1442
  %v1444 = vlaneseq
  %v1445 = vshrl.u32 %v1444, 7
  %v1446 = vsub.s32 0, %v1445
  %v1447 = vrot.slane %v1409, %v1446
  %v1448 = vlaneseq
  %v1449 = vshrl.u32 %v1448, 7
  %v1450 = vsub.s32 0, %v1449
  %v1451 = vrot.slane %v1423, %v1450
  %v1452 = vlaneseq
  %v1453 = vshrl.u32 %v1452, 7
  %v1454 = vsub.s32 0, %v1453
  %v1455 = vrot.slane %v1425, %v1454
  %v1456 = vlaneseq
  %v1457 = vshrl.u32 %v1456, 7
  %v1458 = vsub.s32 0, %v1457
  %v1459 = vrot.slane %v1427, %v1458
  %1460 = vrot.lane.b32.xlu0 %v1431, 104
  %v1461 = vpop.permute.xlu0 %1460
  %1462 = vrot.lane.b32.xlu0 %v1435, 104
  %v1463 = vpop.permute.xlu0 %1462
  %1464 = vrot.lane.b32.xlu0 %v1439, 104
  %v1465 = vpop.permute.xlu0 %1464
  %1466 = vrot.lane.b32.xlu0 %v1443, 104
  %v1467 = vpop.permute.xlu0 %1466
  %1468 = vrot.lane.b32.xlu0 %v1447, 104
  %v1469 = vpop.permute.xlu0 %1468
  %1470 = vrot.lane.b32.xlu0 %v1451, 104
  %v1471 = vpop.permute.xlu0 %1470
  %1472 = vrot.lane.b32.xlu0 %v1455, 104
  %v1473 = vpop.permute.xlu0 %1472
  %1474 = vrot.lane.b32.xlu0 %v1459, 104
  %v1475 = vpop.permute.xlu0 %1474
  %1484 = vst.msk [vmem:[%s6 + $0x3] sm:$0x1] %vm520, %v1461
  %1485 = vst.msk [vmem:[%s6 + $0xb] sm:$0x1] %vm520, %v1463
  %1486 = vst.msk [vmem:[%s6 + $0x13] sm:$0x1] %vm520, %v1465
  %1487 = vst.msk [vmem:[%s6 + $0x1b] sm:$0x1] %vm520, %v1467
  %1488 = vst.msk [vmem:[%s6 + $0x23] sm:$0x1] %vm520, %v1469
  %1489 = vst.msk [vmem:[%s6 + $0x2b] sm:$0x1] %vm520, %v1471
  %1490 = vst.msk [vmem:[%s6 + $0x33] sm:$0x1] %vm520, %v1473
  %1491 = vst.msk [vmem:[%s6 + $0x3b] sm:$0x1] %vm520, %v1475
  %1493 = vrot.lane.b32.xlu0 %v1377, 8
  %v1494 = vpop.permute.xlu0 %1493
  %v1496 = vsel %vm316, %v1280, %v1494
  %v1498 = vsel %vm204, %v1496, 0
  %1500 = vmatprep.subr.mxu0 %v29
  %1501 = vmatpush1.msra.mxu0 %v28
  %1502 = vmatprep.subr.mxu0 %v31
  %1503 = vmatpush1.msra.mxu0 %v30
  %1504 = vmatprep.subr.mxu0 %v33
  %1505 = vmatpush1.msra.mxu0 %v32
  %1506 = vmatprep.subr.mxu0 %v35
  %1507 = vmatpush1.msra.mxu0 %v34
  %1508 = vmatprep.subr.mxu0 %v37
  %1509 = vmatpush1.msra.mxu0 %v36
  %1510 = vmatprep.subr.mxu0 %v213
  %1511 = vmatpush1.msra.mxu0 %v210
  %1512 = vmatprep.subr.mxu0 0.0
  %1513 = vmatpush1.msra.mxu0 0.0
  %1514 = vmatprep.subr.mxu0 0.0
  %1515 = vmatpush1.msra.mxu0 0.0
  %1516 = vmatprep.subr.mxu0 0.0
  %1517 = vmatpush1.msra.mxu0 0.0
  %1518 = vmatprep.subr.mxu0 0.0
  %1519 = vmatpush1.msra.mxu0 0.0
  %1520 = vmatprep.subr.mxu0 0.0
  %1521 = vmatpush1.msra.mxu0 0.0
  %1522 = vmatprep.subr.mxu0 0.0
  %1523 = vmatpush1.msra.mxu0 0.0
  %1524 = vmatprep.subr.mxu0 0.0
  %1525 = vmatpush1.msra.mxu0 0.0
  %1526 = vmatprep.subr.mxu0 0.0
  %1527 = vmatpush1.msra.mxu0 0.0
  %1528 = vmatprep.subr.mxu0 0.0
  %1529 = vmatpush1.msra.mxu0 0.0
  %1530 = vmatprep.subr.mxu0 0.0
  %1531 = vmatpush1.msra.mxu0 0.0
  %1532 = vmatprep.subr.mxu0 0.0
  %1533 = vmatpush1.msra.mxu0 0.0
  %1534 = vmatprep.subr.mxu0 0.0
  %1535 = vmatpush1.msra.mxu0 0.0
  %1536 = vmatprep.subr.mxu0 0.0
  %1537 = vmatpush1.msra.mxu0 0.0
  %1538 = vmatprep.subr.mxu0 0.0
  %1539 = vmatpush1.msra.mxu0 0.0
  %1540 = vmatprep.subr.mxu0 0.0
  %1541 = vmatpush1.msra.mxu0 0.0
  %1542 = vmatprep.subr.mxu0 0.0
  %1543 = vmatpush1.msra.mxu0 0.0
  %1544 = vmatprep.subr.mxu0 0.0
  %1545 = vmatpush1.msra.mxu0 0.0
  %1546 = vmatprep.subr.mxu0 0.0
  %1547 = vmatpush1.msra.mxu0 0.0
  %1548 = vmatprep.subr.mxu0 0.0
  %1549 = vmatpush1.msra.mxu0 0.0
  %1550 = vmatprep.subr.mxu0 0.0
  %1551 = vmatpush1.msra.mxu0 0.0
  %1552 = vmatprep.subr.mxu0 0.0
  %1553 = vmatpush1.msra.mxu0 0.0
  %1554 = vmatprep.subr.mxu0 0.0
  %1555 = vmatpush1.msra.mxu0 0.0
  %1556 = vmatprep.subr.mxu0 0.0
  %1557 = vmatpush1.msra.mxu0 0.0
  %1558 = vmatprep.subr.mxu0 0.0
  %1559 = vmatpush1.msra.mxu0 0.0
  %1560 = vmatprep.subr.mxu0 0.0
  %1561 = vmatpush1.msra.mxu0 0.0
  %1562 = vmatprep.subr.mxu0 0.0
  %1563 = vmatpush1.msra.mxu0 0.0
  %1564 = vmatprep.mubr.f32.mxu0 0.0
  %1565 = vmatmul.mubr.f32.gmra.mrb[0].mxu0 %v1498
  %v1566 = vpop.f32.mrb[0].mxu0
  %v1567 = vadd.f32 0.0, %v1566
  %v1568 = vpop.f32.mrb[0].mxu0
  %v1569 = vadd.f32 0.0, %v1568
  %1570 = vdwg.mxu0
  %s1571 = scalar_lea.vmem [#allocation2], 32
  %v1572 = vld [vmem:[%s1571] sm:$0xff]
  %v1573 = vadd.f32 %v1572, %v1567
  %v1574 = vxor.u32 %v1573, 2147483648
  %v1575 = vmul.f32 %v1574, 1.442695
  %v1576 = vpow.pop %v1575
  %v1577 = vadd.f32 %v1576, 1.0
  %v1578 = vrcp.pop %v1577
  %v1579 = vmul.f32 1.0, %v1578
  %v1580 = vtanh.pop %v1573
  %v1581 = vmul.f32 %v1579, %v1270
  %1583 = vrot.lane.b32.xlu0 %v1580, 32
  %v1584 = vpop.permute.xlu0 %1583
  %v1586 = vmul.f32 %v1579, %v1584
  %1588 = vrot.lane.b32.xlu0 %v1586, 32
  %v1589 = vpop.permute.xlu0 %1588
  %v1591 = vadd.f32 %v1581, %v1589
  %v1592 = vtanh.pop %v1591
  %1594 = vrot.lane.b32.xlu0 %v1592, 32
  %v1595 = vpop.permute.xlu0 %1594
  %v1597 = vmul.f32 %v1579, %v1595
  %v1598 = vadd.f32 %v1569, %v50
  %1600 = vrot.lane.b32.xlu0 %v1597, 64
  %v1601 = vpop.permute.xlu0 %1600
  %v1602 = vsel %vm316, %v1601, 0
  %1604 = vmatprep.subr.mxu0 0.0
  %1605 = vmatpush1.msra.mxu0 %v40
  %1606 = vmatprep.subr.mxu0 0.0
  %1607 = vmatpush1.msra.mxu0 %v41
  %1608 = vmatprep.subr.mxu0 0.0
  %1609 = vmatpush1.msra.mxu0 %v42
  %1610 = vmatprep.subr.mxu0 0.0
  %1611 = vmatpush1.msra.mxu0 %v43
  %1612 = vmatprep.subr.mxu0 0.0
  %1613 = vmatpush1.msra.mxu0 0.0
  %1614 = vmatprep.subr.mxu0 0.0
  %1615 = vmatpush1.msra.mxu0 0.0
  %1616 = vmatprep.subr.mxu0 0.0
  %1617 = vmatpush1.msra.mxu0 0.0
  %1618 = vmatprep.subr.mxu0 0.0
  %1619 = vmatpush1.msra.mxu0 0.0
  %1620 = vmatprep.subr.mxu0 0.0
  %1621 = vmatpush1.msra.mxu0 0.0
  %1622 = vmatprep.subr.mxu0 0.0
  %1623 = vmatpush1.msra.mxu0 0.0
  %1624 = vmatprep.subr.mxu0 0.0
  %1625 = vmatpush1.msra.mxu0 0.0
  %1626 = vmatprep.subr.mxu0 0.0
  %1627 = vmatpush1.msra.mxu0 0.0
  %1628 = vmatprep.subr.mxu0 0.0
  %1629 = vmatpush1.msra.mxu0 0.0
  %1630 = vmatprep.subr.mxu0 0.0
  %1631 = vmatpush1.msra.mxu0 0.0
  %1632 = vmatprep.subr.mxu0 0.0
  %1633 = vmatpush1.msra.mxu0 0.0
  %1634 = vmatprep.subr.mxu0 0.0
  %1635 = vmatpush1.msra.mxu0 0.0
  %1636 = vmatprep.subr.mxu0 0.0
  %1637 = vmatpush1.msra.mxu0 0.0
  %1638 = vmatprep.subr.mxu0 0.0
  %1639 = vmatpush1.msra.mxu0 0.0
  %1640 = vmatprep.subr.mxu0 0.0
  %1641 = vmatpush1.msra.mxu0 0.0
  %1642 = vmatprep.subr.mxu0 0.0
  %1643 = vmatpush1.msra.mxu0 0.0
  %1644 = vmatprep.subr.mxu0 0.0
  %1645 = vmatpush1.msra.mxu0 0.0
  %1646 = vmatprep.subr.mxu0 0.0
  %1647 = vmatpush1.msra.mxu0 0.0
  %1648 = vmatprep.subr.mxu0 0.0
  %1649 = vmatpush1.msra.mxu0 0.0
  %1650 = vmatprep.subr.mxu0 0.0
  %1651 = vmatpush1.msra.mxu0 0.0
  %1652 = vmatprep.subr.mxu0 0.0
  %1653 = vmatpush1.msra.mxu0 0.0
  %1654 = vmatprep.subr.mxu0 0.0
  %1655 = vmatpush1.msra.mxu0 0.0
  %1656 = vmatprep.subr.mxu0 0.0
  %1657 = vmatpush1.msra.mxu0 0.0
  %1658 = vmatprep.subr.mxu0 0.0
  %1659 = vmatpush1.msra.mxu0 0.0
  %1660 = vmatprep.subr.mxu0 0.0
  %1661 = vmatpush1.msra.mxu0 0.0
  %1662 = vmatprep.subr.mxu0 0.0
  %1663 = vmatpush1.msra.mxu0 0.0
  %1664 = vmatprep.subr.mxu0 0.0
  %1665 = vmatpush1.msra.mxu0 0.0
  %1666 = vmatprep.subr.mxu0 0.0
  %1667 = vmatpush1.msra.mxu0 0.0
  %1668 = vmatprep.mubr.f32.mxu0 0.0
  %1669 = vmatmul.mubr.f32.gmra.mrb[0].mxu0 %v1602
  %v1670 = vpop.f32.mrb[0].mxu0
  %v1671 = vadd.f32 0.0, %v1670
  %v1672 = vpop.f32.mrb[0].mxu0
  %1673 = vdwg.mxu0
  %v1674 = vadd.f32 %v1598, %v1671
  %v1675 = vxor.u32 %v1674, 2147483648
  %v1676 = vmul.f32 %v1675, 1.442695
  %v1677 = vpow.pop %v1676
  %v1678 = vadd.f32 %v1677, 1.0
  %v1679 = vrcp.pop %v1678
  %v1680 = vmul.f32 1.0, %v1679
  %v1681 = vtanh.pop %v1674
  %v1682 = vmul.f32 %v1680, %v1371
  %1684 = vrot.lane.b32.xlu0 %v1681, 92
  %v1685 = vpop.permute.xlu0 %1684
  %v1687 = vmul.f32 %v1680, %v1685
  %1689 = vrot.lane.b32.xlu0 %v1687, 12
  %v1690 = vpop.permute.xlu0 %1689
  %v1692 = vadd.f32 %v1682, %v1690
  %v1693 = vtanh.pop %v1692
  %1695 = vrot.lane.b32.xlu0 %v1693, 12
  %v1696 = vpop.permute.xlu0 %1695
  %v1698 = vmul.f32 %v1680, %v1696
  %v1700 = vcombine.high %v1698, %v1698
  %v1702 = vunpack.c.l.s4 1966171168
  %v1703 = vunpack.c.0.s8 %v1702
  %v1704 = vlaneseq
  %v1705 = vshrl.u32 %v1704, 7
  %v1706 = vsub.s32 %v1703, %v1705
  %v1707 = vrot.slane %v1698, %v1706
  %v1709 = vunpack.c.l.s4 1966171168
  %v1710 = vunpack.c.0.s8 %v1709
  %v1711 = vlaneseq
  %v1712 = vshrl.u32 %v1711, 7
  %v1713 = vsub.s32 %v1710, %v1712
  %v1714 = vrot.slane %v1700, %v1713
  %v1715 = vcombine.high %v1707, %v1707
  %v1716 = vcombine.high %v1714, %v1714
  %v1718 = vunpack.c.l.s4 1966171168
  %v1719 = vunpack.c.0.s8 %v1718
  %v1720 = vlaneseq
  %v1721 = vshrl.u32 %v1720, 7
  %v1722 = vsub.s32 %v1719, %v1721
  %v1723 = vrot.slane %v1707, %v1722
  %v1725 = vunpack.c.l.s4 1966171168
  %v1726 = vunpack.c.0.s8 %v1725
  %v1727 = vlaneseq
  %v1728 = vshrl.u32 %v1727, 7
  %v1729 = vsub.s32 %v1726, %v1728
  %v1730 = vrot.slane %v1714, %v1729
  %v1732 = vunpack.c.l.s4 1966171168
  %v1733 = vunpack.c.0.s8 %v1732
  %v1734 = vlaneseq
  %v1735 = vshrl.u32 %v1734, 7
  %v1736 = vsub.s32 %v1733, %v1735
  %v1737 = vrot.slane %v1715, %v1736
  %v1739 = vunpack.c.l.s4 1966171168
  %v1740 = vunpack.c.0.s8 %v1739
  %v1741 = vlaneseq
  %v1742 = vshrl.u32 %v1741, 7
  %v1743 = vsub.s32 %v1740, %v1742
  %v1744 = vrot.slane %v1716, %v1743
  %v1745 = vcombine.high %v1723, %v1723
  %v1746 = vcombine.high %v1730, %v1730
  %v1747 = vcombine.high %v1737, %v1737
  %v1748 = vcombine.high %v1744, %v1744
  %v1749 = vlaneseq
  %v1750 = vshrl.u32 %v1749, 7
  %v1751 = vsub.s32 0, %v1750
  %v1752 = vrot.slane %v1723, %v1751
  %v1753 = vlaneseq
  %v1754 = vshrl.u32 %v1753, 7
  %v1755 = vsub.s32 0, %v1754
  %v1756 = vrot.slane %v1737, %v1755
  %v1757 = vlaneseq
  %v1758 = vshrl.u32 %v1757, 7
  %v1759 = vsub.s32 0, %v1758
  %v1760 = vrot.slane %v1745, %v1759
  %v1761 = vlaneseq
  %v1762 = vshrl.u32 %v1761, 7
  %v1763 = vsub.s32 0, %v1762
  %v1764 = vrot.slane %v1747, %v1763
  %v1765 = vlaneseq
  %v1766 = vshrl.u32 %v1765, 7
  %v1767 = vsub.s32 0, %v1766
  %v1768 = vrot.slane %v1730, %v1767
  %v1769 = vlaneseq
  %v1770 = vshrl.u32 %v1769, 7
  %v1771 = vsub.s32 0, %v1770
  %v1772 = vrot.slane %v1744, %v1771
  %v1773 = vlaneseq
  %v1774 = vshrl.u32 %v1773, 7
  %v1775 = vsub.s32 0, %v1774
  %v1776 = vrot.slane %v1746, %v1775
  %v1777 = vlaneseq
  %v1778 = vshrl.u32 %v1777, 7
  %v1779 = vsub.s32 0, %v1778
  %v1780 = vrot.slane %v1748, %v1779
  %1781 = vrot.lane.b32.xlu0 %v1752, 104
  %v1782 = vpop.permute.xlu0 %1781
  %1783 = vrot.lane.b32.xlu0 %v1756, 104
  %v1784 = vpop.permute.xlu0 %1783
  %1785 = vrot.lane.b32.xlu0 %v1760, 104
  %v1786 = vpop.permute.xlu0 %1785
  %1787 = vrot.lane.b32.xlu0 %v1764, 104
  %v1788 = vpop.permute.xlu0 %1787
  %1789 = vrot.lane.b32.xlu0 %v1768, 104
  %v1790 = vpop.permute.xlu0 %1789
  %1791 = vrot.lane.b32.xlu0 %v1772, 104
  %v1792 = vpop.permute.xlu0 %1791
  %1793 = vrot.lane.b32.xlu0 %v1776, 104
  %v1794 = vpop.permute.xlu0 %1793
  %1795 = vrot.lane.b32.xlu0 %v1780, 104
  %v1796 = vpop.permute.xlu0 %1795
  %1805 = vst.msk [vmem:[%s6 + $0x4] sm:$0x1] %vm520, %v1782
  %1806 = vst.msk [vmem:[%s6 + $0xc] sm:$0x1] %vm520, %v1784
  %1807 = vst.msk [vmem:[%s6 + $0x14] sm:$0x1] %vm520, %v1786
  %1808 = vst.msk [vmem:[%s6 + $0x1c] sm:$0x1] %vm520, %v1788
  %1809 = vst.msk [vmem:[%s6 + $0x24] sm:$0x1] %vm520, %v1790
  %1810 = vst.msk [vmem:[%s6 + $0x2c] sm:$0x1] %vm520, %v1792
  %1811 = vst.msk [vmem:[%s6 + $0x34] sm:$0x1] %vm520, %v1794
  %1812 = vst.msk [vmem:[%s6 + $0x3c] sm:$0x1] %vm520, %v1796
  %1814 = vrot.lane.b32.xlu0 %v1698, 8
  %v1815 = vpop.permute.xlu0 %1814
  %v1817 = vsel %vm316, %v1601, %v1815
  %v1819 = vsel %vm204, %v1817, 0
  %1821 = vmatprep.subr.mxu0 %v29
  %1822 = vmatpush1.msra.mxu0 %v28
  %1823 = vmatprep.subr.mxu0 %v31
  %1824 = vmatpush1.msra.mxu0 %v30
  %1825 = vmatprep.subr.mxu0 %v33
  %1826 = vmatpush1.msra.mxu0 %v32
  %1827 = vmatprep.subr.mxu0 %v35
  %1828 = vmatpush1.msra.mxu0 %v34
  %1829 = vmatprep.subr.mxu0 %v37
  %1830 = vmatpush1.msra.mxu0 %v36
  %1831 = vmatprep.subr.mxu0 %v213
  %1832 = vmatpush1.msra.mxu0 %v210
  %1833 = vmatprep.subr.mxu0 0.0
  %1834 = vmatpush1.msra.mxu0 0.0
  %1835 = vmatprep.subr.mxu0 0.0
  %1836 = vmatpush1.msra.mxu0 0.0
  %1837 = vmatprep.subr.mxu0 0.0
  %1838 = vmatpush1.msra.mxu0 0.0
  %1839 = vmatprep.subr.mxu0 0.0
  %1840 = vmatpush1.msra.mxu0 0.0
  %1841 = vmatprep.subr.mxu0 0.0
  %1842 = vmatpush1.msra.mxu0 0.0
  %1843 = vmatprep.subr.mxu0 0.0
  %1844 = vmatpush1.msra.mxu0 0.0
  %1845 = vmatprep.subr.mxu0 0.0
  %1846 = vmatpush1.msra.mxu0 0.0
  %1847 = vmatprep.subr.mxu0 0.0
  %1848 = vmatpush1.msra.mxu0 0.0
  %1849 = vmatprep.subr.mxu0 0.0
  %1850 = vmatpush1.msra.mxu0 0.0
  %1851 = vmatprep.subr.mxu0 0.0
  %1852 = vmatpush1.msra.mxu0 0.0
  %1853 = vmatprep.subr.mxu0 0.0
  %1854 = vmatpush1.msra.mxu0 0.0
  %1855 = vmatprep.subr.mxu0 0.0
  %1856 = vmatpush1.msra.mxu0 0.0
  %1857 = vmatprep.subr.mxu0 0.0
  %1858 = vmatpush1.msra.mxu0 0.0
  %1859 = vmatprep.subr.mxu0 0.0
  %1860 = vmatpush1.msra.mxu0 0.0
  %1861 = vmatprep.subr.mxu0 0.0
  %1862 = vmatpush1.msra.mxu0 0.0
  %1863 = vmatprep.subr.mxu0 0.0
  %1864 = vmatpush1.msra.mxu0 0.0
  %1865 = vmatprep.subr.mxu0 0.0
  %1866 = vmatpush1.msra.mxu0 0.0
  %1867 = vmatprep.subr.mxu0 0.0
  %1868 = vmatpush1.msra.mxu0 0.0
  %1869 = vmatprep.subr.mxu0 0.0
  %1870 = vmatpush1.msra.mxu0 0.0
  %1871 = vmatprep.subr.mxu0 0.0
  %1872 = vmatpush1.msra.mxu0 0.0
  %1873 = vmatprep.subr.mxu0 0.0
  %1874 = vmatpush1.msra.mxu0 0.0
  %1875 = vmatprep.subr.mxu0 0.0
  %1876 = vmatpush1.msra.mxu0 0.0
  %1877 = vmatprep.subr.mxu0 0.0
  %1878 = vmatpush1.msra.mxu0 0.0
  %1879 = vmatprep.subr.mxu0 0.0
  %1880 = vmatpush1.msra.mxu0 0.0
  %1881 = vmatprep.subr.mxu0 0.0
  %1882 = vmatpush1.msra.mxu0 0.0
  %1883 = vmatprep.subr.mxu0 0.0
  %1884 = vmatpush1.msra.mxu0 0.0
  %1885 = vmatprep.mubr.f32.mxu0 0.0
  %1886 = vmatmul.mubr.f32.gmra.mrb[0].mxu0 %v1819
  %v1887 = vpop.f32.mrb[0].mxu0
  %v1888 = vadd.f32 0.0, %v1887
  %v1889 = vpop.f32.mrb[0].mxu0
  %v1890 = vadd.f32 0.0, %v1889
  %1891 = vdwg.mxu0
  %s1892 = scalar_lea.vmem [#allocation2], 40
  %v1893 = vld [vmem:[%s1892] sm:$0xff]
  %v1894 = vadd.f32 %v1893, %v1888
  %v1895 = vxor.u32 %v1894, 2147483648
  %v1896 = vmul.f32 %v1895, 1.442695
  %v1897 = vpow.pop %v1896
  %v1898 = vadd.f32 %v1897, 1.0
  %v1899 = vrcp.pop %v1898
  %v1900 = vmul.f32 1.0, %v1899
  %v1901 = vtanh.pop %v1894
  %v1902 = vmul.f32 %v1900, %v1591
  %1904 = vrot.lane.b32.xlu0 %v1901, 32
  %v1905 = vpop.permute.xlu0 %1904
  %v1907 = vmul.f32 %v1900, %v1905
  %1909 = vrot.lane.b32.xlu0 %v1907, 32
  %v1910 = vpop.permute.xlu0 %1909
  %v1912 = vadd.f32 %v1902, %v1910
  %v1913 = vtanh.pop %v1912
  %1915 = vrot.lane.b32.xlu0 %v1913, 32
  %v1916 = vpop.permute.xlu0 %1915
  %v1918 = vmul.f32 %v1900, %v1916
  %v1919 = vadd.f32 %v1890, %v50
  %1921 = vrot.lane.b32.xlu0 %v1918, 64
  %v1922 = vpop.permute.xlu0 %1921
  %v1923 = vsel %vm316, %v1922, 0
  %1925 = vmatprep.subr.mxu0 0.0
  %1926 = vmatpush1.msra.mxu0 %v40
  %1927 = vmatprep.subr.mxu0 0.0
  %1928 = vmatpush1.msra.mxu0 %v41
  %1929 = vmatprep.subr.mxu0 0.0
  %1930 = vmatpush1.msra.mxu0 %v42
  %1931 = vmatprep.subr.mxu0 0.0
  %1932 = vmatpush1.msra.mxu0 %v43
  %1933 = vmatprep.subr.mxu0 0.0
  %1934 = vmatpush1.msra.mxu0 0.0
  %1935 = vmatprep.subr.mxu0 0.0
  %1936 = vmatpush1.msra.mxu0 0.0
  %1937 = vmatprep.subr.mxu0 0.0
  %1938 = vmatpush1.msra.mxu0 0.0
  %1939 = vmatprep.subr.mxu0 0.0
  %1940 = vmatpush1.msra.mxu0 0.0
  %1941 = vmatprep.subr.mxu0 0.0
  %1942 = vmatpush1.msra.mxu0 0.0
  %1943 = vmatprep.subr.mxu0 0.0
  %1944 = vmatpush1.msra.mxu0 0.0
  %1945 = vmatprep.subr.mxu0 0.0
  %1946 = vmatpush1.msra.mxu0 0.0
  %1947 = vmatprep.subr.mxu0 0.0
  %1948 = vmatpush1.msra.mxu0 0.0
  %1949 = vmatprep.subr.mxu0 0.0
  %1950 = vmatpush1.msra.mxu0 0.0
  %1951 = vmatprep.subr.mxu0 0.0
  %1952 = vmatpush1.msra.mxu0 0.0
  %1953 = vmatprep.subr.mxu0 0.0
  %1954 = vmatpush1.msra.mxu0 0.0
  %1955 = vmatprep.subr.mxu0 0.0
  %1956 = vmatpush1.msra.mxu0 0.0
  %1957 = vmatprep.subr.mxu0 0.0
  %1958 = vmatpush1.msra.mxu0 0.0
  %1959 = vmatprep.subr.mxu0 0.0
  %1960 = vmatpush1.msra.mxu0 0.0
  %1961 = vmatprep.subr.mxu0 0.0
  %1962 = vmatpush1.msra.mxu0 0.0
  %1963 = vmatprep.subr.mxu0 0.0
  %1964 = vmatpush1.msra.mxu0 0.0
  %1965 = vmatprep.subr.mxu0 0.0
  %1966 = vmatpush1.msra.mxu0 0.0
  %1967 = vmatprep.subr.mxu0 0.0
  %1968 = vmatpush1.msra.mxu0 0.0
  %1969 = vmatprep.subr.mxu0 0.0
  %1970 = vmatpush1.msra.mxu0 0.0
  %1971 = vmatprep.subr.mxu0 0.0
  %1972 = vmatpush1.msra.mxu0 0.0
  %1973 = vmatprep.subr.mxu0 0.0
  %1974 = vmatpush1.msra.mxu0 0.0
  %1975 = vmatprep.subr.mxu0 0.0
  %1976 = vmatpush1.msra.mxu0 0.0
  %1977 = vmatprep.subr.mxu0 0.0
  %1978 = vmatpush1.msra.mxu0 0.0
  %1979 = vmatprep.subr.mxu0 0.0
  %1980 = vmatpush1.msra.mxu0 0.0
  %1981 = vmatprep.subr.mxu0 0.0
  %1982 = vmatpush1.msra.mxu0 0.0
  %1983 = vmatprep.subr.mxu0 0.0
  %1984 = vmatpush1.msra.mxu0 0.0
  %1985 = vmatprep.subr.mxu0 0.0
  %1986 = vmatpush1.msra.mxu0 0.0
  %1987 = vmatprep.subr.mxu0 0.0
  %1988 = vmatpush1.msra.mxu0 0.0
  %1989 = vmatprep.mubr.f32.mxu0 0.0
  %1990 = vmatmul.mubr.f32.gmra.mrb[0].mxu0 %v1923
  %v1991 = vpop.f32.mrb[0].mxu0
  %v1992 = vadd.f32 0.0, %v1991
  %v1993 = vpop.f32.mrb[0].mxu0
  %1994 = vdwg.mxu0
  %v1995 = vadd.f32 %v1919, %v1992
  %v1996 = vxor.u32 %v1995, 2147483648
  %v1997 = vmul.f32 %v1996, 1.442695
  %v1998 = vpow.pop %v1997
  %v1999 = vadd.f32 %v1998, 1.0
  %v2000 = vrcp.pop %v1999
  %v2001 = vmul.f32 1.0, %v2000
  %v2002 = vtanh.pop %v1995
  %v2003 = vmul.f32 %v2001, %v1692
  %2005 = vrot.lane.b32.xlu0 %v2002, 92
  %v2006 = vpop.permute.xlu0 %2005
  %v2008 = vmul.f32 %v2001, %v2006
  %2010 = vrot.lane.b32.xlu0 %v2008, 12
  %v2011 = vpop.permute.xlu0 %2010
  %v2013 = vadd.f32 %v2003, %v2011
  %v2014 = vtanh.pop %v2013
  %2016 = vrot.lane.b32.xlu0 %v2014, 12
  %v2017 = vpop.permute.xlu0 %2016
  %v2019 = vmul.f32 %v2001, %v2017
  %v2021 = vcombine.high %v2019, %v2019
  %v2023 = vunpack.c.l.s4 1966171168
  %v2024 = vunpack.c.0.s8 %v2023
  %v2025 = vlaneseq
  %v2026 = vshrl.u32 %v2025, 7
  %v2027 = vsub.s32 %v2024, %v2026
  %v2028 = vrot.slane %v2019, %v2027
  %v2030 = vunpack.c.l.s4 1966171168
  %v2031 = vunpack.c.0.s8 %v2030
  %v2032 = vlaneseq
  %v2033 = vshrl.u32 %v2032, 7
  %v2034 = vsub.s32 %v2031, %v2033
  %v2035 = vrot.slane %v2021, %v2034
  %v2036 = vcombine.high %v2028, %v2028
  %v2037 = vcombine.high %v2035, %v2035
  %v2039 = vunpack.c.l.s4 1966171168
  %v2040 = vunpack.c.0.s8 %v2039
  %v2041 = vlaneseq
  %v2042 = vshrl.u32 %v2041, 7
  %v2043 = vsub.s32 %v2040, %v2042
  %v2044 = vrot.slane %v2028, %v2043
  %v2046 = vunpack.c.l.s4 1966171168
  %v2047 = vunpack.c.0.s8 %v2046
  %v2048 = vlaneseq
  %v2049 = vshrl.u32 %v2048, 7
  %v2050 = vsub.s32 %v2047, %v2049
  %v2051 = vrot.slane %v2035, %v2050
  %v2053 = vunpack.c.l.s4 1966171168
  %v2054 = vunpack.c.0.s8 %v2053
  %v2055 = vlaneseq
  %v2056 = vshrl.u32 %v2055, 7
  %v2057 = vsub.s32 %v2054, %v2056
  %v2058 = vrot.slane %v2036, %v2057
  %v2060 = vunpack.c.l.s4 1966171168
  %v2061 = vunpack.c.0.s8 %v2060
  %v2062 = vlaneseq
  %v2063 = vshrl.u32 %v2062, 7
  %v2064 = vsub.s32 %v2061, %v2063
  %v2065 = vrot.slane %v2037, %v2064
  %v2066 = vcombine.high %v2044, %v2044
  %v2067 = vcombine.high %v2051, %v2051
  %v2068 = vcombine.high %v2058, %v2058
  %v2069 = vcombine.high %v2065, %v2065
  %v2070 = vlaneseq
  %v2071 = vshrl.u32 %v2070, 7
  %v2072 = vsub.s32 0, %v2071
  %v2073 = vrot.slane %v2044, %v2072
  %v2074 = vlaneseq
  %v2075 = vshrl.u32 %v2074, 7
  %v2076 = vsub.s32 0, %v2075
  %v2077 = vrot.slane %v2058, %v2076
  %v2078 = vlaneseq
  %v2079 = vshrl.u32 %v2078, 7
  %v2080 = vsub.s32 0, %v2079
  %v2081 = vrot.slane %v2066, %v2080
  %v2082 = vlaneseq
  %v2083 = vshrl.u32 %v2082, 7
  %v2084 = vsub.s32 0, %v2083
  %v2085 = vrot.slane %v2068, %v2084
  %v2086 = vlaneseq
  %v2087 = vshrl.u32 %v2086, 7
  %v2088 = vsub.s32 0, %v2087
  %v2089 = vrot.slane %v2051, %v2088
  %v2090 = vlaneseq
  %v2091 = vshrl.u32 %v2090, 7
  %v2092 = vsub.s32 0, %v2091
  %v2093 = vrot.slane %v2065, %v2092
  %v2094 = vlaneseq
  %v2095 = vshrl.u32 %v2094, 7
  %v2096 = vsub.s32 0, %v2095
  %v2097 = vrot.slane %v2067, %v2096
  %v2098 = vlaneseq
  %v2099 = vshrl.u32 %v2098, 7
  %v2100 = vsub.s32 0, %v2099
  %v2101 = vrot.slane %v2069, %v2100
  %2102 = vrot.lane.b32.xlu0 %v2073, 104
  %v2103 = vpop.permute.xlu0 %2102
  %2104 = vrot.lane.b32.xlu0 %v2077, 104
  %v2105 = vpop.permute.xlu0 %2104
  %2106 = vrot.lane.b32.xlu0 %v2081, 104
  %v2107 = vpop.permute.xlu0 %2106
  %2108 = vrot.lane.b32.xlu0 %v2085, 104
  %v2109 = vpop.permute.xlu0 %2108
  %2110 = vrot.lane.b32.xlu0 %v2089, 104
  %v2111 = vpop.permute.xlu0 %2110
  %2112 = vrot.lane.b32.xlu0 %v2093, 104
  %v2113 = vpop.permute.xlu0 %2112
  %2114 = vrot.lane.b32.xlu0 %v2097, 104
  %v2115 = vpop.permute.xlu0 %2114
  %2116 = vrot.lane.b32.xlu0 %v2101, 104
  %v2117 = vpop.permute.xlu0 %2116
  %2126 = vst.msk [vmem:[%s6 + $0x5] sm:$0x1] %vm520, %v2103
  %2127 = vst.msk [vmem:[%s6 + $0xd] sm:$0x1] %vm520, %v2105
  %2128 = vst.msk [vmem:[%s6 + $0x15] sm:$0x1] %vm520, %v2107
  %2129 = vst.msk [vmem:[%s6 + $0x1d] sm:$0x1] %vm520, %v2109
  %2130 = vst.msk [vmem:[%s6 + $0x25] sm:$0x1] %vm520, %v2111
  %2131 = vst.msk [vmem:[%s6 + $0x2d] sm:$0x1] %vm520, %v2113
  %2132 = vst.msk [vmem:[%s6 + $0x35] sm:$0x1] %vm520, %v2115
  %2133 = vst.msk [vmem:[%s6 + $0x3d] sm:$0x1] %vm520, %v2117
  %2135 = vrot.lane.b32.xlu0 %v2019, 8
  %v2136 = vpop.permute.xlu0 %2135
  %v2138 = vsel %vm316, %v1922, %v2136
  %v2140 = vsel %vm204, %v2138, 0
  %2142 = vmatprep.subr.mxu0 %v29
  %2143 = vmatpush1.msra.mxu0 %v28
  %2144 = vmatprep.subr.mxu0 %v31
  %2145 = vmatpush1.msra.mxu0 %v30
  %2146 = vmatprep.subr.mxu0 %v33
  %2147 = vmatpush1.msra.mxu0 %v32
  %2148 = vmatprep.subr.mxu0 %v35
  %2149 = vmatpush1.msra.mxu0 %v34
  %2150 = vmatprep.subr.mxu0 %v37
  %2151 = vmatpush1.msra.mxu0 %v36
  %2152 = vmatprep.subr.mxu0 %v213
  %2153 = vmatpush1.msra.mxu0 %v210
  %2154 = vmatprep.subr.mxu0 0.0
  %2155 = vmatpush1.msra.mxu0 0.0
  %2156 = vmatprep.subr.mxu0 0.0
  %2157 = vmatpush1.msra.mxu0 0.0
  %2158 = vmatprep.subr.mxu0 0.0
  %2159 = vmatpush1.msra.mxu0 0.0
  %2160 = vmatprep.subr.mxu0 0.0
  %2161 = vmatpush1.msra.mxu0 0.0
  %2162 = vmatprep.subr.mxu0 0.0
  %2163 = vmatpush1.msra.mxu0 0.0
  %2164 = vmatprep.subr.mxu0 0.0
  %2165 = vmatpush1.msra.mxu0 0.0
  %2166 = vmatprep.subr.mxu0 0.0
  %2167 = vmatpush1.msra.mxu0 0.0
  %2168 = vmatprep.subr.mxu0 0.0
  %2169 = vmatpush1.msra.mxu0 0.0
  %2170 = vmatprep.subr.mxu0 0.0
  %2171 = vmatpush1.msra.mxu0 0.0
  %2172 = vmatprep.subr.mxu0 0.0
  %2173 = vmatpush1.msra.mxu0 0.0
  %2174 = vmatprep.subr.mxu0 0.0
  %2175 = vmatpush1.msra.mxu0 0.0
  %2176 = vmatprep.subr.mxu0 0.0
  %2177 = vmatpush1.msra.mxu0 0.0
  %2178 = vmatprep.subr.mxu0 0.0
  %2179 = vmatpush1.msra.mxu0 0.0
  %2180 = vmatprep.subr.mxu0 0.0
  %2181 = vmatpush1.msra.mxu0 0.0
  %2182 = vmatprep.subr.mxu0 0.0
  %2183 = vmatpush1.msra.mxu0 0.0
  %2184 = vmatprep.subr.mxu0 0.0
  %2185 = vmatpush1.msra.mxu0 0.0
  %2186 = vmatprep.subr.mxu0 0.0
  %2187 = vmatpush1.msra.mxu0 0.0
  %2188 = vmatprep.subr.mxu0 0.0
  %2189 = vmatpush1.msra.mxu0 0.0
  %2190 = vmatprep.subr.mxu0 0.0
  %2191 = vmatpush1.msra.mxu0 0.0
  %2192 = vmatprep.subr.mxu0 0.0
  %2193 = vmatpush1.msra.mxu0 0.0
  %2194 = vmatprep.subr.mxu0 0.0
  %2195 = vmatpush1.msra.mxu0 0.0
  %2196 = vmatprep.subr.mxu0 0.0
  %2197 = vmatpush1.msra.mxu0 0.0
  %2198 = vmatprep.subr.mxu0 0.0
  %2199 = vmatpush1.msra.mxu0 0.0
  %2200 = vmatprep.subr.mxu0 0.0
  %2201 = vmatpush1.msra.mxu0 0.0
  %2202 = vmatprep.subr.mxu0 0.0
  %2203 = vmatpush1.msra.mxu0 0.0
  %2204 = vmatprep.subr.mxu0 0.0
  %2205 = vmatpush1.msra.mxu0 0.0
  %2206 = vmatprep.mubr.f32.mxu0 0.0
  %2207 = vmatmul.mubr.f32.gmra.mrb[0].mxu0 %v2140
  %v2208 = vpop.f32.mrb[0].mxu0
  %v2209 = vadd.f32 0.0, %v2208
  %v2210 = vpop.f32.mrb[0].mxu0
  %v2211 = vadd.f32 0.0, %v2210
  %2212 = vdwg.mxu0
  %s2213 = scalar_lea.vmem [#allocation2], 48
  %v2214 = vld [vmem:[%s2213] sm:$0xff]
  %v2215 = vadd.f32 %v2214, %v2209
  %v2216 = vxor.u32 %v2215, 2147483648
  %v2217 = vmul.f32 %v2216, 1.442695
  %v2218 = vpow.pop %v2217
  %v2219 = vadd.f32 %v2218, 1.0
  %v2220 = vrcp.pop %v2219
  %v2221 = vmul.f32 1.0, %v2220
  %v2222 = vtanh.pop %v2215
  %v2223 = vmul.f32 %v2221, %v1912
  %2225 = vrot.lane.b32.xlu0 %v2222, 32
  %v2226 = vpop.permute.xlu0 %2225
  %v2228 = vmul.f32 %v2221, %v2226
  %2230 = vrot.lane.b32.xlu0 %v2228, 32
  %v2231 = vpop.permute.xlu0 %2230
  %v2233 = vadd.f32 %v2223, %v2231
  %v2234 = vtanh.pop %v2233
  %2236 = vrot.lane.b32.xlu0 %v2234, 32
  %v2237 = vpop.permute.xlu0 %2236
  %v2239 = vmul.f32 %v2221, %v2237
  %v2240 = vadd.f32 %v2211, %v50
  %2242 = vrot.lane.b32.xlu0 %v2239, 64
  %v2243 = vpop.permute.xlu0 %2242
  %v2244 = vsel %vm316, %v2243, 0
  %2246 = vmatprep.subr.mxu0 0.0
  %2247 = vmatpush1.msra.mxu0 %v40
  %2248 = vmatprep.subr.mxu0 0.0
  %2249 = vmatpush1.msra.mxu0 %v41
  %2250 = vmatprep.subr.mxu0 0.0
  %2251 = vmatpush1.msra.mxu0 %v42
  %2252 = vmatprep.subr.mxu0 0.0
  %2253 = vmatpush1.msra.mxu0 %v43
  %2254 = vmatprep.subr.mxu0 0.0
  %2255 = vmatpush1.msra.mxu0 0.0
  %2256 = vmatprep.subr.mxu0 0.0
  %2257 = vmatpush1.msra.mxu0 0.0
  %2258 = vmatprep.subr.mxu0 0.0
  %2259 = vmatpush1.msra.mxu0 0.0
  %2260 = vmatprep.subr.mxu0 0.0
  %2261 = vmatpush1.msra.mxu0 0.0
  %2262 = vmatprep.subr.mxu0 0.0
  %2263 = vmatpush1.msra.mxu0 0.0
  %2264 = vmatprep.subr.mxu0 0.0
  %2265 = vmatpush1.msra.mxu0 0.0
  %2266 = vmatprep.subr.mxu0 0.0
  %2267 = vmatpush1.msra.mxu0 0.0
  %2268 = vmatprep.subr.mxu0 0.0
  %2269 = vmatpush1.msra.mxu0 0.0
  %2270 = vmatprep.subr.mxu0 0.0
  %2271 = vmatpush1.msra.mxu0 0.0
  %2272 = vmatprep.subr.mxu0 0.0
  %2273 = vmatpush1.msra.mxu0 0.0
  %2274 = vmatprep.subr.mxu0 0.0
  %2275 = vmatpush1.msra.mxu0 0.0
  %2276 = vmatprep.subr.mxu0 0.0
  %2277 = vmatpush1.msra.mxu0 0.0
  %2278 = vmatprep.subr.mxu0 0.0
  %2279 = vmatpush1.msra.mxu0 0.0
  %2280 = vmatprep.subr.mxu0 0.0
  %2281 = vmatpush1.msra.mxu0 0.0
  %2282 = vmatprep.subr.mxu0 0.0
  %2283 = vmatpush1.msra.mxu0 0.0
  %2284 = vmatprep.subr.mxu0 0.0
  %2285 = vmatpush1.msra.mxu0 0.0
  %2286 = vmatprep.subr.mxu0 0.0
  %2287 = vmatpush1.msra.mxu0 0.0
  %2288 = vmatprep.subr.mxu0 0.0
  %2289 = vmatpush1.msra.mxu0 0.0
  %2290 = vmatprep.subr.mxu0 0.0
  %2291 = vmatpush1.msra.mxu0 0.0
  %2292 = vmatprep.subr.mxu0 0.0
  %2293 = vmatpush1.msra.mxu0 0.0
  %2294 = vmatprep.subr.mxu0 0.0
  %2295 = vmatpush1.msra.mxu0 0.0
  %2296 = vmatprep.subr.mxu0 0.0
  %2297 = vmatpush1.msra.mxu0 0.0
  %2298 = vmatprep.subr.mxu0 0.0
  %2299 = vmatpush1.msra.mxu0 0.0
  %2300 = vmatprep.subr.mxu0 0.0
  %2301 = vmatpush1.msra.mxu0 0.0
  %2302 = vmatprep.subr.mxu0 0.0
  %2303 = vmatpush1.msra.mxu0 0.0
  %2304 = vmatprep.subr.mxu0 0.0
  %2305 = vmatpush1.msra.mxu0 0.0
  %2306 = vmatprep.subr.mxu0 0.0
  %2307 = vmatpush1.msra.mxu0 0.0
  %2308 = vmatprep.subr.mxu0 0.0
  %2309 = vmatpush1.msra.mxu0 0.0
  %2310 = vmatprep.mubr.f32.mxu0 0.0
  %2311 = vmatmul.mubr.f32.gmra.mrb[0].mxu0 %v2244
  %v2312 = vpop.f32.mrb[0].mxu0
  %v2313 = vadd.f32 0.0, %v2312
  %v2314 = vpop.f32.mrb[0].mxu0
  %2315 = vdwg.mxu0
  %v2316 = vadd.f32 %v2240, %v2313
  %v2317 = vxor.u32 %v2316, 2147483648
  %v2318 = vmul.f32 %v2317, 1.442695
  %v2319 = vpow.pop %v2318
  %v2320 = vadd.f32 %v2319, 1.0
  %v2321 = vrcp.pop %v2320
  %v2322 = vmul.f32 1.0, %v2321
  %v2323 = vtanh.pop %v2316
  %v2324 = vmul.f32 %v2322, %v2013
  %2326 = vrot.lane.b32.xlu0 %v2323, 92
  %v2327 = vpop.permute.xlu0 %2326
  %v2329 = vmul.f32 %v2322, %v2327
  %2331 = vrot.lane.b32.xlu0 %v2329, 12
  %v2332 = vpop.permute.xlu0 %2331
  %v2334 = vadd.f32 %v2324, %v2332
  %v2335 = vtanh.pop %v2334
  %2337 = vrot.lane.b32.xlu0 %v2335, 12
  %v2338 = vpop.permute.xlu0 %2337
  %v2340 = vmul.f32 %v2322, %v2338
  %v2342 = vcombine.high %v2340, %v2340
  %v2344 = vunpack.c.l.s4 1966171168
  %v2345 = vunpack.c.0.s8 %v2344
  %v2346 = vlaneseq
  %v2347 = vshrl.u32 %v2346, 7
  %v2348 = vsub.s32 %v2345, %v2347
  %v2349 = vrot.slane %v2340, %v2348
  %v2351 = vunpack.c.l.s4 1966171168
  %v2352 = vunpack.c.0.s8 %v2351
  %v2353 = vlaneseq
  %v2354 = vshrl.u32 %v2353, 7
  %v2355 = vsub.s32 %v2352, %v2354
  %v2356 = vrot.slane %v2342, %v2355
  %v2357 = vcombine.high %v2349, %v2349
  %v2358 = vcombine.high %v2356, %v2356
  %v2360 = vunpack.c.l.s4 1966171168
  %v2361 = vunpack.c.0.s8 %v2360
  %v2362 = vlaneseq
  %v2363 = vshrl.u32 %v2362, 7
  %v2364 = vsub.s32 %v2361, %v2363
  %v2365 = vrot.slane %v2349, %v2364
  %v2367 = vunpack.c.l.s4 1966171168
  %v2368 = vunpack.c.0.s8 %v2367
  %v2369 = vlaneseq
  %v2370 = vshrl.u32 %v2369, 7
  %v2371 = vsub.s32 %v2368, %v2370
  %v2372 = vrot.slane %v2356, %v2371
  %v2374 = vunpack.c.l.s4 1966171168
  %v2375 = vunpack.c.0.s8 %v2374
  %v2376 = vlaneseq
  %v2377 = vshrl.u32 %v2376, 7
  %v2378 = vsub.s32 %v2375, %v2377
  %v2379 = vrot.slane %v2357, %v2378
  %v2381 = vunpack.c.l.s4 1966171168
  %v2382 = vunpack.c.0.s8 %v2381
  %v2383 = vlaneseq
  %v2384 = vshrl.u32 %v2383, 7
  %v2385 = vsub.s32 %v2382, %v2384
  %v2386 = vrot.slane %v2358, %v2385
  %v2387 = vcombine.high %v2365, %v2365
  %v2388 = vcombine.high %v2372, %v2372
  %v2389 = vcombine.high %v2379, %v2379
  %v2390 = vcombine.high %v2386, %v2386
  %v2391 = vlaneseq
  %v2392 = vshrl.u32 %v2391, 7
  %v2393 = vsub.s32 0, %v2392
  %v2394 = vrot.slane %v2365, %v2393
  %v2395 = vlaneseq
  %v2396 = vshrl.u32 %v2395, 7
  %v2397 = vsub.s32 0, %v2396
  %v2398 = vrot.slane %v2379, %v2397
  %v2399 = vlaneseq
  %v2400 = vshrl.u32 %v2399, 7
  %v2401 = vsub.s32 0, %v2400
  %v2402 = vrot.slane %v2387, %v2401
  %v2403 = vlaneseq
  %v2404 = vshrl.u32 %v2403, 7
  %v2405 = vsub.s32 0, %v2404
  %v2406 = vrot.slane %v2389, %v2405
  %v2407 = vlaneseq
  %v2408 = vshrl.u32 %v2407, 7
  %v2409 = vsub.s32 0, %v2408
  %v2410 = vrot.slane %v2372, %v2409
  %v2411 = vlaneseq
  %v2412 = vshrl.u32 %v2411, 7
  %v2413 = vsub.s32 0, %v2412
  %v2414 = vrot.slane %v2386, %v2413
  %v2415 = vlaneseq
  %v2416 = vshrl.u32 %v2415, 7
  %v2417 = vsub.s32 0, %v2416
  %v2418 = vrot.slane %v2388, %v2417
  %v2419 = vlaneseq
  %v2420 = vshrl.u32 %v2419, 7
  %v2421 = vsub.s32 0, %v2420
  %v2422 = vrot.slane %v2390, %v2421
  %2423 = vrot.lane.b32.xlu0 %v2394, 104
  %v2424 = vpop.permute.xlu0 %2423
  %2425 = vrot.lane.b32.xlu0 %v2398, 104
  %v2426 = vpop.permute.xlu0 %2425
  %2427 = vrot.lane.b32.xlu0 %v2402, 104
  %v2428 = vpop.permute.xlu0 %2427
  %2429 = vrot.lane.b32.xlu0 %v2406, 104
  %v2430 = vpop.permute.xlu0 %2429
  %2431 = vrot.lane.b32.xlu0 %v2410, 104
  %v2432 = vpop.permute.xlu0 %2431
  %2433 = vrot.lane.b32.xlu0 %v2414, 104
  %v2434 = vpop.permute.xlu0 %2433
  %2435 = vrot.lane.b32.xlu0 %v2418, 104
  %v2436 = vpop.permute.xlu0 %2435
  %2437 = vrot.lane.b32.xlu0 %v2422, 104
  %v2438 = vpop.permute.xlu0 %2437
  %2447 = vst.msk [vmem:[%s6 + $0x6] sm:$0x1] %vm520, %v2424
  %2448 = vst.msk [vmem:[%s6 + $0xe] sm:$0x1] %vm520, %v2426
  %2449 = vst.msk [vmem:[%s6 + $0x16] sm:$0x1] %vm520, %v2428
  %2450 = vst.msk [vmem:[%s6 + $0x1e] sm:$0x1] %vm520, %v2430
  %2451 = vst.msk [vmem:[%s6 + $0x26] sm:$0x1] %vm520, %v2432
  %2452 = vst.msk [vmem:[%s6 + $0x2e] sm:$0x1] %vm520, %v2434
  %2453 = vst.msk [vmem:[%s6 + $0x36] sm:$0x1] %vm520, %v2436
  %2454 = vst.msk [vmem:[%s6 + $0x3e] sm:$0x1] %vm520, %v2438
  %2456 = vrot.lane.b32.xlu0 %v2340, 8
  %v2457 = vpop.permute.xlu0 %2456
  %v2459 = vsel %vm316, %v2243, %v2457
  %v2461 = vsel %vm204, %v2459, 0
  %2463 = vmatprep.subr.mxu0 %v29
  %2464 = vmatpush1.msra.mxu0 %v28
  %2465 = vmatprep.subr.mxu0 %v31
  %2466 = vmatpush1.msra.mxu0 %v30
  %2467 = vmatprep.subr.mxu0 %v33
  %2468 = vmatpush1.msra.mxu0 %v32
  %2469 = vmatprep.subr.mxu0 %v35
  %2470 = vmatpush1.msra.mxu0 %v34
  %2471 = vmatprep.subr.mxu0 %v37
  %2472 = vmatpush1.msra.mxu0 %v36
  %2473 = vmatprep.subr.mxu0 %v213
  %2474 = vmatpush1.msra.mxu0 %v210
  %2475 = vmatprep.subr.mxu0 0.0
  %2476 = vmatpush1.msra.mxu0 0.0
  %2477 = vmatprep.subr.mxu0 0.0
  %2478 = vmatpush1.msra.mxu0 0.0
  %2479 = vmatprep.subr.mxu0 0.0
  %2480 = vmatpush1.msra.mxu0 0.0
  %2481 = vmatprep.subr.mxu0 0.0
  %2482 = vmatpush1.msra.mxu0 0.0
  %2483 = vmatprep.subr.mxu0 0.0
  %2484 = vmatpush1.msra.mxu0 0.0
  %2485 = vmatprep.subr.mxu0 0.0
  %2486 = vmatpush1.msra.mxu0 0.0
  %2487 = vmatprep.subr.mxu0 0.0
  %2488 = vmatpush1.msra.mxu0 0.0
  %2489 = vmatprep.subr.mxu0 0.0
  %2490 = vmatpush1.msra.mxu0 0.0
  %2491 = vmatprep.subr.mxu0 0.0
  %2492 = vmatpush1.msra.mxu0 0.0
  %2493 = vmatprep.subr.mxu0 0.0
  %2494 = vmatpush1.msra.mxu0 0.0
  %2495 = vmatprep.subr.mxu0 0.0
  %2496 = vmatpush1.msra.mxu0 0.0
  %2497 = vmatprep.subr.mxu0 0.0
  %2498 = vmatpush1.msra.mxu0 0.0
  %2499 = vmatprep.subr.mxu0 0.0
  %2500 = vmatpush1.msra.mxu0 0.0
  %2501 = vmatprep.subr.mxu0 0.0
  %2502 = vmatpush1.msra.mxu0 0.0
  %2503 = vmatprep.subr.mxu0 0.0
  %2504 = vmatpush1.msra.mxu0 0.0
  %2505 = vmatprep.subr.mxu0 0.0
  %2506 = vmatpush1.msra.mxu0 0.0
  %2507 = vmatprep.subr.mxu0 0.0
  %2508 = vmatpush1.msra.mxu0 0.0
  %2509 = vmatprep.subr.mxu0 0.0
  %2510 = vmatpush1.msra.mxu0 0.0
  %2511 = vmatprep.subr.mxu0 0.0
  %2512 = vmatpush1.msra.mxu0 0.0
  %2513 = vmatprep.subr.mxu0 0.0
  %2514 = vmatpush1.msra.mxu0 0.0
  %2515 = vmatprep.subr.mxu0 0.0
  %2516 = vmatpush1.msra.mxu0 0.0
  %2517 = vmatprep.subr.mxu0 0.0
  %2518 = vmatpush1.msra.mxu0 0.0
  %2519 = vmatprep.subr.mxu0 0.0
  %2520 = vmatpush1.msra.mxu0 0.0
  %2521 = vmatprep.subr.mxu0 0.0
  %2522 = vmatpush1.msra.mxu0 0.0
  %2523 = vmatprep.subr.mxu0 0.0
  %2524 = vmatpush1.msra.mxu0 0.0
  %2525 = vmatprep.subr.mxu0 0.0
  %2526 = vmatpush1.msra.mxu0 0.0
  %2527 = vmatprep.mubr.f32.mxu0 0.0
  %2528 = vmatmul.mubr.f32.gmra.mrb[0].mxu0 %v2461
  %v2529 = vpop.f32.mrb[0].mxu0
  %v2530 = vadd.f32 0.0, %v2529
  %v2531 = vpop.f32.mrb[0].mxu0
  %v2532 = vadd.f32 0.0, %v2531
  %2533 = vdwg.mxu0
  %s2534 = scalar_lea.vmem [#allocation2], 56
  %v2535 = vld [vmem:[%s2534] sm:$0xff]
  %v2536 = vadd.f32 %v2535, %v2530
  %v2537 = vxor.u32 %v2536, 2147483648
  %v2538 = vmul.f32 %v2537, 1.442695
  %v2539 = vpow.pop %v2538
  %v2540 = vadd.f32 %v2539, 1.0
  %v2541 = vrcp.pop %v2540
  %v2542 = vmul.f32 1.0, %v2541
  %v2543 = vtanh.pop %v2536
  %v2544 = vmul.f32 %v2542, %v2233
  %2546 = vrot.lane.b32.xlu0 %v2543, 32
  %v2547 = vpop.permute.xlu0 %2546
  %v2549 = vmul.f32 %v2542, %v2547
  %2551 = vrot.lane.b32.xlu0 %v2549, 32
  %v2552 = vpop.permute.xlu0 %2551
  %v2554 = vadd.f32 %v2544, %v2552
  %v2555 = vtanh.pop %v2554
  %2557 = vrot.lane.b32.xlu0 %v2555, 32
  %v2558 = vpop.permute.xlu0 %2557
  %v2560 = vmul.f32 %v2542, %v2558
  %v2561 = vadd.f32 %v2532, %v50
  %2563 = vrot.lane.b32.xlu0 %v2560, 64
  %v2564 = vpop.permute.xlu0 %2563
  %v2565 = vsel %vm316, %v2564, 0
  %2567 = vmatprep.subr.mxu0 0.0
  %2568 = vmatpush1.msra.mxu0 %v40
  %2569 = vmatprep.subr.mxu0 0.0
  %2570 = vmatpush1.msra.mxu0 %v41
  %2571 = vmatprep.subr.mxu0 0.0
  %2572 = vmatpush1.msra.mxu0 %v42
  %2573 = vmatprep.subr.mxu0 0.0
  %2574 = vmatpush1.msra.mxu0 %v43
  %2575 = vmatprep.subr.mxu0 0.0
  %2576 = vmatpush1.msra.mxu0 0.0
  %2577 = vmatprep.subr.mxu0 0.0
  %2578 = vmatpush1.msra.mxu0 0.0
  %2579 = vmatprep.subr.mxu0 0.0
  %2580 = vmatpush1.msra.mxu0 0.0
  %2581 = vmatprep.subr.mxu0 0.0
  %2582 = vmatpush1.msra.mxu0 0.0
  %2583 = vmatprep.subr.mxu0 0.0
  %2584 = vmatpush1.msra.mxu0 0.0
  %2585 = vmatprep.subr.mxu0 0.0
  %2586 = vmatpush1.msra.mxu0 0.0
  %2587 = vmatprep.subr.mxu0 0.0
  %2588 = vmatpush1.msra.mxu0 0.0
  %2589 = vmatprep.subr.mxu0 0.0
  %2590 = vmatpush1.msra.mxu0 0.0
  %2591 = vmatprep.subr.mxu0 0.0
  %2592 = vmatpush1.msra.mxu0 0.0
  %2593 = vmatprep.subr.mxu0 0.0
  %2594 = vmatpush1.msra.mxu0 0.0
  %2595 = vmatprep.subr.mxu0 0.0
  %2596 = vmatpush1.msra.mxu0 0.0
  %2597 = vmatprep.subr.mxu0 0.0
  %2598 = vmatpush1.msra.mxu0 0.0
  %2599 = vmatprep.subr.mxu0 0.0
  %2600 = vmatpush1.msra.mxu0 0.0
  %2601 = vmatprep.subr.mxu0 0.0
  %2602 = vmatpush1.msra.mxu0 0.0
  %2603 = vmatprep.subr.mxu0 0.0
  %2604 = vmatpush1.msra.mxu0 0.0
  %2605 = vmatprep.subr.mxu0 0.0
  %2606 = vmatpush1.msra.mxu0 0.0
  %2607 = vmatprep.subr.mxu0 0.0
  %2608 = vmatpush1.msra.mxu0 0.0
  %2609 = vmatprep.subr.mxu0 0.0
  %2610 = vmatpush1.msra.mxu0 0.0
  %2611 = vmatprep.subr.mxu0 0.0
  %2612 = vmatpush1.msra.mxu0 0.0
  %2613 = vmatprep.subr.mxu0 0.0
  %2614 = vmatpush1.msra.mxu0 0.0
  %2615 = vmatprep.subr.mxu0 0.0
  %2616 = vmatpush1.msra.mxu0 0.0
  %2617 = vmatprep.subr.mxu0 0.0
  %2618 = vmatpush1.msra.mxu0 0.0
  %2619 = vmatprep.subr.mxu0 0.0
  %2620 = vmatpush1.msra.mxu0 0.0
  %2621 = vmatprep.subr.mxu0 0.0
  %2622 = vmatpush1.msra.mxu0 0.0
  %2623 = vmatprep.subr.mxu0 0.0
  %2624 = vmatpush1.msra.mxu0 0.0
  %2625 = vmatprep.subr.mxu0 0.0
  %2626 = vmatpush1.msra.mxu0 0.0
  %2627 = vmatprep.subr.mxu0 0.0
  %2628 = vmatpush1.msra.mxu0 0.0
  %2629 = vmatprep.subr.mxu0 0.0
  %2630 = vmatpush1.msra.mxu0 0.0
  %2631 = vmatprep.mubr.f32.mxu0 0.0
  %2632 = vmatmul.mubr.f32.gmra.mrb[0].mxu0 %v2565
  %v2633 = vpop.f32.mrb[0].mxu0
  %v2634 = vadd.f32 0.0, %v2633
  %v2635 = vpop.f32.mrb[0].mxu0
  %2636 = vdwg.mxu0
  %v2637 = vadd.f32 %v2561, %v2634
  %v2638 = vxor.u32 %v2637, 2147483648
  %v2639 = vmul.f32 %v2638, 1.442695
  %v2640 = vpow.pop %v2639
  %v2641 = vadd.f32 %v2640, 1.0
  %v2642 = vrcp.pop %v2641
  %v2643 = vmul.f32 1.0, %v2642
  %v2644 = vtanh.pop %v2637
  %v2645 = vmul.f32 %v2643, %v2334
  %2647 = vrot.lane.b32.xlu0 %v2644, 92
  %v2648 = vpop.permute.xlu0 %2647
  %v2650 = vmul.f32 %v2643, %v2648
  %2652 = vrot.lane.b32.xlu0 %v2650, 12
  %v2653 = vpop.permute.xlu0 %2652
  %v2655 = vadd.f32 %v2645, %v2653
  %v2656 = vtanh.pop %v2655
  %2658 = vrot.lane.b32.xlu0 %v2656, 12
  %v2659 = vpop.permute.xlu0 %2658
  %v2661 = vmul.f32 %v2643, %v2659
  %v2663 = vcombine.high %v2661, %v2661
  %v2665 = vunpack.c.l.s4 1966171168
  %v2666 = vunpack.c.0.s8 %v2665
  %v2667 = vlaneseq
  %v2668 = vshrl.u32 %v2667, 7
  %v2669 = vsub.s32 %v2666, %v2668
  %v2670 = vrot.slane %v2661, %v2669
  %v2672 = vunpack.c.l.s4 1966171168
  %v2673 = vunpack.c.0.s8 %v2672
  %v2674 = vlaneseq
  %v2675 = vshrl.u32 %v2674, 7
  %v2676 = vsub.s32 %v2673, %v2675
  %v2677 = vrot.slane %v2663, %v2676
  %v2678 = vcombine.high %v2670, %v2670
  %v2679 = vcombine.high %v2677, %v2677
  %v2681 = vunpack.c.l.s4 1966171168
  %v2682 = vunpack.c.0.s8 %v2681
  %v2683 = vlaneseq
  %v2684 = vshrl.u32 %v2683, 7
  %v2685 = vsub.s32 %v2682, %v2684
  %v2686 = vrot.slane %v2670, %v2685
  %v2688 = vunpack.c.l.s4 1966171168
  %v2689 = vunpack.c.0.s8 %v2688
  %v2690 = vlaneseq
  %v2691 = vshrl.u32 %v2690, 7
  %v2692 = vsub.s32 %v2689, %v2691
  %v2693 = vrot.slane %v2677, %v2692
  %v2695 = vunpack.c.l.s4 1966171168
  %v2696 = vunpack.c.0.s8 %v2695
  %v2697 = vlaneseq
  %v2698 = vshrl.u32 %v2697, 7
  %v2699 = vsub.s32 %v2696, %v2698
  %v2700 = vrot.slane %v2678, %v2699
  %v2702 = vunpack.c.l.s4 1966171168
  %v2703 = vunpack.c.0.s8 %v2702
  %v2704 = vlaneseq
  %v2705 = vshrl.u32 %v2704, 7
  %v2706 = vsub.s32 %v2703, %v2705
  %v2707 = vrot.slane %v2679, %v2706
  %v2708 = vcombine.high %v2686, %v2686
  %v2709 = vcombine.high %v2693, %v2693
  %v2710 = vcombine.high %v2700, %v2700
  %v2711 = vcombine.high %v2707, %v2707
  %v2712 = vlaneseq
  %v2713 = vshrl.u32 %v2712, 7
  %v2714 = vsub.s32 0, %v2713
  %v2715 = vrot.slane %v2686, %v2714
  %v2716 = vlaneseq
  %v2717 = vshrl.u32 %v2716, 7
  %v2718 = vsub.s32 0, %v2717
  %v2719 = vrot.slane %v2700, %v2718
  %v2720 = vlaneseq
  %v2721 = vshrl.u32 %v2720, 7
  %v2722 = vsub.s32 0, %v2721
  %v2723 = vrot.slane %v2708, %v2722
  %v2724 = vlaneseq
  %v2725 = vshrl.u32 %v2724, 7
  %v2726 = vsub.s32 0, %v2725
  %v2727 = vrot.slane %v2710, %v2726
  %v2728 = vlaneseq
  %v2729 = vshrl.u32 %v2728, 7
  %v2730 = vsub.s32 0, %v2729
  %v2731 = vrot.slane %v2693, %v2730
  %v2732 = vlaneseq
  %v2733 = vshrl.u32 %v2732, 7
  %v2734 = vsub.s32 0, %v2733
  %v2735 = vrot.slane %v2707, %v2734
  %v2736 = vlaneseq
  %v2737 = vshrl.u32 %v2736, 7
  %v2738 = vsub.s32 0, %v2737
  %v2739 = vrot.slane %v2709, %v2738
  %v2740 = vlaneseq
  %v2741 = vshrl.u32 %v2740, 7
  %v2742 = vsub.s32 0, %v2741
  %v2743 = vrot.slane %v2711, %v2742
  %2744 = vrot.lane.b32.xlu0 %v2715, 104
  %v2745 = vpop.permute.xlu0 %2744
  %2746 = vrot.lane.b32.xlu0 %v2719, 104
  %v2747 = vpop.permute.xlu0 %2746
  %2748 = vrot.lane.b32.xlu0 %v2723, 104
  %v2749 = vpop.permute.xlu0 %2748
  %2750 = vrot.lane.b32.xlu0 %v2727, 104
  %v2751 = vpop.permute.xlu0 %2750
  %2752 = vrot.lane.b32.xlu0 %v2731, 104
  %v2753 = vpop.permute.xlu0 %2752
  %2754 = vrot.lane.b32.xlu0 %v2735, 104
  %v2755 = vpop.permute.xlu0 %2754
  %2756 = vrot.lane.b32.xlu0 %v2739, 104
  %v2757 = vpop.permute.xlu0 %2756
  %2758 = vrot.lane.b32.xlu0 %v2743, 104
  %v2759 = vpop.permute.xlu0 %2758
  %2768 = vst.msk [vmem:[%s6 + $0x7] sm:$0x1] %vm520, %v2745
  %2769 = vst.msk [vmem:[%s6 + $0xf] sm:$0x1] %vm520, %v2747
  %2770 = vst.msk [vmem:[%s6 + $0x17] sm:$0x1] %vm520, %v2749
  %2771 = vst.msk [vmem:[%s6 + $0x1f] sm:$0x1] %vm520, %v2751
  %2772 = vst.msk [vmem:[%s6 + $0x27] sm:$0x1] %vm520, %v2753
  %2773 = vst.msk [vmem:[%s6 + $0x2f] sm:$0x1] %vm520, %v2755
  %2774 = vst.msk [vmem:[%s6 + $0x37] sm:$0x1] %vm520, %v2757
  %2775 = vst.msk [vmem:[%s6 + $0x3f] sm:$0x1] %vm520, %v2759
  %2777 = vrot.lane.b32.xlu0 %v2661, 8
  %v2778 = vpop.permute.xlu0 %2777
  %v2780 = vsel %vm316, %v2564, %v2778
  %2782 = vrot.lane.b32.xlu0 %v2780, 96
  %v2783 = vpop.permute.xlu0 %2782
  %vm2785 = vcmask 97280
  %2786 = vst.msk [vmem:[%s7] sm:$0xff] %vm2785, %v2783
  %2788 = vrot.lane.b32.xlu0 %v2655, 116
  %v2789 = vpop.permute.xlu0 %2788
  %2791 = vst.msk [vmem:[%s8] sm:$0xff] %vm2785, %v2789
  // Predicated region
  $region26: #{decoder_forward.1} parent=0 // pred_check
    _
  $region27: #{decoder_forward.1} parent=0 // pred_check_branch
    %2793 = sbr.rel (0) target = $region29
  $region28: #{decoder_forward.1} parent=0 // pred_region
    _
  $region29: #{decoder_forward.1} parent=0 // pred_fallthru
    _
  // Predicated region
  $region30: #{decoder_forward.1} parent=0 // pred_check
    _
  $region31: #{decoder_forward.1} parent=0 // pred_check_branch
    %2795 = sbr.rel (0) target = $region33
  $region32: #{decoder_forward.1} parent=0 // pred_region
    _
  $region33: #{decoder_forward.1} parent=0 // pred_fallthru
    _
  // Predicated region
  $region34: #{decoder_forward.1} parent=0 // pred_check
    _
  $region35: #{decoder_forward.1} parent=0 // pred_check_branch
    %2797 = sbr.rel (0) target = $region37
  $region36: #{decoder_forward.1} parent=0 // pred_region
    _
  $region37: #{decoder_forward.1} parent=0 // pred_fallthru
    _
  // Predicated region
  $region38: #{decoder_forward.1} parent=0 // pred_check
    _
  $region39: #{decoder_forward.1} parent=0 // pred_check_branch
    %2799 = sbr.rel (0) target = $region41
  $region40: #{decoder_forward.1} parent=0 // pred_region
    _
  $region41: #{decoder_forward.1} parent=0 // pred_fallthru
    _
  // Predicated region
  $region42: #{decoder_forward.1} parent=0 // pred_check
    _
  $region43: #{decoder_forward.1} parent=0 // pred_check_branch
    %2801 = sbr.rel (0) target = $region45
  $region44: #{decoder_forward.1} parent=0 // pred_region
    _
  $region45: #{decoder_forward.1} parent=0 // pred_fallthru
    _
  // Predicated region
  $region46: #{decoder_forward.1} parent=0 // pred_check
    _
  $region47: #{decoder_forward.1} parent=0 // pred_check_branch
    %2803 = sbr.rel (0) target = $region49
  $region48: #{decoder_forward.1} parent=0 // pred_region
    _
  $region49: #{decoder_forward.1} parent=0 // pred_fallthru
    _

</llo_original>
